<compile_context>
chip_gen: v7x
topology: tpu7x:2x2x1
jax: 0.10.0
libtpu: 0.0.40
codegen_flags: <defaults>
</compile_context>

<pallas_src>
import functools
import math

import jax
import jax.numpy as jnp
from jax.experimental import pallas as pl
from jax.experimental.pallas import tpu as pltpu


# ----------------------------------------------------------------------------
# kernel
# ----------------------------------------------------------------------------
def _layernorm_f32(x, gamma, beta, eps=1e-5):
    # x: (L, D) f32, gamma/beta: (1, D) f32
    mu = jnp.mean(x, axis=-1, keepdims=True)
    var = jnp.mean((x - mu) ** 2, axis=-1, keepdims=True)
    return (x - mu) * jax.lax.rsqrt(var + eps) * gamma + beta


def resblock_kernel(x_ref,
                    ln1_g_ref, ln1_b_ref,
                    wqkv_ref, bqkv_ref, wo_ref, bo_ref,
                    ln2_g_ref, ln2_b_ref,
                    wfc_ref, bfc_ref, wproj_ref, bproj_ref,
                    out_ref,
                    attn_cat_ref,
                    *, n_head: int, causal: bool, mlp_chunk: int):
    x = x_ref[...]                                   # (L, D) f32 residual stream
    L, D = x.shape
    hd = D // n_head

    # ---- attention branch ---------------------------------------------------
    h = _layernorm_f32(x, ln1_g_ref[...], ln1_b_ref[...])

    # Fused QKV projection: weight pre-transposed to (D, 3D), bf16, with the
    # 1/sqrt(hd) query scale already folded into W_q / b_q wrapper-side.
    qkv = jnp.dot(h.astype(jnp.bfloat16), wqkv_ref[...],
                  preferred_element_type=jnp.float32) + bqkv_ref[...]    # (L, 3D) f32
    qkv_bf = qkv.astype(jnp.bfloat16)                # cast once, sliced per head below

    if causal:
        # Mask built in-kernel (no resident (L, L) input); hoisted out of the
        # head loop so it is computed once.
        row = jax.lax.broadcasted_iota(jnp.int32, (L, L), 0)
        col = jax.lax.broadcasted_iota(jnp.int32, (L, L), 1)
        allowed = col <= row

    # Per-head attention: static lane-slice *reads* of qkv_bf (no head-major
    # scratch relayout), one (L, L) f32 score tile live at a time, fused softmax
    # epilogue, bf16 stores for the head merge.
    for hh in range(n_head):
        qh = qkv_bf[:, hh * hd:(hh + 1) * hd]                    # (L, hd), pre-scaled
        kh = qkv_bf[:, D + hh * hd:D + (hh + 1) * hd]
        vh = qkv_bf[:, 2 * D + hh * hd:2 * D + (hh + 1) * hd]

        s = jnp.einsum('qd,kd->qk', qh, kh,
                       preferred_element_type=jnp.float32)        # (L, L) f32
        if causal:
            s = jnp.where(allowed, s, -jnp.inf)
        m = jnp.max(s, axis=-1, keepdims=True)
        e = jnp.exp(s - m)
        # NOTE: approx reciprocal is safe because no softmax row is ever fully
        # masked (the causal mask keeps the diagonal); guard this if the kernel
        # is ever reused with arbitrary padding masks (sum could be 0 -> Inf).
        p = (e * pl.reciprocal(jnp.sum(e, axis=-1, keepdims=True),
                               approx=True)).astype(jnp.bfloat16)
        oh = jnp.dot(p, vh, preferred_element_type=jnp.float32)   # (L, hd) f32
        attn_cat_ref[:, hh * hd:(hh + 1) * hd] = oh.astype(jnp.bfloat16)

    attn = jnp.dot(attn_cat_ref[...], wo_ref[...],
                   preferred_element_type=jnp.float32) + bo_ref[...]     # (L, D)
    x = x + attn

    # ---- MLP branch (hidden dim chunked; (L, 4D) never fully materialized) --
    h2 = _layernorm_f32(x, ln2_g_ref[...], ln2_b_ref[...]).astype(jnp.bfloat16)
    hidden = 4 * D
    mlp = jnp.zeros((L, D), jnp.float32)
    for c0 in range(0, hidden, mlp_chunk):
        c1 = min(c0 + mlp_chunk, hidden)
        a = jnp.dot(h2, wfc_ref[:, c0:c1],
                    preferred_element_type=jnp.float32) + bfc_ref[:, c0:c1]
        a = a * jax.nn.sigmoid(1.702 * a)                          # QuickGELU (f32)
        mlp = mlp + jnp.dot(a.astype(jnp.bfloat16), wproj_ref[c0:c1, :],
                            preferred_element_type=jnp.float32)

    out_ref[...] = x + mlp + bproj_ref[...]


# ----------------------------------------------------------------------------
# wrapper
# ----------------------------------------------------------------------------
_WEIGHT_ORDER = ("ln1_g", "ln1_b", "wqkv_t", "bqkv", "wo_t", "bo",
                 "ln2_g", "ln2_b", "wfc_t", "bfc", "wproj_t", "bproj")


def _vmem_limit_bytes(L, D, weights, mlp_chunk):
    nbytes = lambda a: a.size * a.dtype.itemsize
    resident = sum(nbytes(w) for w in weights)            # single-buffered weights
    io = 2 * 2 * L * D * 4                                # double-buffered x / out blocks
    act = (L * 3 * D * (4 + 2)                            # qkv f32 + bf16 copy
           + 3 * L * L * 4                                # per-head score/exp temporaries
           + L * D * 2                                    # bf16 head-merge scratch
           + 2 * L * min(4 * D, mlp_chunk) * 4            # MLP chunk activations
           + 4 * L * D * 4)                               # residual / LN temporaries
    est = int(1.5 * (resident + io + act))                # headroom for compiler temps
    try:
        cap = int(pltpu.get_tpu_info().vmem_capacity_bytes)
    except Exception:                                     # info unavailable: assume worst case (v7x)
        cap = 64 * 1024 * 1024
    cap = int(cap * 0.85)                                 # leave compiler-internal headroom
    return min(max(est, 32 * 1024 * 1024), cap)


def _build_resblock_call(N, L, D, weights, n_head, causal, mlp_chunk,
                         vmem_limit, single_buffer_weights):
    def resident_spec(shape):
        nd = len(shape)
        idx = lambda b, _nd=nd: (0,) * _nd                # same block every grid step
        if single_buffer_weights:
            # Grid-invariant block: one buffer suffices; default double-buffering
            # doubles the resident weight VMEM for zero benefit (critical on v7x).
            return pl.BlockSpec(shape, idx, pipeline_mode=pl.Buffered(buffer_count=1))
        return pl.BlockSpec(shape, idx)

    in_specs = [pl.BlockSpec((None, L, D), lambda b: (b, 0, 0))]  # x, batch squeezed
    in_specs += [resident_spec(w.shape) for w in weights]

    kernel = functools.partial(resblock_kernel, n_head=n_head,
                               causal=causal, mlp_chunk=mlp_chunk)
    return pl.pallas_call(
        kernel,
        out_shape=jax.ShapeDtypeStruct((N, L, D), jnp.float32),
        grid=(N,),
        in_specs=in_specs,
        out_specs=pl.BlockSpec((None, L, D), lambda b: (b, 0, 0)),
        scratch_shapes=[pltpu.VMEM((L, D), jnp.bfloat16)],        # bf16 head-merge buffer
        compiler_params=pltpu.CompilerParams(
            dimension_semantics=("parallel",),
            vmem_limit_bytes=vmem_limit),
    )


def residual_attention_block(x_nld, params, n_head, causal, mlp_chunk, vmem_limit):
    """x_nld: (N, L, D) float32 -> (N, L, D) float32 (one ResidualAttentionBlock)."""
    N, L, D = x_nld.shape
    weights = [params[k] for k in _WEIGHT_ORDER]
    try:
        fn = _build_resblock_call(N, L, D, weights, n_head, causal, mlp_chunk,
                                  vmem_limit, single_buffer_weights=True)
        return fn(x_nld, *weights)
    except Exception:
        # pl.Buffered(1) unsupported by this jax build -> default double buffering
        # (identical kernel, just larger resident weight footprint).
        fn = _build_resblock_call(N, L, D, weights, n_head, causal, mlp_chunk,
                                  vmem_limit, single_buffer_weights=False)
        return fn(x_nld, *weights)


def transformer_forward(x_lnd, layer_params, n_head, causal=True, mlp_chunk=1024):
    """Matches CLIP Transformer.forward: x is (L, N, D)."""
    if not layer_params:
        return x_lnd
    x = jnp.transpose(x_lnd, (1, 0, 2))                  # -> (N, L, D)
    _, L, D = x.shape
    weights = [layer_params[0][k] for k in _WEIGHT_ORDER]
    vmem = _vmem_limit_bytes(L, D, weights, mlp_chunk)
    for params in layer_params:
        # TODO(synk): overlap next-layer weight DMA with current-layer compute
        # (cross-pallas_call prefetch) or fuse several layers per call to cut
        # per-layer HBM weight/activation roundtrips.
        x = residual_attention_block(x, params, n_head, causal, mlp_chunk, vmem)
    return jnp.transpose(x, (1, 0, 2))                   # -> (L, N, D)


# ----------------------------------------------------------------------------
# parameter handling (PyTorch layout -> kernel layout)
# ----------------------------------------------------------------------------
def init_raw_layer_params(key, width):
    """Parameters in PyTorch nn.MultiheadAttention / nn.Linear layout."""
    D = width
    ks = jax.random.split(key, 8)
    s = 0.02
    return {
        "ln1_w": jnp.ones((D,), jnp.float32),
        "ln1_b": jnp.zeros((D,), jnp.float32),
        "in_proj_w": s * jax.random.normal(ks[0], (3 * D, D), jnp.float32),
        "in_proj_b": s * jax.random.normal(ks[1], (3 * D,), jnp.float32),
        "out_proj_w": s * jax.random.normal(ks[2], (D, D), jnp.float32),
        "out_proj_b": s * jax.random.normal(ks[3], (D,), jnp.float32),
        "ln2_w": jnp.ones((D,), jnp.float32),
        "ln2_b": jnp.zeros((D,), jnp.float32),
        "c_fc_w": s * jax.random.normal(ks[4], (4 * D, D), jnp.float32),
        "c_fc_b": s * jax.random.normal(ks[5], (4 * D,), jnp.float32),
        "c_proj_w": s * jax.random.normal(ks[6], (D, 4 * D), jnp.float32),
        "c_proj_b": s * jax.random.normal(ks[7], (D,), jnp.float32),
    }


def prepare_layer_params(raw, n_head):
    """Pre-transpose to (in, out), fold q-scale, cast weights to bf16."""
    D = raw["ln1_w"].shape[0]
    hd = D // n_head
    scale = 1.0 / math.sqrt(hd)
    wdt = jnp.bfloat16

    wqkv_t = jnp.transpose(raw["in_proj_w"])              # (D, 3D), cols = [q|k|v]
    wqkv_t = wqkv_t.at[:, :D].multiply(scale)             # fold 1/sqrt(hd) into W_q
    bqkv = raw["in_proj_b"].reshape(1, 3 * D)
    bqkv = bqkv.at[:, :D].multiply(scale)                 # ... and b_q

    return {
        "ln1_g": raw["ln1_w"].reshape(1, D).astype(jnp.float32),
        "ln1_b": raw["ln1_b"].reshape(1, D).astype(jnp.float32),
        "wqkv_t": wqkv_t.astype(wdt),
        "bqkv": bqkv.astype(jnp.float32),
        "wo_t": jnp.transpose(raw["out_proj_w"]).astype(wdt),     # (D, D)
        "bo": raw["out_proj_b"].reshape(1, D).astype(jnp.float32),
        "ln2_g": raw["ln2_w"].reshape(1, D).astype(jnp.float32),
        "ln2_b": raw["ln2_b"].reshape(1, D).astype(jnp.float32),
        "wfc_t": jnp.transpose(raw["c_fc_w"]).astype(wdt),        # (D, 4D)
        "bfc": raw["c_fc_b"].reshape(1, 4 * D).astype(jnp.float32),
        "wproj_t": jnp.transpose(raw["c_proj_w"]).astype(wdt),    # (4D, D)
        "bproj": raw["c_proj_b"].reshape(1, D).astype(jnp.float32),
    }


def build_causal_mask(L):
    # CLIP's build_attention_mask: 0 on/below diagonal, -inf above (ref path only;
    # the kernel builds its causal mask in-kernel with iota).
    row = jax.lax.broadcasted_iota(jnp.int32, (L, L), 0)
    col = jax.lax.broadcasted_iota(jnp.int32, (L, L), 1)
    return jnp.where(col <= row, 0.0, -jnp.inf).astype(jnp.float32)


# ----------------------------------------------------------------------------
# pure-JAX f32 reference (PyTorch semantics) for a sanity check
# ----------------------------------------------------------------------------
def _layernorm_ref(x, g, b, eps=1e-5):
    mu = jnp.mean(x, axis=-1, keepdims=True)
    var = jnp.mean((x - mu) ** 2, axis=-1, keepdims=True)
    return (x - mu) * jax.lax.rsqrt(var + eps) * g + b


def ref_transformer(x_lnd, mask, raw_layers, n_head):
    L, N, D = x_lnd.shape
    hd = D // n_head
    x = x_lnd
    for p in raw_layers:
        h = _layernorm_ref(x, p["ln1_w"], p["ln1_b"])
        qkv = jnp.einsum('lnd,ed->lne', h, p["in_proj_w"]) + p["in_proj_b"]
        q, k, v = jnp.split(qkv, 3, axis=-1)
        q = q.reshape(L, N, n_head, hd) / math.sqrt(hd)
        k = k.reshape(L, N, n_head, hd)
        v = v.reshape(L, N, n_head, hd)
        s = jnp.einsum('qnhd,knhd->nhqk', q, k) + mask
        attw = jax.nn.softmax(s, axis=-1)
        o = jnp.einsum('nhqk,knhd->qnhd', attw, v).reshape(L, N, D)
        x = x + jnp.einsum('lnd,ed->lne', o, p["out_proj_w"]) + p["out_proj_b"]
        h2 = _layernorm_ref(x, p["ln2_w"], p["ln2_b"])
        h2 = jnp.einsum('lnd,ed->lne', h2, p["c_fc_w"]) + p["c_fc_b"]
        h2 = h2 * jax.nn.sigmoid(1.702 * h2)
        x = x + jnp.einsum('lne,de->lnd', h2, p["c_proj_w"]) + p["c_proj_b"]
    return x


if __name__ == "__main__":
    # Small shapes consistent with the module's forward: x is (L, N, D).
    seq, batch, width, heads, layers = 8, 2, 32, 4, 2

    key = jax.random.PRNGKey(0)
    k_x, k_p = jax.random.split(key)
    x = jax.random.normal(k_x, (seq, batch, width), jnp.float32)   # (L, N, D)

    layer_keys = jax.random.split(k_p, layers)
    raw_layers = [init_raw_layer_params(k, width) for k in layer_keys]
    layer_params = [prepare_layer_params(r, heads) for r in raw_layers]

    out = transformer_forward(x, layer_params, heads, causal=True)
    out = jax.block_until_ready(out)

    assert out.shape == (seq, batch, width)
    assert bool(jnp.all(jnp.isfinite(out)))

    # bf16 weights / approx reciprocal -> loose tolerance vs f32 reference.
    mask = build_causal_mask(seq)
    ref = ref_transformer(x, mask, raw_layers, heads)
    assert float(jnp.max(jnp.abs(out - ref))) < 5e-2

    print("KERNEL_OK")
</pallas_src>

<mosaic_0001>
module attributes {stable_mosaic.version = 11 : i64} {
  func.func @resblock_kernel(%arg0: i32, %arg1: memref<1x8x32xf32, #tpu.memory_space<vmem>>, %arg2: memref<1x32xf32, #tpu.memory_space<vmem>>, %arg3: memref<1x32xf32, #tpu.memory_space<vmem>>, %arg4: memref<32x96xbf16, #tpu.memory_space<vmem>>, %arg5: memref<1x96xf32, #tpu.memory_space<vmem>>, %arg6: memref<32x32xbf16, #tpu.memory_space<vmem>>, %arg7: memref<1x32xf32, #tpu.memory_space<vmem>>, %arg8: memref<1x32xf32, #tpu.memory_space<vmem>>, %arg9: memref<1x32xf32, #tpu.memory_space<vmem>>, %arg10: memref<32x128xbf16, #tpu.memory_space<vmem>>, %arg11: memref<1x128xf32, #tpu.memory_space<vmem>>, %arg12: memref<128x32xbf16, #tpu.memory_space<vmem>>, %arg13: memref<1x32xf32, #tpu.memory_space<vmem>>, %arg14: memref<1x8x32xf32, #tpu.memory_space<vmem>>, %arg15: memref<8x32xbf16, #tpu.memory_space<vmem>>) attributes {dimension_semantics = [#tpu.dimension_semantics<parallel>], iteration_bounds = array<i64: 2>, scalar_prefetch = 0 : i64, scratch_operands = 1 : i64, tpu.core_type = #tpu.core_type<tc>, window_params = [{transform_indices = @transform_0, window_bounds = array<i64: 1, 8, 32>}, {pipeline_mode = #tpu.pipeline_mode<synchronous>, transform_indices = @transform_1, window_bounds = array<i64: 1, 32>}, {pipeline_mode = #tpu.pipeline_mode<synchronous>, transform_indices = @transform_2, window_bounds = array<i64: 1, 32>}, {pipeline_mode = #tpu.pipeline_mode<synchronous>, transform_indices = @transform_3, window_bounds = array<i64: 32, 96>}, {pipeline_mode = #tpu.pipeline_mode<synchronous>, transform_indices = @transform_4, window_bounds = array<i64: 1, 96>}, {pipeline_mode = #tpu.pipeline_mode<synchronous>, transform_indices = @transform_5, window_bounds = array<i64: 32, 32>}, {pipeline_mode = #tpu.pipeline_mode<synchronous>, transform_indices = @transform_6, window_bounds = array<i64: 1, 32>}, {pipeline_mode = #tpu.pipeline_mode<synchronous>, transform_indices = @transform_7, window_bounds = array<i64: 1, 32>}, {pipeline_mode = #tpu.pipeline_mode<synchronous>, transform_indices = @transform_8, window_bounds = array<i64: 1, 32>}, {pipeline_mode = #tpu.pipeline_mode<synchronous>, transform_indices = @transform_9, window_bounds = array<i64: 32, 128>}, {pipeline_mode = #tpu.pipeline_mode<synchronous>, transform_indices = @transform_10, window_bounds = array<i64: 1, 128>}, {pipeline_mode = #tpu.pipeline_mode<synchronous>, transform_indices = @transform_11, window_bounds = array<i64: 128, 32>}, {pipeline_mode = #tpu.pipeline_mode<synchronous>, transform_indices = @transform_12, window_bounds = array<i64: 1, 32>}, {transform_indices = @transform_13, window_bounds = array<i64: 1, 8, 32>}]} {
    %c0 = arith.constant 0 : index
    %c0_0 = arith.constant 0 : index
    %c0_1 = arith.constant 0 : index
    %0 = vector.load %arg1[%c0, %c0_0, %c0_1] : memref<1x8x32xf32, #tpu.memory_space<vmem>>, vector<1x8x32xf32>
    %1 = vector.shape_cast %0 : vector<1x8x32xf32> to vector<8x32xf32>
    %c0_2 = arith.constant 0 : index
    %c0_3 = arith.constant 0 : index
    %2 = vector.load %arg2[%c0_2, %c0_3] : memref<1x32xf32, #tpu.memory_space<vmem>>, vector<1x32xf32>
    %c0_4 = arith.constant 0 : index
    %c0_5 = arith.constant 0 : index
    %3 = vector.load %arg3[%c0_4, %c0_5] : memref<1x32xf32, #tpu.memory_space<vmem>>, vector<1x32xf32>
    %cst = arith.constant dense<0.000000e+00> : vector<8xf32>
    %4 = vector.multi_reduction <add>, %1, %cst [1] : vector<8x32xf32> to vector<8xf32>
    %5 = vector.shape_cast %4 : vector<8xf32> to vector<8x1xf32>
    %cst_6 = arith.constant 3.200000e+01 : f32
    %6 = vector.broadcast %cst_6 : f32 to vector<8x1xf32>
    %7 = arith.divf %5, %6 : vector<8x1xf32>
    %8 = vector.broadcast %7 : vector<8x1xf32> to vector<8x32xf32>
    %9 = arith.subf %1, %8 : vector<8x32xf32>
    %10 = arith.mulf %9, %9 : vector<8x32xf32>
    %cst_7 = arith.constant dense<0.000000e+00> : vector<8xf32>
    %11 = vector.multi_reduction <add>, %10, %cst_7 [1] : vector<8x32xf32> to vector<8xf32>
    %12 = vector.shape_cast %11 : vector<8xf32> to vector<8x1xf32>
    %cst_8 = arith.constant 3.200000e+01 : f32
    %13 = vector.broadcast %cst_8 : f32 to vector<8x1xf32>
    %14 = arith.divf %12, %13 : vector<8x1xf32>
    %15 = vector.broadcast %7 : vector<8x1xf32> to vector<8x32xf32>
    %16 = arith.subf %1, %15 : vector<8x32xf32>
    %cst_9 = arith.constant 9.99999974E-6 : f32
    %17 = vector.broadcast %cst_9 : f32 to vector<8x1xf32>
    %18 = arith.addf %14, %17 : vector<8x1xf32>
    %19 = math.rsqrt %18 : vector<8x1xf32>
    %20 = vector.broadcast %19 : vector<8x1xf32> to vector<8x32xf32>
    %21 = arith.mulf %16, %20 : vector<8x32xf32>
    %22 = vector.broadcast %2 : vector<1x32xf32> to vector<8x32xf32>
    %23 = arith.mulf %21, %22 : vector<8x32xf32>
    %24 = vector.broadcast %3 : vector<1x32xf32> to vector<8x32xf32>
    %25 = arith.addf %23, %24 : vector<8x32xf32>
    %26 = arith.truncf %25 : vector<8x32xf32> to vector<8x32xbf16>
    %c0_10 = arith.constant 0 : index
    %c0_11 = arith.constant 0 : index
    %27 = vector.load %arg4[%c0_10, %c0_11] : memref<32x96xbf16, #tpu.memory_space<vmem>>, vector<32x96xbf16>
    %cst_12 = arith.constant dense<0.000000e+00> : vector<8x96xf32>
    %28 = tpu.matmul %26, %27, %cst_12 {dimension_numbers = #tpu.dot_dimension_numbers<[1], [0], [0], [1], [0, 0, 1, 1], [], []>} : vector<8x32xbf16>, vector<32x96xbf16>, vector<8x96xf32> -> vector<8x96xf32>
    %c0_13 = arith.constant 0 : index
    %c0_14 = arith.constant 0 : index
    %29 = vector.load %arg5[%c0_13, %c0_14] : memref<1x96xf32, #tpu.memory_space<vmem>>, vector<1x96xf32>
    %30 = vector.broadcast %29 : vector<1x96xf32> to vector<8x96xf32>
    %31 = arith.addf %28, %30 : vector<8x96xf32>
    %32 = arith.truncf %31 : vector<8x96xf32> to vector<8x96xbf16>
    %33 = tpu.iota {dimensions = array<i32: 0>} : vector<8x8xi32>
    %34 = tpu.iota {dimensions = array<i32: 1>} : vector<8x8xi32>
    %35 = arith.cmpi sle, %34, %33 : vector<8x8xi32>
    %36 = vector.extract_strided_slice %32 {offsets = [0, 0], sizes = [8, 8], strides = [1, 1]} : vector<8x96xbf16> to vector<8x8xbf16>
    %37 = vector.extract_strided_slice %32 {offsets = [0, 32], sizes = [8, 8], strides = [1, 1]} : vector<8x96xbf16> to vector<8x8xbf16>
    %38 = vector.extract_strided_slice %32 {offsets = [0, 64], sizes = [8, 8], strides = [1, 1]} : vector<8x96xbf16> to vector<8x8xbf16>
    "tpu.trace_start"() <{level = 10 : i32, message = "qd,kd->qk"}> : () -> ()
    %cst_15 = arith.constant dense<0.000000e+00> : vector<8x8xf32>
    %39 = tpu.matmul %36, %37, %cst_15 {dimension_numbers = #tpu.dot_dimension_numbers<[1], [1], [0], [0], [0, 0, 1, 0], [], []>} : vector<8x8xbf16>, vector<8x8xbf16>, vector<8x8xf32> -> vector<8x8xf32>
    %cst_16 = arith.constant 0xFF800000 : f32
    "tpu.trace_stop"() : () -> ()
    %40 = vector.broadcast %cst_16 : f32 to vector<8x8xf32>
    %41 = arith.select %35, %39, %40 : vector<8x8xi1>, vector<8x8xf32>
    %cst_17 = arith.constant dense<0xFF800000> : vector<8xf32>
    %42 = vector.multi_reduction <maximumf>, %41, %cst_17 [1] : vector<8x8xf32> to vector<8xf32>
    %43 = vector.shape_cast %42 : vector<8xf32> to vector<8x1xf32>
    %44 = vector.broadcast %43 : vector<8x1xf32> to vector<8x8xf32>
    %45 = arith.subf %41, %44 : vector<8x8xf32>
    %46 = math.exp %45 : vector<8x8xf32>
    %cst_18 = arith.constant dense<0.000000e+00> : vector<8xf32>
    %47 = vector.multi_reduction <add>, %46, %cst_18 [1] : vector<8x8xf32> to vector<8xf32>
    %48 = vector.shape_cast %47 : vector<8xf32> to vector<8x1xf32>
    %49 = tpu.reciprocal %48 {approx = true} : vector<8x1xf32> -> vector<8x1xf32>
    %50 = vector.broadcast %49 : vector<8x1xf32> to vector<8x8xf32>
    %51 = arith.mulf %46, %50 : vector<8x8xf32>
    %52 = arith.truncf %51 : vector<8x8xf32> to vector<8x8xbf16>
    %cst_19 = arith.constant dense<0.000000e+00> : vector<8x8xf32>
    %53 = tpu.matmul %52, %38, %cst_19 {dimension_numbers = #tpu.dot_dimension_numbers<[1], [0], [0], [1], [0, 0, 1, 1], [], []>} : vector<8x8xbf16>, vector<8x8xbf16>, vector<8x8xf32> -> vector<8x8xf32>
    %54 = arith.truncf %53 : vector<8x8xf32> to vector<8x8xbf16>
    %c0_20 = arith.constant 0 : index
    %c0_21 = arith.constant 0 : index
    %55 = vector.load %arg15[%c0_20, %c0_21] : memref<8x32xbf16, #tpu.memory_space<vmem>>, vector<8x8xbf16>
    tpu.vector_store %arg15[%c0_20, %c0_21], %54 {strides = array<i32>} : memref<8x32xbf16, #tpu.memory_space<vmem>>, vector<8x8xbf16>,
    %56 = vector.extract_strided_slice %32 {offsets = [0, 8], sizes = [8, 8], strides = [1, 1]} : vector<8x96xbf16> to vector<8x8xbf16>
    %57 = vector.extract_strided_slice %32 {offsets = [0, 40], sizes = [8, 8], strides = [1, 1]} : vector<8x96xbf16> to vector<8x8xbf16>
    %58 = vector.extract_strided_slice %32 {offsets = [0, 72], sizes = [8, 8], strides = [1, 1]} : vector<8x96xbf16> to vector<8x8xbf16>
    "tpu.trace_start"() <{level = 10 : i32, message = "qd,kd->qk"}> : () -> ()
    %cst_22 = arith.constant dense<0.000000e+00> : vector<8x8xf32>
    %59 = tpu.matmul %56, %57, %cst_22 {dimension_numbers = #tpu.dot_dimension_numbers<[1], [1], [0], [0], [0, 0, 1, 0], [], []>} : vector<8x8xbf16>, vector<8x8xbf16>, vector<8x8xf32> -> vector<8x8xf32>
    %cst_23 = arith.constant 0xFF800000 : f32
    "tpu.trace_stop"() : () -> ()
    %60 = vector.broadcast %cst_23 : f32 to vector<8x8xf32>
    %61 = arith.select %35, %59, %60 : vector<8x8xi1>, vector<8x8xf32>
    %cst_24 = arith.constant dense<0xFF800000> : vector<8xf32>
    %62 = vector.multi_reduction <maximumf>, %61, %cst_24 [1] : vector<8x8xf32> to vector<8xf32>
    %63 = vector.shape_cast %62 : vector<8xf32> to vector<8x1xf32>
    %64 = vector.broadcast %63 : vector<8x1xf32> to vector<8x8xf32>
    %65 = arith.subf %61, %64 : vector<8x8xf32>
    %66 = math.exp %65 : vector<8x8xf32>
    %cst_25 = arith.constant dense<0.000000e+00> : vector<8xf32>
    %67 = vector.multi_reduction <add>, %66, %cst_25 [1] : vector<8x8xf32> to vector<8xf32>
    %68 = vector.shape_cast %67 : vector<8xf32> to vector<8x1xf32>
    %69 = tpu.reciprocal %68 {approx = true} : vector<8x1xf32> -> vector<8x1xf32>
    %70 = vector.broadcast %69 : vector<8x1xf32> to vector<8x8xf32>
    %71 = arith.mulf %66, %70 : vector<8x8xf32>
    %72 = arith.truncf %71 : vector<8x8xf32> to vector<8x8xbf16>
    %cst_26 = arith.constant dense<0.000000e+00> : vector<8x8xf32>
    %73 = tpu.matmul %72, %58, %cst_26 {dimension_numbers = #tpu.dot_dimension_numbers<[1], [0], [0], [1], [0, 0, 1, 1], [], []>} : vector<8x8xbf16>, vector<8x8xbf16>, vector<8x8xf32> -> vector<8x8xf32>
    %74 = arith.truncf %73 : vector<8x8xf32> to vector<8x8xbf16>
    %c0_27 = arith.constant 0 : index
    %c8 = arith.constant 8 : index
    %75 = vector.load %arg15[%c0_27, %c8] : memref<8x32xbf16, #tpu.memory_space<vmem>>, vector<8x8xbf16>
    tpu.vector_store %arg15[%c0_27, %c8], %74 {strides = array<i32>} : memref<8x32xbf16, #tpu.memory_space<vmem>>, vector<8x8xbf16>,
    %76 = vector.extract_strided_slice %32 {offsets = [0, 16], sizes = [8, 8], strides = [1, 1]} : vector<8x96xbf16> to vector<8x8xbf16>
    %77 = vector.extract_strided_slice %32 {offsets = [0, 48], sizes = [8, 8], strides = [1, 1]} : vector<8x96xbf16> to vector<8x8xbf16>
    %78 = vector.extract_strided_slice %32 {offsets = [0, 80], sizes = [8, 8], strides = [1, 1]} : vector<8x96xbf16> to vector<8x8xbf16>
    "tpu.trace_start"() <{level = 10 : i32, message = "qd,kd->qk"}> : () -> ()
    %cst_28 = arith.constant dense<0.000000e+00> : vector<8x8xf32>
    %79 = tpu.matmul %76, %77, %cst_28 {dimension_numbers = #tpu.dot_dimension_numbers<[1], [1], [0], [0], [0, 0, 1, 0], [], []>} : vector<8x8xbf16>, vector<8x8xbf16>, vector<8x8xf32> -> vector<8x8xf32>
    %cst_29 = arith.constant 0xFF800000 : f32
    "tpu.trace_stop"() : () -> ()
    %80 = vector.broadcast %cst_29 : f32 to vector<8x8xf32>
    %81 = arith.select %35, %79, %80 : vector<8x8xi1>, vector<8x8xf32>
    %cst_30 = arith.constant dense<0xFF800000> : vector<8xf32>
    %82 = vector.multi_reduction <maximumf>, %81, %cst_30 [1] : vector<8x8xf32> to vector<8xf32>
    %83 = vector.shape_cast %82 : vector<8xf32> to vector<8x1xf32>
    %84 = vector.broadcast %83 : vector<8x1xf32> to vector<8x8xf32>
    %85 = arith.subf %81, %84 : vector<8x8xf32>
    %86 = math.exp %85 : vector<8x8xf32>
    %cst_31 = arith.constant dense<0.000000e+00> : vector<8xf32>
    %87 = vector.multi_reduction <add>, %86, %cst_31 [1] : vector<8x8xf32> to vector<8xf32>
    %88 = vector.shape_cast %87 : vector<8xf32> to vector<8x1xf32>
    %89 = tpu.reciprocal %88 {approx = true} : vector<8x1xf32> -> vector<8x1xf32>
    %90 = vector.broadcast %89 : vector<8x1xf32> to vector<8x8xf32>
    %91 = arith.mulf %86, %90 : vector<8x8xf32>
    %92 = arith.truncf %91 : vector<8x8xf32> to vector<8x8xbf16>
    %cst_32 = arith.constant dense<0.000000e+00> : vector<8x8xf32>
    %93 = tpu.matmul %92, %78, %cst_32 {dimension_numbers = #tpu.dot_dimension_numbers<[1], [0], [0], [1], [0, 0, 1, 1], [], []>} : vector<8x8xbf16>, vector<8x8xbf16>, vector<8x8xf32> -> vector<8x8xf32>
    %94 = arith.truncf %93 : vector<8x8xf32> to vector<8x8xbf16>
    %c0_33 = arith.constant 0 : index
    %c16 = arith.constant 16 : index
    %95 = vector.load %arg15[%c0_33, %c16] : memref<8x32xbf16, #tpu.memory_space<vmem>>, vector<8x8xbf16>
    tpu.vector_store %arg15[%c0_33, %c16], %94 {strides = array<i32>} : memref<8x32xbf16, #tpu.memory_space<vmem>>, vector<8x8xbf16>,
    %96 = vector.extract_strided_slice %32 {offsets = [0, 24], sizes = [8, 8], strides = [1, 1]} : vector<8x96xbf16> to vector<8x8xbf16>
    %97 = vector.extract_strided_slice %32 {offsets = [0, 56], sizes = [8, 8], strides = [1, 1]} : vector<8x96xbf16> to vector<8x8xbf16>
    %98 = vector.extract_strided_slice %32 {offsets = [0, 88], sizes = [8, 8], strides = [1, 1]} : vector<8x96xbf16> to vector<8x8xbf16>
    "tpu.trace_start"() <{level = 10 : i32, message = "qd,kd->qk"}> : () -> ()
    %cst_34 = arith.constant dense<0.000000e+00> : vector<8x8xf32>
    %99 = tpu.matmul %96, %97, %cst_34 {dimension_numbers = #tpu.dot_dimension_numbers<[1], [1], [0], [0], [0, 0, 1, 0], [], []>} : vector<8x8xbf16>, vector<8x8xbf16>, vector<8x8xf32> -> vector<8x8xf32>
    %cst_35 = arith.constant 0xFF800000 : f32
    "tpu.trace_stop"() : () -> ()
    %100 = vector.broadcast %cst_35 : f32 to vector<8x8xf32>
    %101 = arith.select %35, %99, %100 : vector<8x8xi1>, vector<8x8xf32>
    %cst_36 = arith.constant dense<0xFF800000> : vector<8xf32>
    %102 = vector.multi_reduction <maximumf>, %101, %cst_36 [1] : vector<8x8xf32> to vector<8xf32>
    %103 = vector.shape_cast %102 : vector<8xf32> to vector<8x1xf32>
    %104 = vector.broadcast %103 : vector<8x1xf32> to vector<8x8xf32>
    %105 = arith.subf %101, %104 : vector<8x8xf32>
    %106 = math.exp %105 : vector<8x8xf32>
    %cst_37 = arith.constant dense<0.000000e+00> : vector<8xf32>
    %107 = vector.multi_reduction <add>, %106, %cst_37 [1] : vector<8x8xf32> to vector<8xf32>
    %108 = vector.shape_cast %107 : vector<8xf32> to vector<8x1xf32>
    %109 = tpu.reciprocal %108 {approx = true} : vector<8x1xf32> -> vector<8x1xf32>
    %110 = vector.broadcast %109 : vector<8x1xf32> to vector<8x8xf32>
    %111 = arith.mulf %106, %110 : vector<8x8xf32>
    %112 = arith.truncf %111 : vector<8x8xf32> to vector<8x8xbf16>
    %cst_38 = arith.constant dense<0.000000e+00> : vector<8x8xf32>
    %113 = tpu.matmul %112, %98, %cst_38 {dimension_numbers = #tpu.dot_dimension_numbers<[1], [0], [0], [1], [0, 0, 1, 1], [], []>} : vector<8x8xbf16>, vector<8x8xbf16>, vector<8x8xf32> -> vector<8x8xf32>
    %114 = arith.truncf %113 : vector<8x8xf32> to vector<8x8xbf16>
    %c0_39 = arith.constant 0 : index
    %c24 = arith.constant 24 : index
    %115 = vector.load %arg15[%c0_39, %c24] : memref<8x32xbf16, #tpu.memory_space<vmem>>, vector<8x8xbf16>
    tpu.vector_store %arg15[%c0_39, %c24], %114 {strides = array<i32>} : memref<8x32xbf16, #tpu.memory_space<vmem>>, vector<8x8xbf16>,
    %c0_40 = arith.constant 0 : index
    %c0_41 = arith.constant 0 : index
    %116 = vector.load %arg15[%c0_40, %c0_41] : memref<8x32xbf16, #tpu.memory_space<vmem>>, vector<8x32xbf16>
    %c0_42 = arith.constant 0 : index
    %c0_43 = arith.constant 0 : index
    %117 = vector.load %arg6[%c0_42, %c0_43] : memref<32x32xbf16, #tpu.memory_space<vmem>>, vector<32x32xbf16>
    %cst_44 = arith.constant dense<0.000000e+00> : vector<8x32xf32>
    %118 = tpu.matmul %116, %117, %cst_44 {dimension_numbers = #tpu.dot_dimension_numbers<[1], [0], [0], [1], [0, 0, 1, 1], [], []>} : vector<8x32xbf16>, vector<32x32xbf16>, vector<8x32xf32> -> vector<8x32xf32>
    %c0_45 = arith.constant 0 : index
    %c0_46 = arith.constant 0 : index
    %119 = vector.load %arg7[%c0_45, %c0_46] : memref<1x32xf32, #tpu.memory_space<vmem>>, vector<1x32xf32>
    %120 = vector.broadcast %119 : vector<1x32xf32> to vector<8x32xf32>
    %121 = arith.addf %118, %120 : vector<8x32xf32>
    %122 = arith.addf %1, %121 : vector<8x32xf32>
    %c0_47 = arith.constant 0 : index
    %c0_48 = arith.constant 0 : index
    %123 = vector.load %arg8[%c0_47, %c0_48] : memref<1x32xf32, #tpu.memory_space<vmem>>, vector<1x32xf32>
    %c0_49 = arith.constant 0 : index
    %c0_50 = arith.constant 0 : index
    %124 = vector.load %arg9[%c0_49, %c0_50] : memref<1x32xf32, #tpu.memory_space<vmem>>, vector<1x32xf32>
    %cst_51 = arith.constant dense<0.000000e+00> : vector<8xf32>
    %125 = vector.multi_reduction <add>, %122, %cst_51 [1] : vector<8x32xf32> to vector<8xf32>
    %126 = vector.shape_cast %125 : vector<8xf32> to vector<8x1xf32>
    %cst_52 = arith.constant 3.200000e+01 : f32
    %127 = vector.broadcast %cst_52 : f32 to vector<8x1xf32>
    %128 = arith.divf %126, %127 : vector<8x1xf32>
    %129 = vector.broadcast %128 : vector<8x1xf32> to vector<8x32xf32>
    %130 = arith.subf %122, %129 : vector<8x32xf32>
    %131 = arith.mulf %130, %130 : vector<8x32xf32>
    %cst_53 = arith.constant dense<0.000000e+00> : vector<8xf32>
    %132 = vector.multi_reduction <add>, %131, %cst_53 [1] : vector<8x32xf32> to vector<8xf32>
    %133 = vector.shape_cast %132 : vector<8xf32> to vector<8x1xf32>
    %cst_54 = arith.constant 3.200000e+01 : f32
    %134 = vector.broadcast %cst_54 : f32 to vector<8x1xf32>
    %135 = arith.divf %133, %134 : vector<8x1xf32>
    %136 = vector.broadcast %128 : vector<8x1xf32> to vector<8x32xf32>
    %137 = arith.subf %122, %136 : vector<8x32xf32>
    %cst_55 = arith.constant 9.99999974E-6 : f32
    %138 = vector.broadcast %cst_55 : f32 to vector<8x1xf32>
    %139 = arith.addf %135, %138 : vector<8x1xf32>
    %140 = math.rsqrt %139 : vector<8x1xf32>
    %141 = vector.broadcast %140 : vector<8x1xf32> to vector<8x32xf32>
    %142 = arith.mulf %137, %141 : vector<8x32xf32>
    %143 = vector.broadcast %123 : vector<1x32xf32> to vector<8x32xf32>
    %144 = arith.mulf %142, %143 : vector<8x32xf32>
    %145 = vector.broadcast %124 : vector<1x32xf32> to vector<8x32xf32>
    %146 = arith.addf %144, %145 : vector<8x32xf32>
    %147 = arith.truncf %146 : vector<8x32xf32> to vector<8x32xbf16>
    %cst_56 = arith.constant 0.000000e+00 : f32
    %148 = vector.broadcast %cst_56 : f32 to vector<8x32xf32>
    %c0_57 = arith.constant 0 : index
    %c0_58 = arith.constant 0 : index
    %149 = vector.load %arg10[%c0_57, %c0_58] : memref<32x128xbf16, #tpu.memory_space<vmem>>, vector<32x128xbf16>
    %cst_59 = arith.constant dense<0.000000e+00> : vector<8x128xf32>
    %150 = tpu.matmul %147, %149, %cst_59 {dimension_numbers = #tpu.dot_dimension_numbers<[1], [0], [0], [1], [0, 0, 1, 1], [], []>} : vector<8x32xbf16>, vector<32x128xbf16>, vector<8x128xf32> -> vector<8x128xf32>
    %c0_60 = arith.constant 0 : index
    %c0_61 = arith.constant 0 : index
    %151 = vector.load %arg11[%c0_60, %c0_61] : memref<1x128xf32, #tpu.memory_space<vmem>>, vector<1x128xf32>
    %152 = vector.broadcast %151 : vector<1x128xf32> to vector<8x128xf32>
    %153 = arith.addf %150, %152 : vector<8x128xf32>
    %cst_62 = arith.constant 1.702000e+00 : f32
    %154 = vector.broadcast %cst_62 : f32 to vector<8x128xf32>
    %155 = arith.mulf %154, %153 : vector<8x128xf32>
    %156 = arith.negf %155 : vector<8x128xf32>
    %157 = math.exp %156 : vector<8x128xf32>
    %cst_63 = arith.constant 1.000000e+00 : f32
    %158 = vector.broadcast %cst_63 : f32 to vector<8x128xf32>
    %159 = arith.addf %158, %157 : vector<8x128xf32>
    %160 = arith.divf %158, %159 : vector<8x128xf32>
    %161 = arith.mulf %153, %160 : vector<8x128xf32>
    %162 = arith.truncf %161 : vector<8x128xf32> to vector<8x128xbf16>
    %c0_64 = arith.constant 0 : index
    %c0_65 = arith.constant 0 : index
    %163 = vector.load %arg12[%c0_64, %c0_65] : memref<128x32xbf16, #tpu.memory_space<vmem>>, vector<128x32xbf16>
    %cst_66 = arith.constant dense<0.000000e+00> : vector<8x32xf32>
    %164 = tpu.matmul %162, %163, %cst_66 {dimension_numbers = #tpu.dot_dimension_numbers<[1], [0], [0], [1], [0, 0, 1, 1], [], []>} : vector<8x128xbf16>, vector<128x32xbf16>, vector<8x32xf32> -> vector<8x32xf32>
    %165 = arith.addf %148, %164 : vector<8x32xf32>
    %166 = arith.addf %122, %165 : vector<8x32xf32>
    %c0_67 = arith.constant 0 : index
    %c0_68 = arith.constant 0 : index
    %167 = vector.load %arg13[%c0_67, %c0_68] : memref<1x32xf32, #tpu.memory_space<vmem>>, vector<1x32xf32>
    %168 = vector.broadcast %167 : vector<1x32xf32> to vector<8x32xf32>
    %169 = arith.addf %166, %168 : vector<8x32xf32>
    %c0_69 = arith.constant 0 : index
    %c0_70 = arith.constant 0 : index
    %c0_71 = arith.constant 0 : index
    %170 = vector.load %arg14[%c0_69, %c0_70, %c0_71] : memref<1x8x32xf32, #tpu.memory_space<vmem>>, vector<1x8x32xf32>
    %171 = vector.shape_cast %170 : vector<1x8x32xf32> to vector<8x32xf32>
    %172 = vector.shape_cast %169 : vector<8x32xf32> to vector<1x8x32xf32>
    tpu.vector_store %arg14[%c0_69, %c0_70, %c0_71], %172 {strides = array<i32>} : memref<1x8x32xf32, #tpu.memory_space<vmem>>, vector<1x8x32xf32>,
    return
  }
  func.func @transform_0(%arg0: i32) -> (i32, i32, i32) {
    %c0_i32 = arith.constant 0 : i32
    %c0_i32_0 = arith.constant 0 : i32
    %c0_i32_1 = arith.constant 0 : i32
    return %arg0, %c0_i32, %c0_i32_0 : i32, i32, i32
  }
  func.func @transform_1(%arg0: i32) -> (i32, i32) {
    %c0_i32 = arith.constant 0 : i32
    %c0_i32_0 = arith.constant 0 : i32
    %c0_i32_1 = arith.constant 0 : i32
    return %c0_i32, %c0_i32_0 : i32, i32
  }
  func.func @transform_2(%arg0: i32) -> (i32, i32) {
    %c0_i32 = arith.constant 0 : i32
    %c0_i32_0 = arith.constant 0 : i32
    %c0_i32_1 = arith.constant 0 : i32
    return %c0_i32, %c0_i32_0 : i32, i32
  }
  func.func @transform_3(%arg0: i32) -> (i32, i32) {
    %c0_i32 = arith.constant 0 : i32
    %c0_i32_0 = arith.constant 0 : i32
    %c0_i32_1 = arith.constant 0 : i32
    return %c0_i32, %c0_i32_0 : i32, i32
  }
  func.func @transform_4(%arg0: i32) -> (i32, i32) {
    %c0_i32 = arith.constant 0 : i32
    %c0_i32_0 = arith.constant 0 : i32
    %c0_i32_1 = arith.constant 0 : i32
    return %c0_i32, %c0_i32_0 : i32, i32
  }
  func.func @transform_5(%arg0: i32) -> (i32, i32) {
    %c0_i32 = arith.constant 0 : i32
    %c0_i32_0 = arith.constant 0 : i32
    %c0_i32_1 = arith.constant 0 : i32
    return %c0_i32, %c0_i32_0 : i32, i32
  }
  func.func @transform_6(%arg0: i32) -> (i32, i32) {
    %c0_i32 = arith.constant 0 : i32
    %c0_i32_0 = arith.constant 0 : i32
    %c0_i32_1 = arith.constant 0 : i32
    return %c0_i32, %c0_i32_0 : i32, i32
  }
  func.func @transform_7(%arg0: i32) -> (i32, i32) {
    %c0_i32 = arith.constant 0 : i32
    %c0_i32_0 = arith.constant 0 : i32
    %c0_i32_1 = arith.constant 0 : i32
    return %c0_i32, %c0_i32_0 : i32, i32
  }
  func.func @transform_8(%arg0: i32) -> (i32, i32) {
    %c0_i32 = arith.constant 0 : i32
    %c0_i32_0 = arith.constant 0 : i32
    %c0_i32_1 = arith.constant 0 : i32
    return %c0_i32, %c0_i32_0 : i32, i32
  }
  func.func @transform_9(%arg0: i32) -> (i32, i32) {
    %c0_i32 = arith.constant 0 : i32
    %c0_i32_0 = arith.constant 0 : i32
    %c0_i32_1 = arith.constant 0 : i32
    return %c0_i32, %c0_i32_0 : i32, i32
  }
  func.func @transform_10(%arg0: i32) -> (i32, i32) {
    %c0_i32 = arith.constant 0 : i32
    %c0_i32_0 = arith.constant 0 : i32
    %c0_i32_1 = arith.constant 0 : i32
    return %c0_i32, %c0_i32_0 : i32, i32
  }
  func.func @transform_11(%arg0: i32) -> (i32, i32) {
    %c0_i32 = arith.constant 0 : i32
    %c0_i32_0 = arith.constant 0 : i32
    %c0_i32_1 = arith.constant 0 : i32
    return %c0_i32, %c0_i32_0 : i32, i32
  }
  func.func @transform_12(%arg0: i32) -> (i32, i32) {
    %c0_i32 = arith.constant 0 : i32
    %c0_i32_0 = arith.constant 0 : i32
    %c0_i32_1 = arith.constant 0 : i32
    return %c0_i32, %c0_i32_0 : i32, i32
  }
  func.func @transform_13(%arg0: i32) -> (i32, i32, i32) {
    %c0_i32 = arith.constant 0 : i32
    %c0_i32_0 = arith.constant 0 : i32
    %c0_i32_1 = arith.constant 0 : i32
    return %arg0, %c0_i32, %c0_i32_0 : i32, i32, i32
  }
}

module attributes {stable_mosaic.version = 11 : i64} {
  func.func @resblock_kernel(%arg0: i32, %arg1: memref<1x8x32xf32, #tpu.memory_space<vmem>>, %arg2: memref<1x32xf32, #tpu.memory_space<vmem>>, %arg3: memref<1x32xf32, #tpu.memory_space<vmem>>, %arg4: memref<32x96xbf16, #tpu.memory_space<vmem>>, %arg5: memref<1x96xf32, #tpu.memory_space<vmem>>, %arg6: memref<32x32xbf16, #tpu.memory_space<vmem>>, %arg7: memref<1x32xf32, #tpu.memory_space<vmem>>, %arg8: memref<1x32xf32, #tpu.memory_space<vmem>>, %arg9: memref<1x32xf32, #tpu.memory_space<vmem>>, %arg10: memref<32x128xbf16, #tpu.memory_space<vmem>>, %arg11: memref<1x128xf32, #tpu.memory_space<vmem>>, %arg12: memref<128x32xbf16, #tpu.memory_space<vmem>>, %arg13: memref<1x32xf32, #tpu.memory_space<vmem>>, %arg14: memref<1x8x32xf32, #tpu.memory_space<vmem>>, %arg15: memref<8x32xbf16, #tpu.memory_space<vmem>>) attributes {dimension_semantics = [#tpu.dimension_semantics<parallel>], iteration_bounds = array<i64: 2>, scalar_prefetch = 0 : i64, scratch_operands = 1 : i64, tpu.core_type = #tpu.core_type<tc>, window_params = [{transform_indices = @transform_0, window_bounds = array<i64: 1, 8, 32>}, {pipeline_mode = #tpu.pipeline_mode<synchronous>, transform_indices = @transform_1, window_bounds = array<i64: 1, 32>}, {pipeline_mode = #tpu.pipeline_mode<synchronous>, transform_indices = @transform_2, window_bounds = array<i64: 1, 32>}, {pipeline_mode = #tpu.pipeline_mode<synchronous>, transform_indices = @transform_3, window_bounds = array<i64: 32, 96>}, {pipeline_mode = #tpu.pipeline_mode<synchronous>, transform_indices = @transform_4, window_bounds = array<i64: 1, 96>}, {pipeline_mode = #tpu.pipeline_mode<synchronous>, transform_indices = @transform_5, window_bounds = array<i64: 32, 32>}, {pipeline_mode = #tpu.pipeline_mode<synchronous>, transform_indices = @transform_6, window_bounds = array<i64: 1, 32>}, {pipeline_mode = #tpu.pipeline_mode<synchronous>, transform_indices = @transform_7, window_bounds = array<i64: 1, 32>}, {pipeline_mode = #tpu.pipeline_mode<synchronous>, transform_indices = @transform_8, window_bounds = array<i64: 1, 32>}, {pipeline_mode = #tpu.pipeline_mode<synchronous>, transform_indices = @transform_9, window_bounds = array<i64: 32, 128>}, {pipeline_mode = #tpu.pipeline_mode<synchronous>, transform_indices = @transform_10, window_bounds = array<i64: 1, 128>}, {pipeline_mode = #tpu.pipeline_mode<synchronous>, transform_indices = @transform_11, window_bounds = array<i64: 128, 32>}, {pipeline_mode = #tpu.pipeline_mode<synchronous>, transform_indices = @transform_12, window_bounds = array<i64: 1, 32>}, {transform_indices = @transform_13, window_bounds = array<i64: 1, 8, 32>}]} {
    %c0 = arith.constant 0 : index
    %c0_0 = arith.constant 0 : index
    %c0_1 = arith.constant 0 : index
    %0 = vector.load %arg1[%c0, %c0_0, %c0_1] : memref<1x8x32xf32, #tpu.memory_space<vmem>>, vector<1x8x32xf32>
    %1 = vector.shape_cast %0 : vector<1x8x32xf32> to vector<8x32xf32>
    %c0_2 = arith.constant 0 : index
    %c0_3 = arith.constant 0 : index
    %2 = vector.load %arg2[%c0_2, %c0_3] : memref<1x32xf32, #tpu.memory_space<vmem>>, vector<1x32xf32>
    %c0_4 = arith.constant 0 : index
    %c0_5 = arith.constant 0 : index
    %3 = vector.load %arg3[%c0_4, %c0_5] : memref<1x32xf32, #tpu.memory_space<vmem>>, vector<1x32xf32>
    %cst = arith.constant dense<0.000000e+00> : vector<8xf32>
    %4 = vector.multi_reduction <add>, %1, %cst [1] : vector<8x32xf32> to vector<8xf32>
    %5 = vector.shape_cast %4 : vector<8xf32> to vector<8x1xf32>
    %cst_6 = arith.constant 3.200000e+01 : f32
    %6 = vector.broadcast %cst_6 : f32 to vector<8x1xf32>
    %7 = arith.divf %5, %6 : vector<8x1xf32>
    %8 = vector.broadcast %7 : vector<8x1xf32> to vector<8x32xf32>
    %9 = arith.subf %1, %8 : vector<8x32xf32>
    %10 = arith.mulf %9, %9 : vector<8x32xf32>
    %cst_7 = arith.constant dense<0.000000e+00> : vector<8xf32>
    %11 = vector.multi_reduction <add>, %10, %cst_7 [1] : vector<8x32xf32> to vector<8xf32>
    %12 = vector.shape_cast %11 : vector<8xf32> to vector<8x1xf32>
    %cst_8 = arith.constant 3.200000e+01 : f32
    %13 = vector.broadcast %cst_8 : f32 to vector<8x1xf32>
    %14 = arith.divf %12, %13 : vector<8x1xf32>
    %15 = vector.broadcast %7 : vector<8x1xf32> to vector<8x32xf32>
    %16 = arith.subf %1, %15 : vector<8x32xf32>
    %cst_9 = arith.constant 9.99999974E-6 : f32
    %17 = vector.broadcast %cst_9 : f32 to vector<8x1xf32>
    %18 = arith.addf %14, %17 : vector<8x1xf32>
    %19 = math.rsqrt %18 : vector<8x1xf32>
    %20 = vector.broadcast %19 : vector<8x1xf32> to vector<8x32xf32>
    %21 = arith.mulf %16, %20 : vector<8x32xf32>
    %22 = vector.broadcast %2 : vector<1x32xf32> to vector<8x32xf32>
    %23 = arith.mulf %21, %22 : vector<8x32xf32>
    %24 = vector.broadcast %3 : vector<1x32xf32> to vector<8x32xf32>
    %25 = arith.addf %23, %24 : vector<8x32xf32>
    %26 = arith.truncf %25 : vector<8x32xf32> to vector<8x32xbf16>
    %c0_10 = arith.constant 0 : index
    %c0_11 = arith.constant 0 : index
    %27 = vector.load %arg4[%c0_10, %c0_11] : memref<32x96xbf16, #tpu.memory_space<vmem>>, vector<32x96xbf16>
    %cst_12 = arith.constant dense<0.000000e+00> : vector<8x96xf32>
    %28 = tpu.matmul %26, %27, %cst_12 {dimension_numbers = #tpu.dot_dimension_numbers<[1], [0], [0], [1], [0, 0, 1, 1], [], []>} : vector<8x32xbf16>, vector<32x96xbf16>, vector<8x96xf32> -> vector<8x96xf32>
    %c0_13 = arith.constant 0 : index
    %c0_14 = arith.constant 0 : index
    %29 = vector.load %arg5[%c0_13, %c0_14] : memref<1x96xf32, #tpu.memory_space<vmem>>, vector<1x96xf32>
    %30 = vector.broadcast %29 : vector<1x96xf32> to vector<8x96xf32>
    %31 = arith.addf %28, %30 : vector<8x96xf32>
    %32 = arith.truncf %31 : vector<8x96xf32> to vector<8x96xbf16>
    %33 = tpu.iota {dimensions = array<i32: 0>} : vector<8x8xi32>
    %34 = tpu.iota {dimensions = array<i32: 1>} : vector<8x8xi32>
    %35 = arith.cmpi sle, %34, %33 : vector<8x8xi32>
    %36 = vector.extract_strided_slice %32 {offsets = [0, 0], sizes = [8, 8], strides = [1, 1]} : vector<8x96xbf16> to vector<8x8xbf16>
    %37 = vector.extract_strided_slice %32 {offsets = [0, 32], sizes = [8, 8], strides = [1, 1]} : vector<8x96xbf16> to vector<8x8xbf16>
    %38 = vector.extract_strided_slice %32 {offsets = [0, 64], sizes = [8, 8], strides = [1, 1]} : vector<8x96xbf16> to vector<8x8xbf16>
    "tpu.trace_start"() <{level = 10 : i32, message = "qd,kd->qk"}> : () -> ()
    %cst_15 = arith.constant dense<0.000000e+00> : vector<8x8xf32>
    %39 = tpu.matmul %36, %37, %cst_15 {dimension_numbers = #tpu.dot_dimension_numbers<[1], [1], [0], [0], [0, 0, 1, 0], [], []>} : vector<8x8xbf16>, vector<8x8xbf16>, vector<8x8xf32> -> vector<8x8xf32>
    %cst_16 = arith.constant 0xFF800000 : f32
    "tpu.trace_stop"() : () -> ()
    %40 = vector.broadcast %cst_16 : f32 to vector<8x8xf32>
    %41 = arith.select %35, %39, %40 : vector<8x8xi1>, vector<8x8xf32>
    %cst_17 = arith.constant dense<0xFF800000> : vector<8xf32>
    %42 = vector.multi_reduction <maximumf>, %41, %cst_17 [1] : vector<8x8xf32> to vector<8xf32>
    %43 = vector.shape_cast %42 : vector<8xf32> to vector<8x1xf32>
    %44 = vector.broadcast %43 : vector<8x1xf32> to vector<8x8xf32>
    %45 = arith.subf %41, %44 : vector<8x8xf32>
    %46 = math.exp %45 : vector<8x8xf32>
    %cst_18 = arith.constant dense<0.000000e+00> : vector<8xf32>
    %47 = vector.multi_reduction <add>, %46, %cst_18 [1] : vector<8x8xf32> to vector<8xf32>
    %48 = vector.shape_cast %47 : vector<8xf32> to vector<8x1xf32>
    %49 = tpu.reciprocal %48 {approx = true} : vector<8x1xf32> -> vector<8x1xf32>
    %50 = vector.broadcast %49 : vector<8x1xf32> to vector<8x8xf32>
    %51 = arith.mulf %46, %50 : vector<8x8xf32>
    %52 = arith.truncf %51 : vector<8x8xf32> to vector<8x8xbf16>
    %cst_19 = arith.constant dense<0.000000e+00> : vector<8x8xf32>
    %53 = tpu.matmul %52, %38, %cst_19 {dimension_numbers = #tpu.dot_dimension_numbers<[1], [0], [0], [1], [0, 0, 1, 1], [], []>} : vector<8x8xbf16>, vector<8x8xbf16>, vector<8x8xf32> -> vector<8x8xf32>
    %54 = arith.truncf %53 : vector<8x8xf32> to vector<8x8xbf16>
    %c0_20 = arith.constant 0 : index
    %c0_21 = arith.constant 0 : index
    %55 = vector.load %arg15[%c0_20, %c0_21] : memref<8x32xbf16, #tpu.memory_space<vmem>>, vector<8x8xbf16>
    tpu.vector_store %arg15[%c0_20, %c0_21], %54 {strides = array<i32>} : memref<8x32xbf16, #tpu.memory_space<vmem>>, vector<8x8xbf16>,
    %56 = vector.extract_strided_slice %32 {offsets = [0, 8], sizes = [8, 8], strides = [1, 1]} : vector<8x96xbf16> to vector<8x8xbf16>
    %57 = vector.extract_strided_slice %32 {offsets = [0, 40], sizes = [8, 8], strides = [1, 1]} : vector<8x96xbf16> to vector<8x8xbf16>
    %58 = vector.extract_strided_slice %32 {offsets = [0, 72], sizes = [8, 8], strides = [1, 1]} : vector<8x96xbf16> to vector<8x8xbf16>
    "tpu.trace_start"() <{level = 10 : i32, message = "qd,kd->qk"}> : () -> ()
    %cst_22 = arith.constant dense<0.000000e+00> : vector<8x8xf32>
    %59 = tpu.matmul %56, %57, %cst_22 {dimension_numbers = #tpu.dot_dimension_numbers<[1], [1], [0], [0], [0, 0, 1, 0], [], []>} : vector<8x8xbf16>, vector<8x8xbf16>, vector<8x8xf32> -> vector<8x8xf32>
    %cst_23 = arith.constant 0xFF800000 : f32
    "tpu.trace_stop"() : () -> ()
    %60 = vector.broadcast %cst_23 : f32 to vector<8x8xf32>
    %61 = arith.select %35, %59, %60 : vector<8x8xi1>, vector<8x8xf32>
    %cst_24 = arith.constant dense<0xFF800000> : vector<8xf32>
    %62 = vector.multi_reduction <maximumf>, %61, %cst_24 [1] : vector<8x8xf32> to vector<8xf32>
    %63 = vector.shape_cast %62 : vector<8xf32> to vector<8x1xf32>
    %64 = vector.broadcast %63 : vector<8x1xf32> to vector<8x8xf32>
    %65 = arith.subf %61, %64 : vector<8x8xf32>
    %66 = math.exp %65 : vector<8x8xf32>
    %cst_25 = arith.constant dense<0.000000e+00> : vector<8xf32>
    %67 = vector.multi_reduction <add>, %66, %cst_25 [1] : vector<8x8xf32> to vector<8xf32>
    %68 = vector.shape_cast %67 : vector<8xf32> to vector<8x1xf32>
    %69 = tpu.reciprocal %68 {approx = true} : vector<8x1xf32> -> vector<8x1xf32>
    %70 = vector.broadcast %69 : vector<8x1xf32> to vector<8x8xf32>
    %71 = arith.mulf %66, %70 : vector<8x8xf32>
    %72 = arith.truncf %71 : vector<8x8xf32> to vector<8x8xbf16>
    %cst_26 = arith.constant dense<0.000000e+00> : vector<8x8xf32>
    %73 = tpu.matmul %72, %58, %cst_26 {dimension_numbers = #tpu.dot_dimension_numbers<[1], [0], [0], [1], [0, 0, 1, 1], [], []>} : vector<8x8xbf16>, vector<8x8xbf16>, vector<8x8xf32> -> vector<8x8xf32>
    %74 = arith.truncf %73 : vector<8x8xf32> to vector<8x8xbf16>
    %c0_27 = arith.constant 0 : index
    %c8 = arith.constant 8 : index
    %75 = vector.load %arg15[%c0_27, %c8] : memref<8x32xbf16, #tpu.memory_space<vmem>>, vector<8x8xbf16>
    tpu.vector_store %arg15[%c0_27, %c8], %74 {strides = array<i32>} : memref<8x32xbf16, #tpu.memory_space<vmem>>, vector<8x8xbf16>,
    %76 = vector.extract_strided_slice %32 {offsets = [0, 16], sizes = [8, 8], strides = [1, 1]} : vector<8x96xbf16> to vector<8x8xbf16>
    %77 = vector.extract_strided_slice %32 {offsets = [0, 48], sizes = [8, 8], strides = [1, 1]} : vector<8x96xbf16> to vector<8x8xbf16>
    %78 = vector.extract_strided_slice %32 {offsets = [0, 80], sizes = [8, 8], strides = [1, 1]} : vector<8x96xbf16> to vector<8x8xbf16>
    "tpu.trace_start"() <{level = 10 : i32, message = "qd,kd->qk"}> : () -> ()
    %cst_28 = arith.constant dense<0.000000e+00> : vector<8x8xf32>
    %79 = tpu.matmul %76, %77, %cst_28 {dimension_numbers = #tpu.dot_dimension_numbers<[1], [1], [0], [0], [0, 0, 1, 0], [], []>} : vector<8x8xbf16>, vector<8x8xbf16>, vector<8x8xf32> -> vector<8x8xf32>
    %cst_29 = arith.constant 0xFF800000 : f32
    "tpu.trace_stop"() : () -> ()
    %80 = vector.broadcast %cst_29 : f32 to vector<8x8xf32>
    %81 = arith.select %35, %79, %80 : vector<8x8xi1>, vector<8x8xf32>
    %cst_30 = arith.constant dense<0xFF800000> : vector<8xf32>
    %82 = vector.multi_reduction <maximumf>, %81, %cst_30 [1] : vector<8x8xf32> to vector<8xf32>
    %83 = vector.shape_cast %82 : vector<8xf32> to vector<8x1xf32>
    %84 = vector.broadcast %83 : vector<8x1xf32> to vector<8x8xf32>
    %85 = arith.subf %81, %84 : vector<8x8xf32>
    %86 = math.exp %85 : vector<8x8xf32>
    %cst_31 = arith.constant dense<0.000000e+00> : vector<8xf32>
    %87 = vector.multi_reduction <add>, %86, %cst_31 [1] : vector<8x8xf32> to vector<8xf32>
    %88 = vector.shape_cast %87 : vector<8xf32> to vector<8x1xf32>
    %89 = tpu.reciprocal %88 {approx = true} : vector<8x1xf32> -> vector<8x1xf32>
    %90 = vector.broadcast %89 : vector<8x1xf32> to vector<8x8xf32>
    %91 = arith.mulf %86, %90 : vector<8x8xf32>
    %92 = arith.truncf %91 : vector<8x8xf32> to vector<8x8xbf16>
    %cst_32 = arith.constant dense<0.000000e+00> : vector<8x8xf32>
    %93 = tpu.matmul %92, %78, %cst_32 {dimension_numbers = #tpu.dot_dimension_numbers<[1], [0], [0], [1], [0, 0, 1, 1], [], []>} : vector<8x8xbf16>, vector<8x8xbf16>, vector<8x8xf32> -> vector<8x8xf32>
    %94 = arith.truncf %93 : vector<8x8xf32> to vector<8x8xbf16>
    %c0_33 = arith.constant 0 : index
    %c16 = arith.constant 16 : index
    %95 = vector.load %arg15[%c0_33, %c16] : memref<8x32xbf16, #tpu.memory_space<vmem>>, vector<8x8xbf16>
    tpu.vector_store %arg15[%c0_33, %c16], %94 {strides = array<i32>} : memref<8x32xbf16, #tpu.memory_space<vmem>>, vector<8x8xbf16>,
    %96 = vector.extract_strided_slice %32 {offsets = [0, 24], sizes = [8, 8], strides = [1, 1]} : vector<8x96xbf16> to vector<8x8xbf16>
    %97 = vector.extract_strided_slice %32 {offsets = [0, 56], sizes = [8, 8], strides = [1, 1]} : vector<8x96xbf16> to vector<8x8xbf16>
    %98 = vector.extract_strided_slice %32 {offsets = [0, 88], sizes = [8, 8], strides = [1, 1]} : vector<8x96xbf16> to vector<8x8xbf16>
    "tpu.trace_start"() <{level = 10 : i32, message = "qd,kd->qk"}> : () -> ()
    %cst_34 = arith.constant dense<0.000000e+00> : vector<8x8xf32>
    %99 = tpu.matmul %96, %97, %cst_34 {dimension_numbers = #tpu.dot_dimension_numbers<[1], [1], [0], [0], [0, 0, 1, 0], [], []>} : vector<8x8xbf16>, vector<8x8xbf16>, vector<8x8xf32> -> vector<8x8xf32>
    %cst_35 = arith.constant 0xFF800000 : f32
    "tpu.trace_stop"() : () -> ()
    %100 = vector.broadcast %cst_35 : f32 to vector<8x8xf32>
    %101 = arith.select %35, %99, %100 : vector<8x8xi1>, vector<8x8xf32>
    %cst_36 = arith.constant dense<0xFF800000> : vector<8xf32>
    %102 = vector.multi_reduction <maximumf>, %101, %cst_36 [1] : vector<8x8xf32> to vector<8xf32>
    %103 = vector.shape_cast %102 : vector<8xf32> to vector<8x1xf32>
    %104 = vector.broadcast %103 : vector<8x1xf32> to vector<8x8xf32>
    %105 = arith.subf %101, %104 : vector<8x8xf32>
    %106 = math.exp %105 : vector<8x8xf32>
    %cst_37 = arith.constant dense<0.000000e+00> : vector<8xf32>
    %107 = vector.multi_reduction <add>, %106, %cst_37 [1] : vector<8x8xf32> to vector<8xf32>
    %108 = vector.shape_cast %107 : vector<8xf32> to vector<8x1xf32>
    %109 = tpu.reciprocal %108 {approx = true} : vector<8x1xf32> -> vector<8x1xf32>
    %110 = vector.broadcast %109 : vector<8x1xf32> to vector<8x8xf32>
    %111 = arith.mulf %106, %110 : vector<8x8xf32>
    %112 = arith.truncf %111 : vector<8x8xf32> to vector<8x8xbf16>
    %cst_38 = arith.constant dense<0.000000e+00> : vector<8x8xf32>
    %113 = tpu.matmul %112, %98, %cst_38 {dimension_numbers = #tpu.dot_dimension_numbers<[1], [0], [0], [1], [0, 0, 1, 1], [], []>} : vector<8x8xbf16>, vector<8x8xbf16>, vector<8x8xf32> -> vector<8x8xf32>
    %114 = arith.truncf %113 : vector<8x8xf32> to vector<8x8xbf16>
    %c0_39 = arith.constant 0 : index
    %c24 = arith.constant 24 : index
    %115 = vector.load %arg15[%c0_39, %c24] : memref<8x32xbf16, #tpu.memory_space<vmem>>, vector<8x8xbf16>
    tpu.vector_store %arg15[%c0_39, %c24], %114 {strides = array<i32>} : memref<8x32xbf16, #tpu.memory_space<vmem>>, vector<8x8xbf16>,
    %c0_40 = arith.constant 0 : index
    %c0_41 = arith.constant 0 : index
    %116 = vector.load %arg15[%c0_40, %c0_41] : memref<8x32xbf16, #tpu.memory_space<vmem>>, vector<8x32xbf16>
    %c0_42 = arith.constant 0 : index
    %c0_43 = arith.constant 0 : index
    %117 = vector.load %arg6[%c0_42, %c0_43] : memref<32x32xbf16, #tpu.memory_space<vmem>>, vector<32x32xbf16>
    %cst_44 = arith.constant dense<0.000000e+00> : vector<8x32xf32>
    %118 = tpu.matmul %116, %117, %cst_44 {dimension_numbers = #tpu.dot_dimension_numbers<[1], [0], [0], [1], [0, 0, 1, 1], [], []>} : vector<8x32xbf16>, vector<32x32xbf16>, vector<8x32xf32> -> vector<8x32xf32>
    %c0_45 = arith.constant 0 : index
    %c0_46 = arith.constant 0 : index
    %119 = vector.load %arg7[%c0_45, %c0_46] : memref<1x32xf32, #tpu.memory_space<vmem>>, vector<1x32xf32>
    %120 = vector.broadcast %119 : vector<1x32xf32> to vector<8x32xf32>
    %121 = arith.addf %118, %120 : vector<8x32xf32>
    %122 = arith.addf %1, %121 : vector<8x32xf32>
    %c0_47 = arith.constant 0 : index
    %c0_48 = arith.constant 0 : index
    %123 = vector.load %arg8[%c0_47, %c0_48] : memref<1x32xf32, #tpu.memory_space<vmem>>, vector<1x32xf32>
    %c0_49 = arith.constant 0 : index
    %c0_50 = arith.constant 0 : index
    %124 = vector.load %arg9[%c0_49, %c0_50] : memref<1x32xf32, #tpu.memory_space<vmem>>, vector<1x32xf32>
    %cst_51 = arith.constant dense<0.000000e+00> : vector<8xf32>
    %125 = vector.multi_reduction <add>, %122, %cst_51 [1] : vector<8x32xf32> to vector<8xf32>
    %126 = vector.shape_cast %125 : vector<8xf32> to vector<8x1xf32>
    %cst_52 = arith.constant 3.200000e+01 : f32
    %127 = vector.broadcast %cst_52 : f32 to vector<8x1xf32>
    %128 = arith.divf %126, %127 : vector<8x1xf32>
    %129 = vector.broadcast %128 : vector<8x1xf32> to vector<8x32xf32>
    %130 = arith.subf %122, %129 : vector<8x32xf32>
    %131 = arith.mulf %130, %130 : vector<8x32xf32>
    %cst_53 = arith.constant dense<0.000000e+00> : vector<8xf32>
    %132 = vector.multi_reduction <add>, %131, %cst_53 [1] : vector<8x32xf32> to vector<8xf32>
    %133 = vector.shape_cast %132 : vector<8xf32> to vector<8x1xf32>
    %cst_54 = arith.constant 3.200000e+01 : f32
    %134 = vector.broadcast %cst_54 : f32 to vector<8x1xf32>
    %135 = arith.divf %133, %134 : vector<8x1xf32>
    %136 = vector.broadcast %128 : vector<8x1xf32> to vector<8x32xf32>
    %137 = arith.subf %122, %136 : vector<8x32xf32>
    %cst_55 = arith.constant 9.99999974E-6 : f32
    %138 = vector.broadcast %cst_55 : f32 to vector<8x1xf32>
    %139 = arith.addf %135, %138 : vector<8x1xf32>
    %140 = math.rsqrt %139 : vector<8x1xf32>
    %141 = vector.broadcast %140 : vector<8x1xf32> to vector<8x32xf32>
    %142 = arith.mulf %137, %141 : vector<8x32xf32>
    %143 = vector.broadcast %123 : vector<1x32xf32> to vector<8x32xf32>
    %144 = arith.mulf %142, %143 : vector<8x32xf32>
    %145 = vector.broadcast %124 : vector<1x32xf32> to vector<8x32xf32>
    %146 = arith.addf %144, %145 : vector<8x32xf32>
    %147 = arith.truncf %146 : vector<8x32xf32> to vector<8x32xbf16>
    %cst_56 = arith.constant 0.000000e+00 : f32
    %148 = vector.broadcast %cst_56 : f32 to vector<8x32xf32>
    %c0_57 = arith.constant 0 : index
    %c0_58 = arith.constant 0 : index
    %149 = vector.load %arg10[%c0_57, %c0_58] : memref<32x128xbf16, #tpu.memory_space<vmem>>, vector<32x128xbf16>
    %cst_59 = arith.constant dense<0.000000e+00> : vector<8x128xf32>
    %150 = tpu.matmul %147, %149, %cst_59 {dimension_numbers = #tpu.dot_dimension_numbers<[1], [0], [0], [1], [0, 0, 1, 1], [], []>} : vector<8x32xbf16>, vector<32x128xbf16>, vector<8x128xf32> -> vector<8x128xf32>
    %c0_60 = arith.constant 0 : index
    %c0_61 = arith.constant 0 : index
    %151 = vector.load %arg11[%c0_60, %c0_61] : memref<1x128xf32, #tpu.memory_space<vmem>>, vector<1x128xf32>
    %152 = vector.broadcast %151 : vector<1x128xf32> to vector<8x128xf32>
    %153 = arith.addf %150, %152 : vector<8x128xf32>
    %cst_62 = arith.constant 1.702000e+00 : f32
    %154 = vector.broadcast %cst_62 : f32 to vector<8x128xf32>
    %155 = arith.mulf %154, %153 : vector<8x128xf32>
    %156 = arith.negf %155 : vector<8x128xf32>
    %157 = math.exp %156 : vector<8x128xf32>
    %cst_63 = arith.constant 1.000000e+00 : f32
    %158 = vector.broadcast %cst_63 : f32 to vector<8x128xf32>
    %159 = arith.addf %158, %157 : vector<8x128xf32>
    %160 = arith.divf %158, %159 : vector<8x128xf32>
    %161 = arith.mulf %153, %160 : vector<8x128xf32>
    %162 = arith.truncf %161 : vector<8x128xf32> to vector<8x128xbf16>
    %c0_64 = arith.constant 0 : index
    %c0_65 = arith.constant 0 : index
    %163 = vector.load %arg12[%c0_64, %c0_65] : memref<128x32xbf16, #tpu.memory_space<vmem>>, vector<128x32xbf16>
    %cst_66 = arith.constant dense<0.000000e+00> : vector<8x32xf32>
    %164 = tpu.matmul %162, %163, %cst_66 {dimension_numbers = #tpu.dot_dimension_numbers<[1], [0], [0], [1], [0, 0, 1, 1], [], []>} : vector<8x128xbf16>, vector<128x32xbf16>, vector<8x32xf32> -> vector<8x32xf32>
    %165 = arith.addf %148, %164 : vector<8x32xf32>
    %166 = arith.addf %122, %165 : vector<8x32xf32>
    %c0_67 = arith.constant 0 : index
    %c0_68 = arith.constant 0 : index
    %167 = vector.load %arg13[%c0_67, %c0_68] : memref<1x32xf32, #tpu.memory_space<vmem>>, vector<1x32xf32>
    %168 = vector.broadcast %167 : vector<1x32xf32> to vector<8x32xf32>
    %169 = arith.addf %166, %168 : vector<8x32xf32>
    %c0_69 = arith.constant 0 : index
    %c0_70 = arith.constant 0 : index
    %c0_71 = arith.constant 0 : index
    %170 = vector.load %arg14[%c0_69, %c0_70, %c0_71] : memref<1x8x32xf32, #tpu.memory_space<vmem>>, vector<1x8x32xf32>
    %171 = vector.shape_cast %170 : vector<1x8x32xf32> to vector<8x32xf32>
    %172 = vector.shape_cast %169 : vector<8x32xf32> to vector<1x8x32xf32>
    tpu.vector_store %arg14[%c0_69, %c0_70, %c0_71], %172 {strides = array<i32>} : memref<1x8x32xf32, #tpu.memory_space<vmem>>, vector<1x8x32xf32>,
    return
  }
  func.func @transform_0(%arg0: i32) -> (i32, i32, i32) {
    %c0_i32 = arith.constant 0 : i32
    %c0_i32_0 = arith.constant 0 : i32
    %c0_i32_1 = arith.constant 0 : i32
    return %arg0, %c0_i32, %c0_i32_0 : i32, i32, i32
  }
  func.func @transform_1(%arg0: i32) -> (i32, i32) {
    %c0_i32 = arith.constant 0 : i32
    %c0_i32_0 = arith.constant 0 : i32
    %c0_i32_1 = arith.constant 0 : i32
    return %c0_i32, %c0_i32_0 : i32, i32
  }
  func.func @transform_2(%arg0: i32) -> (i32, i32) {
    %c0_i32 = arith.constant 0 : i32
    %c0_i32_0 = arith.constant 0 : i32
    %c0_i32_1 = arith.constant 0 : i32
    return %c0_i32, %c0_i32_0 : i32, i32
  }
  func.func @transform_3(%arg0: i32) -> (i32, i32) {
    %c0_i32 = arith.constant 0 : i32
    %c0_i32_0 = arith.constant 0 : i32
    %c0_i32_1 = arith.constant 0 : i32
    return %c0_i32, %c0_i32_0 : i32, i32
  }
  func.func @transform_4(%arg0: i32) -> (i32, i32) {
    %c0_i32 = arith.constant 0 : i32
    %c0_i32_0 = arith.constant 0 : i32
    %c0_i32_1 = arith.constant 0 : i32
    return %c0_i32, %c0_i32_0 : i32, i32
  }
  func.func @transform_5(%arg0: i32) -> (i32, i32) {
    %c0_i32 = arith.constant 0 : i32
    %c0_i32_0 = arith.constant 0 : i32
    %c0_i32_1 = arith.constant 0 : i32
    return %c0_i32, %c0_i32_0 : i32, i32
  }
  func.func @transform_6(%arg0: i32) -> (i32, i32) {
    %c0_i32 = arith.constant 0 : i32
    %c0_i32_0 = arith.constant 0 : i32
    %c0_i32_1 = arith.constant 0 : i32
    return %c0_i32, %c0_i32_0 : i32, i32
  }
  func.func @transform_7(%arg0: i32) -> (i32, i32) {
    %c0_i32 = arith.constant 0 : i32
    %c0_i32_0 = arith.constant 0 : i32
    %c0_i32_1 = arith.constant 0 : i32
    return %c0_i32, %c0_i32_0 : i32, i32
  }
  func.func @transform_8(%arg0: i32) -> (i32, i32) {
    %c0_i32 = arith.constant 0 : i32
    %c0_i32_0 = arith.constant 0 : i32
    %c0_i32_1 = arith.constant 0 : i32
    return %c0_i32, %c0_i32_0 : i32, i32
  }
  func.func @transform_9(%arg0: i32) -> (i32, i32) {
    %c0_i32 = arith.constant 0 : i32
    %c0_i32_0 = arith.constant 0 : i32
    %c0_i32_1 = arith.constant 0 : i32
    return %c0_i32, %c0_i32_0 : i32, i32
  }
  func.func @transform_10(%arg0: i32) -> (i32, i32) {
    %c0_i32 = arith.constant 0 : i32
    %c0_i32_0 = arith.constant 0 : i32
    %c0_i32_1 = arith.constant 0 : i32
    return %c0_i32, %c0_i32_0 : i32, i32
  }
  func.func @transform_11(%arg0: i32) -> (i32, i32) {
    %c0_i32 = arith.constant 0 : i32
    %c0_i32_0 = arith.constant 0 : i32
    %c0_i32_1 = arith.constant 0 : i32
    return %c0_i32, %c0_i32_0 : i32, i32
  }
  func.func @transform_12(%arg0: i32) -> (i32, i32) {
    %c0_i32 = arith.constant 0 : i32
    %c0_i32_0 = arith.constant 0 : i32
    %c0_i32_1 = arith.constant 0 : i32
    return %c0_i32, %c0_i32_0 : i32, i32
  }
  func.func @transform_13(%arg0: i32) -> (i32, i32, i32) {
    %c0_i32 = arith.constant 0 : i32
    %c0_i32_0 = arith.constant 0 : i32
    %c0_i32_1 = arith.constant 0 : i32
    return %arg0, %c0_i32, %c0_i32_0 : i32, i32, i32
  }
}

</mosaic_0001>

<llo_original>
// kernel: tpu_custom_call.1
$region0: #{tpu_custom_call.1}
  #allocation0 [shape = 'u32[]', space=smem, size = 0x4, offset = 0x4, fixed_abs, tag = 'smem constant byte address 0x4 - core index']
  #allocation1 [shape = 'u32[144,128]{1,0:T(1,128)}', space=vmem, size = 0x12000, scoped, tag = 'internal scratch']
  #allocation2 [shape = 'bf16[8,32]{1,0:T(8,128)(2,1)}', space=vmem, size = 0x800, scoped, tag = 'scratch operand']
  %s0 = inlined_call_operand.vmem [shape: f32[2,8,32], index: 0, kind: input, shape index: {}]
  %s1 = inlined_call_operand.vmem [shape: f32[1,32], index: 1, kind: input, shape index: {}]
  %s2 = inlined_call_operand.vmem [shape: f32[1,32], index: 2, kind: input, shape index: {}]
  %s3 = inlined_call_operand.vmem [shape: bf16[32,96], index: 3, kind: input, shape index: {}]
  %s4 = inlined_call_operand.vmem [shape: f32[1,96], index: 4, kind: input, shape index: {}]
  %s5 = inlined_call_operand.vmem [shape: bf16[32,32], index: 5, kind: input, shape index: {}]
  %s6 = inlined_call_operand.vmem [shape: f32[1,32], index: 6, kind: input, shape index: {}]
  %s7 = inlined_call_operand.vmem [shape: f32[1,32], index: 7, kind: input, shape index: {}]
  %s8 = inlined_call_operand.vmem [shape: f32[1,32], index: 8, kind: input, shape index: {}]
  %s9 = inlined_call_operand.vmem [shape: bf16[32,128], index: 9, kind: input, shape index: {}]
  %s10 = inlined_call_operand.vmem [shape: f32[1,128], index: 10, kind: input, shape index: {}]
  %s11 = inlined_call_operand.vmem [shape: bf16[128,32], index: 11, kind: input, shape index: {}]
  %s12 = inlined_call_operand.vmem [shape: f32[1,32], index: 12, kind: input, shape index: {}]
  %s13 = inlined_call_operand.hbm [shape: f32[2,8,32], index: 13, kind: output, shape index: {}]
  %s14 = sld [smem:[#allocation0]]
  $region85: #{tpu_custom_call.1} parent=0
    _
  %s16 = ssub.s32 1, %s14
  %s17 = scalar_select 0, %s16, %s14
  $region1: #{tpu_custom_call.1} parent=0
    #allocation3 [shape = 'u8[8192]{0}', space=vmem, size = 0x2000, scoped, tag = 'output window, operand 0']
    #allocation4 [shape = 's32[2]{0}', space=sflag, size = 0x8, scoped, tag = 'scoped memory for tpu_custom_call.1']
    %18 = vsyncpa [#allocation4], 0
    %s19 = scalar_lea.sflag [#allocation4], 1
    %20 = vsyncpa %s19, 0
    loop: start=0, step=1, limit=4
    $region2: #{tpu_custom_call.1} parent=1 // loop_pre_header
      _
    $region3: #{tpu_custom_call.1} parent=1 // loop_header
      %s22 = sphi 0, %s26
      %p23 = scmp.ge.s32.totalorder %s22, 4
      %s32 = sphi 0, %s34
      %s35 = sphi 0, %s32
      %s36 = sphi 0, %s35
      %s52 = sphi 0, %s36
      %s56 = sphi 0, %s56
      %s58 = sphi 0, %s56
      %s59 = sphi 0, %s58
      %s73 = sphi 0, %s59
      %s77 = sphi 0, %s77
      %s79 = sphi 0, %s77
      %s80 = sphi 0, %s79
      %s94 = sphi 0, %s80
      %s98 = sphi 0, %s98
      %s100 = sphi 0, %s98
      %s101 = sphi 0, %s100
      %s115 = sphi 0, %s101
      %s119 = sphi 0, %s119
      %s121 = sphi 0, %s119
      %s122 = sphi 0, %s121
      %s136 = sphi 0, %s122
      %s140 = sphi 0, %s140
      %s142 = sphi 0, %s140
      %s143 = sphi 0, %s142
      %s157 = sphi 0, %s143
      %s161 = sphi 0, %s161
      %s163 = sphi 0, %s161
      %s164 = sphi 0, %s163
      %s178 = sphi 0, %s164
      %s182 = sphi 0, %s182
      %s184 = sphi 0, %s182
      %s185 = sphi 0, %s184
      %s199 = sphi 0, %s185
      %s203 = sphi 0, %s203
      %s205 = sphi 0, %s203
      %s206 = sphi 0, %s205
      %s220 = sphi 0, %s206
      %s224 = sphi 0, %s224
      %s226 = sphi 0, %s224
      %s227 = sphi 0, %s226
      %s241 = sphi 0, %s227
      %s245 = sphi 0, %s245
      %s247 = sphi 0, %s245
      %s248 = sphi 0, %s247
      %s262 = sphi 0, %s248
      %s266 = sphi 0, %s266
      %s268 = sphi 0, %s266
      %s269 = sphi 0, %s268
      %s283 = sphi 0, %s269
      %s287 = sphi 0, %s287
      %s289 = sphi 0, %s287
      %s290 = sphi 0, %s289
      %s304 = sphi 0, %s290
      %s310 = sphi 0, %s312
      %s313 = sphi 0, %s310
      %s314 = sphi 0, %s313
      %s330 = sphi 0, %s314
    $region4: #{tpu_custom_call.1} parent=1 // loop_header_branch
      %25 = sbr.rel (%p23) target = $region8
    $region5: #{tpu_custom_call.1} parent=1 // loop_body
      %s27 = ssub.s32 %s22, 1
      %s28 = ssub.s32 %s22, 2
      %s29 = sadd.s32 %s22, 1
      %s30 = ssub.s32 %s22, %s29
      %p31 = scmp.eq.s32.totalorder %s30, 0
      %s33 = sadd.s32 %s32, 1
      %s34 = scalar_select %p31, %s32, %s33
      %p37 = pneg %p31
      %p38 = scmp.eq.s32.totalorder %s22, 1
      %p39 = por %p37, %p38
      %p40 = scmp.ne.s32.totalorder %s32, %s35
      %p41 = scmp.eq.s32.totalorder %s22, 0
      %p42 = por %p40, %p41
      %p43 = scmp.ne.s32.totalorder %s32, %s35
      %p44 = scmp.eq.s32.totalorder %s27, 1
      %p45 = por %p43, %p44
      %p46 = scmp.ne.s32.totalorder %s35, %s36
      %p47 = scmp.eq.s32.totalorder %s27, 0
      %p48 = por %p46, %p47
      %p49 = scmp.ne.s32.totalorder %s35, %s36
      %p50 = scmp.eq.s32.totalorder %s28, 1
      %p51 = por %p49, %p50
      %p53 = scmp.ne.s32.totalorder %s36, %s52
      %p54 = scmp.eq.s32.totalorder %s28, 0
      %p55 = por %p53, %p54
      %s57 = sadd.s32 %s56, 1
      %p60 = scmp.eq.s32.totalorder %s22, 1
      %p61 = scmp.ne.s32.totalorder %s56, %s58
      %p62 = scmp.eq.s32.totalorder %s22, 0
      %p63 = por %p61, %p62
      %p64 = scmp.ne.s32.totalorder %s56, %s58
      %p65 = scmp.eq.s32.totalorder %s27, 1
      %p66 = por %p64, %p65
      %p67 = scmp.ne.s32.totalorder %s58, %s59
      %p68 = scmp.eq.s32.totalorder %s27, 0
      %p69 = por %p67, %p68
      %p70 = scmp.ne.s32.totalorder %s58, %s59
      %p71 = scmp.eq.s32.totalorder %s28, 1
      %p72 = por %p70, %p71
      %p74 = scmp.ne.s32.totalorder %s59, %s73
      %p75 = scmp.eq.s32.totalorder %s28, 0
      %p76 = por %p74, %p75
      %s78 = sadd.s32 %s77, 1
      %p81 = scmp.eq.s32.totalorder %s22, 1
      %p82 = scmp.ne.s32.totalorder %s77, %s79
      %p83 = scmp.eq.s32.totalorder %s22, 0
      %p84 = por %p82, %p83
      %p85 = scmp.ne.s32.totalorder %s77, %s79
      %p86 = scmp.eq.s32.totalorder %s27, 1
      %p87 = por %p85, %p86
      %p88 = scmp.ne.s32.totalorder %s79, %s80
      %p89 = scmp.eq.s32.totalorder %s27, 0
      %p90 = por %p88, %p89
      %p91 = scmp.ne.s32.totalorder %s79, %s80
      %p92 = scmp.eq.s32.totalorder %s28, 1
      %p93 = por %p91, %p92
      %p95 = scmp.ne.s32.totalorder %s80, %s94
      %p96 = scmp.eq.s32.totalorder %s28, 0
      %p97 = por %p95, %p96
      %s99 = sadd.s32 %s98, 1
      %p102 = scmp.eq.s32.totalorder %s22, 1
      %p103 = scmp.ne.s32.totalorder %s98, %s100
      %p104 = scmp.eq.s32.totalorder %s22, 0
      %p105 = por %p103, %p104
      %p106 = scmp.ne.s32.totalorder %s98, %s100
      %p107 = scmp.eq.s32.totalorder %s27, 1
      %p108 = por %p106, %p107
      %p109 = scmp.ne.s32.totalorder %s100, %s101
      %p110 = scmp.eq.s32.totalorder %s27, 0
      %p111 = por %p109, %p110
      %p112 = scmp.ne.s32.totalorder %s100, %s101
      %p113 = scmp.eq.s32.totalorder %s28, 1
      %p114 = por %p112, %p113
      %p116 = scmp.ne.s32.totalorder %s101, %s115
      %p117 = scmp.eq.s32.totalorder %s28, 0
      %p118 = por %p116, %p117
      %s120 = sadd.s32 %s119, 1
      %p123 = scmp.eq.s32.totalorder %s22, 1
      %p124 = scmp.ne.s32.totalorder %s119, %s121
      %p125 = scmp.eq.s32.totalorder %s22, 0
      %p126 = por %p124, %p125
      %p127 = scmp.ne.s32.totalorder %s119, %s121
      %p128 = scmp.eq.s32.totalorder %s27, 1
      %p129 = por %p127, %p128
      %p130 = scmp.ne.s32.totalorder %s121, %s122
      %p131 = scmp.eq.s32.totalorder %s27, 0
      %p132 = por %p130, %p131
      %p133 = scmp.ne.s32.totalorder %s121, %s122
      %p134 = scmp.eq.s32.totalorder %s28, 1
      %p135 = por %p133, %p134
      %p137 = scmp.ne.s32.totalorder %s122, %s136
      %p138 = scmp.eq.s32.totalorder %s28, 0
      %p139 = por %p137, %p138
      %s141 = sadd.s32 %s140, 1
      %p144 = scmp.eq.s32.totalorder %s22, 1
      %p145 = scmp.ne.s32.totalorder %s140, %s142
      %p146 = scmp.eq.s32.totalorder %s22, 0
      %p147 = por %p145, %p146
      %p148 = scmp.ne.s32.totalorder %s140, %s142
      %p149 = scmp.eq.s32.totalorder %s27, 1
      %p150 = por %p148, %p149
      %p151 = scmp.ne.s32.totalorder %s142, %s143
      %p152 = scmp.eq.s32.totalorder %s27, 0
      %p153 = por %p151, %p152
      %p154 = scmp.ne.s32.totalorder %s142, %s143
      %p155 = scmp.eq.s32.totalorder %s28, 1
      %p156 = por %p154, %p155
      %p158 = scmp.ne.s32.totalorder %s143, %s157
      %p159 = scmp.eq.s32.totalorder %s28, 0
      %p160 = por %p158, %p159
      %s162 = sadd.s32 %s161, 1
      %p165 = scmp.eq.s32.totalorder %s22, 1
      %p166 = scmp.ne.s32.totalorder %s161, %s163
      %p167 = scmp.eq.s32.totalorder %s22, 0
      %p168 = por %p166, %p167
      %p169 = scmp.ne.s32.totalorder %s161, %s163
      %p170 = scmp.eq.s32.totalorder %s27, 1
      %p171 = por %p169, %p170
      %p172 = scmp.ne.s32.totalorder %s163, %s164
      %p173 = scmp.eq.s32.totalorder %s27, 0
      %p174 = por %p172, %p173
      %p175 = scmp.ne.s32.totalorder %s163, %s164
      %p176 = scmp.eq.s32.totalorder %s28, 1
      %p177 = por %p175, %p176
      %p179 = scmp.ne.s32.totalorder %s164, %s178
      %p180 = scmp.eq.s32.totalorder %s28, 0
      %p181 = por %p179, %p180
      %s183 = sadd.s32 %s182, 1
      %p186 = scmp.eq.s32.totalorder %s22, 1
      %p187 = scmp.ne.s32.totalorder %s182, %s184
      %p188 = scmp.eq.s32.totalorder %s22, 0
      %p189 = por %p187, %p188
      %p190 = scmp.ne.s32.totalorder %s182, %s184
      %p191 = scmp.eq.s32.totalorder %s27, 1
      %p192 = por %p190, %p191
      %p193 = scmp.ne.s32.totalorder %s184, %s185
      %p194 = scmp.eq.s32.totalorder %s27, 0
      %p195 = por %p193, %p194
      %p196 = scmp.ne.s32.totalorder %s184, %s185
      %p197 = scmp.eq.s32.totalorder %s28, 1
      %p198 = por %p196, %p197
      %p200 = scmp.ne.s32.totalorder %s185, %s199
      %p201 = scmp.eq.s32.totalorder %s28, 0
      %p202 = por %p200, %p201
      %s204 = sadd.s32 %s203, 1
      %p207 = scmp.eq.s32.totalorder %s22, 1
      %p208 = scmp.ne.s32.totalorder %s203, %s205
      %p209 = scmp.eq.s32.totalorder %s22, 0
      %p210 = por %p208, %p209
      %p211 = scmp.ne.s32.totalorder %s203, %s205
      %p212 = scmp.eq.s32.totalorder %s27, 1
      %p213 = por %p211, %p212
      %p214 = scmp.ne.s32.totalorder %s205, %s206
      %p215 = scmp.eq.s32.totalorder %s27, 0
      %p216 = por %p214, %p215
      %p217 = scmp.ne.s32.totalorder %s205, %s206
      %p218 = scmp.eq.s32.totalorder %s28, 1
      %p219 = por %p217, %p218
      %p221 = scmp.ne.s32.totalorder %s206, %s220
      %p222 = scmp.eq.s32.totalorder %s28, 0
      %p223 = por %p221, %p222
      %s225 = sadd.s32 %s224, 1
      %p228 = scmp.eq.s32.totalorder %s22, 1
      %p229 = scmp.ne.s32.totalorder %s224, %s226
      %p230 = scmp.eq.s32.totalorder %s22, 0
      %p231 = por %p229, %p230
      %p232 = scmp.ne.s32.totalorder %s224, %s226
      %p233 = scmp.eq.s32.totalorder %s27, 1
      %p234 = por %p232, %p233
      %p235 = scmp.ne.s32.totalorder %s226, %s227
      %p236 = scmp.eq.s32.totalorder %s27, 0
      %p237 = por %p235, %p236
      %p238 = scmp.ne.s32.totalorder %s226, %s227
      %p239 = scmp.eq.s32.totalorder %s28, 1
      %p240 = por %p238, %p239
      %p242 = scmp.ne.s32.totalorder %s227, %s241
      %p243 = scmp.eq.s32.totalorder %s28, 0
      %p244 = por %p242, %p243
      %s246 = sadd.s32 %s245, 1
      %p249 = scmp.eq.s32.totalorder %s22, 1
      %p250 = scmp.ne.s32.totalorder %s245, %s247
      %p251 = scmp.eq.s32.totalorder %s22, 0
      %p252 = por %p250, %p251
      %p253 = scmp.ne.s32.totalorder %s245, %s247
      %p254 = scmp.eq.s32.totalorder %s27, 1
      %p255 = por %p253, %p254
      %p256 = scmp.ne.s32.totalorder %s247, %s248
      %p257 = scmp.eq.s32.totalorder %s27, 0
      %p258 = por %p256, %p257
      %p259 = scmp.ne.s32.totalorder %s247, %s248
      %p260 = scmp.eq.s32.totalorder %s28, 1
      %p261 = por %p259, %p260
      %p263 = scmp.ne.s32.totalorder %s248, %s262
      %p264 = scmp.eq.s32.totalorder %s28, 0
      %p265 = por %p263, %p264
      %s267 = sadd.s32 %s266, 1
      %p270 = scmp.eq.s32.totalorder %s22, 1
      %p271 = scmp.ne.s32.totalorder %s266, %s268
      %p272 = scmp.eq.s32.totalorder %s22, 0
      %p273 = por %p271, %p272
      %p274 = scmp.ne.s32.totalorder %s266, %s268
      %p275 = scmp.eq.s32.totalorder %s27, 1
      %p276 = por %p274, %p275
      %p277 = scmp.ne.s32.totalorder %s268, %s269
      %p278 = scmp.eq.s32.totalorder %s27, 0
      %p279 = por %p277, %p278
      %p280 = scmp.ne.s32.totalorder %s268, %s269
      %p281 = scmp.eq.s32.totalorder %s28, 1
      %p282 = por %p280, %p281
      %p284 = scmp.ne.s32.totalorder %s269, %s283
      %p285 = scmp.eq.s32.totalorder %s28, 0
      %p286 = por %p284, %p285
      %s288 = sadd.s32 %s287, 1
      %p291 = scmp.eq.s32.totalorder %s22, 1
      %p292 = scmp.ne.s32.totalorder %s287, %s289
      %p293 = scmp.eq.s32.totalorder %s22, 0
      %p294 = por %p292, %p293
      %p295 = scmp.ne.s32.totalorder %s287, %s289
      %p296 = scmp.eq.s32.totalorder %s27, 1
      %p297 = por %p295, %p296
      %p298 = scmp.ne.s32.totalorder %s289, %s290
      %p299 = scmp.eq.s32.totalorder %s27, 0
      %p300 = por %p298, %p299
      %p301 = scmp.ne.s32.totalorder %s289, %s290
      %p302 = scmp.eq.s32.totalorder %s28, 1
      %p303 = por %p301, %p302
      %p305 = scmp.ne.s32.totalorder %s290, %s304
      %p306 = scmp.eq.s32.totalorder %s28, 0
      %p307 = por %p305, %p306
      %s308 = ssub.s32 %s22, %s29
      %p309 = scmp.eq.s32.totalorder %s308, 0
      %s311 = sadd.s32 %s310, 1
      %s312 = scalar_select %p309, %s310, %s311
      %p315 = pneg %p309
      %p316 = scmp.eq.s32.totalorder %s22, 1
      %p317 = por %p315, %p316
      %p318 = scmp.ne.s32.totalorder %s310, %s313
      %p319 = scmp.eq.s32.totalorder %s22, 0
      %p320 = por %p318, %p319
      %p321 = scmp.ne.s32.totalorder %s310, %s313
      %p322 = scmp.eq.s32.totalorder %s27, 1
      %p323 = por %p321, %p322
      %p324 = scmp.ne.s32.totalorder %s313, %s314
      %p325 = scmp.eq.s32.totalorder %s27, 0
      %p326 = por %p324, %p325
      %p327 = scmp.ne.s32.totalorder %s313, %s314
      %p328 = scmp.eq.s32.totalorder %s28, 1
      %p329 = por %p327, %p328
      %p331 = scmp.ne.s32.totalorder %s314, %s330
      %p332 = scmp.eq.s32.totalorder %s28, 0
      %p333 = por %p331, %p332
      %p334 = scmp.le.s32.totalorder 1, %s22
      %p335 = scmp.lt.s32.totalorder %s22, 3
      %p336 = pnand %p334, %p335
      %p337 = pneg %p336
      // Predicated region
      $region9: #{tpu_custom_call.1} parent=5 // pred_check
        _
      $region10: #{tpu_custom_call.1} parent=5 // pred_check_branch
        %339 = sbr.rel (%p336) target = $region12
      $region11: #{tpu_custom_call.1} parent=5 // pred_region
        %s340 = ssub.s32 %s22, 1
        // Predicated region
        $region13: #{tpu_custom_call.1} parent=11 // pred_check
          %p341 = pneg %p69
        $region14: #{tpu_custom_call.1} parent=11 // pred_check_branch
          %343 = sbr.rel (%p341) target = $region16
        $region15: #{tpu_custom_call.1} parent=11 // pred_region
          _
        $region16: #{tpu_custom_call.1} parent=11 // pred_fallthru
          _
        // Predicated region
        $region17: #{tpu_custom_call.1} parent=11 // pred_check
          %p344 = pneg %p90
        $region18: #{tpu_custom_call.1} parent=11 // pred_check_branch
          %346 = sbr.rel (%p344) target = $region20
        $region19: #{tpu_custom_call.1} parent=11 // pred_region
          _
        $region20: #{tpu_custom_call.1} parent=11 // pred_fallthru
          _
        // Predicated region
        $region21: #{tpu_custom_call.1} parent=11 // pred_check
          %p347 = pneg %p111
        $region22: #{tpu_custom_call.1} parent=11 // pred_check_branch
          %349 = sbr.rel (%p347) target = $region24
        $region23: #{tpu_custom_call.1} parent=11 // pred_region
          _
        $region24: #{tpu_custom_call.1} parent=11 // pred_fallthru
          _
        // Predicated region
        $region25: #{tpu_custom_call.1} parent=11 // pred_check
          %p350 = pneg %p132
        $region26: #{tpu_custom_call.1} parent=11 // pred_check_branch
          %352 = sbr.rel (%p350) target = $region28
        $region27: #{tpu_custom_call.1} parent=11 // pred_region
          _
        $region28: #{tpu_custom_call.1} parent=11 // pred_fallthru
          _
        // Predicated region
        $region29: #{tpu_custom_call.1} parent=11 // pred_check
          %p353 = pneg %p153
        $region30: #{tpu_custom_call.1} parent=11 // pred_check_branch
          %355 = sbr.rel (%p353) target = $region32
        $region31: #{tpu_custom_call.1} parent=11 // pred_region
          _
        $region32: #{tpu_custom_call.1} parent=11 // pred_fallthru
          _
        // Predicated region
        $region33: #{tpu_custom_call.1} parent=11 // pred_check
          %p356 = pneg %p174
        $region34: #{tpu_custom_call.1} parent=11 // pred_check_branch
          %358 = sbr.rel (%p356) target = $region36
        $region35: #{tpu_custom_call.1} parent=11 // pred_region
          _
        $region36: #{tpu_custom_call.1} parent=11 // pred_fallthru
          _
        // Predicated region
        $region37: #{tpu_custom_call.1} parent=11 // pred_check
          %p359 = pneg %p195
        $region38: #{tpu_custom_call.1} parent=11 // pred_check_branch
          %361 = sbr.rel (%p359) target = $region40
        $region39: #{tpu_custom_call.1} parent=11 // pred_region
          _
        $region40: #{tpu_custom_call.1} parent=11 // pred_fallthru
          _
        // Predicated region
        $region41: #{tpu_custom_call.1} parent=11 // pred_check
          %p362 = pneg %p216
        $region42: #{tpu_custom_call.1} parent=11 // pred_check_branch
          %364 = sbr.rel (%p362) target = $region44
        $region43: #{tpu_custom_call.1} parent=11 // pred_region
          _
        $region44: #{tpu_custom_call.1} parent=11 // pred_fallthru
          _
        // Predicated region
        $region45: #{tpu_custom_call.1} parent=11 // pred_check
          %p365 = pneg %p237
        $region46: #{tpu_custom_call.1} parent=11 // pred_check_branch
          %367 = sbr.rel (%p365) target = $region48
        $region47: #{tpu_custom_call.1} parent=11 // pred_region
          _
        $region48: #{tpu_custom_call.1} parent=11 // pred_fallthru
          _
        // Predicated region
        $region49: #{tpu_custom_call.1} parent=11 // pred_check
          %p368 = pneg %p258
        $region50: #{tpu_custom_call.1} parent=11 // pred_check_branch
          %370 = sbr.rel (%p368) target = $region52
        $region51: #{tpu_custom_call.1} parent=11 // pred_region
          _
        $region52: #{tpu_custom_call.1} parent=11 // pred_fallthru
          _
        // Predicated region
        $region53: #{tpu_custom_call.1} parent=11 // pred_check
          %p371 = pneg %p279
        $region54: #{tpu_custom_call.1} parent=11 // pred_check_branch
          %373 = sbr.rel (%p371) target = $region56
        $region55: #{tpu_custom_call.1} parent=11 // pred_region
          _
        $region56: #{tpu_custom_call.1} parent=11 // pred_fallthru
          _
        // Predicated region
        $region57: #{tpu_custom_call.1} parent=11 // pred_check
          %p374 = pneg %p300
        $region58: #{tpu_custom_call.1} parent=11 // pred_check_branch
          %376 = sbr.rel (%p374) target = $region60
        $region59: #{tpu_custom_call.1} parent=11 // pred_region
          _
        $region60: #{tpu_custom_call.1} parent=11 // pred_fallthru
          _
      $region12: #{tpu_custom_call.1} parent=5 // pred_fallthru
        _
      %p377 = scmp.lt.s32.totalorder %s22, 2
      // Predicated region
      $region61: #{tpu_custom_call.1} parent=5 // pred_check
        %p378 = pneg %p377
      $region62: #{tpu_custom_call.1} parent=5 // pred_check_branch
        %380 = sbr.rel (%p378) target = $region64
      $region63: #{tpu_custom_call.1} parent=5 // pred_region
        // Predicated region
        $region65: #{tpu_custom_call.1} parent=63 // pred_check
          %p381 = pneg %p42
        $region66: #{tpu_custom_call.1} parent=63 // pred_check_branch
          %383 = sbr.rel (%p381) target = $region68
        $region67: #{tpu_custom_call.1} parent=63 // pred_region
          %p384 = scmp.lt.s32.totalorder %s22, 1
          %s385 = scalar_select %p384, %s22, 1
          %s386 = smul.addr %s385, 8
          %s387 = scalar_lea.vmem %s0, %s386
        $region68: #{tpu_custom_call.1} parent=63 // pred_fallthru
          _
      $region64: #{tpu_custom_call.1} parent=5 // pred_fallthru
        _
      %p388 = scmp.le.s32.totalorder 1, %s22
      %p389 = scmp.lt.s32.totalorder %s22, 3
      %p390 = pnand %p388, %p389
      %p391 = pneg %p390
      // Predicated region
      $region69: #{tpu_custom_call.1} parent=5 // pred_check
        _
      $region70: #{tpu_custom_call.1} parent=5 // pred_check_branch
        %393 = sbr.rel (%p390) target = $region72
      $region71: #{tpu_custom_call.1} parent=5 // pred_region
        %s394 = ssub.s32 %s22, 1
        %p395 = scmp.lt.s32.totalorder %s27, 1
        %s396 = scalar_select %p395, %s27, 1
        %s397 = smul.addr %s396, 8
        %s398 = scalar_lea.vmem %s0, %s397
        %p399 = pneg %p48
        %p400 = pneg %p45
        %p401 = pneg %p69
        %p402 = pneg %p66
        %p403 = pneg %p90
        %p404 = pneg %p87
        %p405 = pneg %p111
        %p406 = pneg %p108
        %p407 = pneg %p132
        %p408 = pneg %p129
        %p409 = pneg %p153
        %p410 = pneg %p150
        %p411 = pneg %p174
        %p412 = pneg %p171
        %p413 = pneg %p195
        %p414 = pneg %p192
        %p415 = pneg %p216
        %p416 = pneg %p213
        %p417 = pneg %p237
        %p418 = pneg %p234
        %p419 = pneg %p258
        %p420 = pneg %p255
        %p421 = pneg %p279
        %p422 = pneg %p276
        %p423 = pneg %p300
        %p424 = pneg %p297
        %p425 = pneg %p326
        %p426 = pneg %p323
        %s427 = sand.u32 %s313, 1
        %s428 = scalar_lea.sflag [#allocation4], %s427
        %s429 = sand.u32 %s313, 1
        %s430 = smul.addr %s429, 8
        %s431 = scalar_lea.vmem [#allocation3], %s430
        %p432 = scmp.lt.s32.totalorder %s27, 1
        %s433 = scalar_select %p432, %s27, 1
        %s434 = smul.addr %s433, 8
        %s435 = scalar_lea.vmem %s0, %s434
        %v437 = vld [vmem:[%s435] sm:$0xff]
        %v438 = vld [vmem:[%s1] sm:$0x1]
        %v439 = vld [vmem:[%s2] sm:$0x1]
        %vm440 = vcmask 261120
        %v441 = vsel %vm440, %v437, 0.0
        %442 = vadd.xlane.f32.xlu0 %v441
        %v443 = vpop.xlane.xlu0 %442
        %v444 = vrcp.pop 32.0
        %v445 = vmul.f32 %v443, %v444
        %v446 = vsub.f32 %v437, %v445
        %v447 = vmul.f32 %v446, %v446
        %v448 = vsel %vm440, %v447, 0.0
        %449 = vadd.xlane.f32.xlu0 %v448
        %v450 = vpop.xlane.xlu0 %449
        %v451 = vmul.f32 %v450, %v444
        %v452 = vadd.f32 %v451, 1e-05
        %v453 = vrsqrt.pop %v452
        %v454 = vmul.f32 %v446, %v453
        %v456 = vlaneseq
        %v457 = vshrl.u32 %v456, 7
        %v458 = vsub.s32 0, %v457
        %v459 = vrot.slane %v438, %v458
        %v461 = vmul.f32 %v454, %v459
        %v463 = vlaneseq
        %v464 = vshrl.u32 %v463, 7
        %v465 = vsub.s32 0, %v464
        %v466 = vrot.slane %v439, %v465
        %v468 = vadd.f32 %v461, %v466
        %v469 = vpack.c.bf16 %v468, %v468
        %v470 = vld [vmem:[%s3] sm:$0xf]
        %v471 = vld [vmem:[%s3 + $0x4] sm:$0xf]
        %v472 = vld [vmem:[%s3 + $0x8] sm:$0xf]
        %v473 = vld [vmem:[%s3 + $0xc] sm:$0xf]
        %v474 = vld [vmem:[%s4] sm:$0x1]
        %v476 = vlaneseq
        %v477 = vshrl.u32 %v476, 7
        %v478 = vsub.s32 0, %v477
        %v479 = vrot.slane %v474, %v478
        %v485 = vunpack.c.l.b16 %v470
        %v486 = vunpack.c.l.b16 %v471
        %v487 = vunpack.c.l.b16 %v472
        %v488 = vunpack.c.l.b16 %v473
        %v489 = vpack.c.b16 %v486, %v485
        %v490 = vpack.c.b16 %v488, %v487
        %v494 = vsel %vm440, %v469, 0
        %496 = vmatprep.subr.bf16.mxu0 0
        %497 = vmatpush1.bf16.msra.mxu0 %v489
        %498 = vmatprep.subr.bf16.mxu0 0
        %499 = vmatpush1.bf16.msra.mxu0 %v490
        %500 = vmatprep.subr.bf16.mxu0 0
        %501 = vmatpush1.bf16.msra.mxu0 0
        %502 = vmatprep.subr.bf16.mxu0 0
        %503 = vmatpush1.bf16.msra.mxu0 0
        %504 = vmatprep.subr.bf16.mxu0 0
        %505 = vmatpush1.bf16.msra.mxu0 0
        %506 = vmatprep.subr.bf16.mxu0 0
        %507 = vmatpush1.bf16.msra.mxu0 0
        %508 = vmatprep.subr.bf16.mxu0 0
        %509 = vmatpush1.bf16.msra.mxu0 0
        %510 = vmatprep.subr.bf16.mxu0 0
        %511 = vmatpush1.bf16.msra.mxu0 0
        %512 = vmatprep.subr.bf16.mxu0 0
        %513 = vmatpush1.bf16.msra.mxu0 0
        %514 = vmatprep.subr.bf16.mxu0 0
        %515 = vmatpush1.bf16.msra.mxu0 0
        %516 = vmatprep.subr.bf16.mxu0 0
        %517 = vmatpush1.bf16.msra.mxu0 0
        %518 = vmatprep.subr.bf16.mxu0 0
        %519 = vmatpush1.bf16.msra.mxu0 0
        %520 = vmatprep.subr.bf16.mxu0 0
        %521 = vmatpush1.bf16.msra.mxu0 0
        %522 = vmatprep.subr.bf16.mxu0 0
        %523 = vmatpush1.bf16.msra.mxu0 0
        %524 = vmatprep.subr.bf16.mxu0 0
        %525 = vmatpush1.bf16.msra.mxu0 0
        %526 = vmatprep.subr.bf16.mxu0 0
        %527 = vmatpush1.bf16.msra.mxu0 0
        %528 = vmatprep.mubr.bf16.mxu0 0
        %529 = vmatmul.mubr.bf16.gmra.mrb[0].mxu0 %v494
        %v530 = vpop.f32.mrb[0].mxu0
        %v531 = vadd.f32 %v479, %v530
        %v532 = vpop.f32.mrb[0].mxu0
        %v533 = vpop.f32.mrb[0].mxu0
        %v534 = vpop.f32.mrb[0].mxu0
        %535 = vdwg.mxu0
        %v536 = vpack.c.bf16 %v531, %v531
        %v537 = vlaneseq
        %v538 = vshrl.u32 %v537, 7
        %v539 = vlaneseq
        %v540 = vand.u32 %v539, 127
        %vm541 = vcmp.le.s32.totalorder %v540, %v538
        %543 = vrot.lane.b32.xlu0 %v536, 96
        %v544 = vpop.permute.xlu0 %543
        %vm545 = vcmask 64512
        %v547 = vsel %vm545, %v536, 0
        %v550 = vsel %vm545, %v544, 0
        %552 = vmatprep.subr.bf16.mxu0 0
        %553 = vmatpush1.bf16.xpose.msra.mxu0 %v550
        %554 = vmatprep.subr.bf16.mxu0 0
        %555 = vmatpush1.bf16.xpose.msra.mxu0 0
        %556 = vmatprep.subr.bf16.mxu0 0
        %557 = vmatpush1.bf16.xpose.msra.mxu0 0
        %558 = vmatprep.subr.bf16.mxu0 0
        %559 = vmatpush1.bf16.xpose.msra.mxu0 0
        %560 = vmatprep.subr.bf16.mxu0 0
        %561 = vmatpush1.bf16.xpose.msra.mxu0 0
        %562 = vmatprep.subr.bf16.mxu0 0
        %563 = vmatpush1.bf16.xpose.msra.mxu0 0
        %564 = vmatprep.subr.bf16.mxu0 0
        %565 = vmatpush1.bf16.xpose.msra.mxu0 0
        %566 = vmatprep.subr.bf16.mxu0 0
        %567 = vmatpush1.bf16.xpose.msra.mxu0 0
        %568 = vmatprep.subr.bf16.mxu0 0
        %569 = vmatpush1.bf16.xpose.msra.mxu0 0
        %570 = vmatprep.subr.bf16.mxu0 0
        %571 = vmatpush1.bf16.xpose.msra.mxu0 0
        %572 = vmatprep.subr.bf16.mxu0 0
        %573 = vmatpush1.bf16.xpose.msra.mxu0 0
        %574 = vmatprep.subr.bf16.mxu0 0
        %575 = vmatpush1.bf16.xpose.msra.mxu0 0
        %576 = vmatprep.subr.bf16.mxu0 0
        %577 = vmatpush1.bf16.xpose.msra.mxu0 0
        %578 = vmatprep.subr.bf16.mxu0 0
        %579 = vmatpush1.bf16.xpose.msra.mxu0 0
        %580 = vmatprep.subr.bf16.mxu0 0
        %581 = vmatpush1.bf16.xpose.msra.mxu0 0
        %582 = vmatprep.subr.bf16.mxu0 0
        %583 = vmatpush1.bf16.xpose.msra.mxu0 0
        %584 = vmatprep.mubr.bf16.mxu0 0
        %585 = vmatmul.mubr.bf16.gmra.mrb[0].mxu0 %v547
        %v586 = vpop.f32.mrb[0].mxu0
        %v587 = vadd.f32 0.0, %v586
        %v588 = vpop.f32.mrb[0].mxu0
        %v589 = vpop.f32.mrb[0].mxu0
        %v590 = vpop.f32.mrb[0].mxu0
        %591 = vdwg.mxu0
        %v592 = vsel %vm541, %v587, -inf
        %v593 = vsel %vm545, %v592, -inf
        %594 = vmax.xlane.f32.xlu0 %v593
        %v595 = vpop.xlane.xlu0 %594
        %v596 = vsub.f32 %v592, %v595
        %v597 = vmul.f32 %v596, 1.442695
        %v598 = vpow.pop %v597
        %v599 = vsel %vm545, %v598, 0.0
        %600 = vadd.xlane.f32.xlu0 %v599
        %v601 = vpop.xlane.xlu0 %600
        %v602 = vrcp.pop %v601
        %v603 = vmul.f32 %v598, %v602
        %v604 = vpack.c.bf16 %v603, %v603
        %605 = vrot.lane.b32.xlu0 %v536, 64
        %v606 = vpop.permute.xlu0 %605
        %v608 = vsel %vm545, %v604, 0
        %vm610 = vcmask 1043456
        %v612 = vsel %vm610, %v606, 0
        %614 = vmatprep.subr.bf16.mxu0 0
        %615 = vmatpush1.bf16.msra.mxu0 %v612
        %616 = vmatprep.subr.bf16.mxu0 0
        %617 = vmatpush1.bf16.msra.mxu0 0
        %618 = vmatprep.subr.bf16.mxu0 0
        %619 = vmatpush1.bf16.msra.mxu0 0
        %620 = vmatprep.subr.bf16.mxu0 0
        %621 = vmatpush1.bf16.msra.mxu0 0
        %622 = vmatprep.subr.bf16.mxu0 0
        %623 = vmatpush1.bf16.msra.mxu0 0
        %624 = vmatprep.subr.bf16.mxu0 0
        %625 = vmatpush1.bf16.msra.mxu0 0
        %626 = vmatprep.subr.bf16.mxu0 0
        %627 = vmatpush1.bf16.msra.mxu0 0
        %628 = vmatprep.subr.bf16.mxu0 0
        %629 = vmatpush1.bf16.msra.mxu0 0
        %630 = vmatprep.subr.bf16.mxu0 0
        %631 = vmatpush1.bf16.msra.mxu0 0
        %632 = vmatprep.subr.bf16.mxu0 0
        %633 = vmatpush1.bf16.msra.mxu0 0
        %634 = vmatprep.subr.bf16.mxu0 0
        %635 = vmatpush1.bf16.msra.mxu0 0
        %636 = vmatprep.subr.bf16.mxu0 0
        %637 = vmatpush1.bf16.msra.mxu0 0
        %638 = vmatprep.subr.bf16.mxu0 0
        %639 = vmatpush1.bf16.msra.mxu0 0
        %640 = vmatprep.subr.bf16.mxu0 0
        %641 = vmatpush1.bf16.msra.mxu0 0
        %642 = vmatprep.subr.bf16.mxu0 0
        %643 = vmatpush1.bf16.msra.mxu0 0
        %644 = vmatprep.subr.bf16.mxu0 0
        %645 = vmatpush1.bf16.msra.mxu0 0
        %646 = vmatprep.mubr.bf16.mxu0 0
        %647 = vmatmul.mubr.bf16.gmra.mrb[0].mxu0 %v608
        %v648 = vpop.f32.mrb[0].mxu0
        %v649 = vadd.f32 0.0, %v648
        %v650 = vpop.f32.mrb[0].mxu0
        %v651 = vpop.f32.mrb[0].mxu0
        %v652 = vpop.f32.mrb[0].mxu0
        %653 = vdwg.mxu0
        %v654 = vpack.c.bf16 %v649, %v649
        %vm655 = vcmask 60416
        %656 = vst.msk [vmem:[#allocation2] sm:$0xf] %vm655, %v654
        %657 = vrot.lane.b32.xlu0 %v536, 120
        %v658 = vpop.permute.xlu0 %657
        %659 = vrot.lane.b32.xlu0 %v536, 88
        %v660 = vpop.permute.xlu0 %659
        %v662 = vsel %vm545, %v658, 0
        %v665 = vsel %vm545, %v660, 0
        %667 = vmatprep.subr.bf16.mxu0 0
        %668 = vmatpush1.bf16.xpose.msra.mxu0 %v665
        %669 = vmatprep.subr.bf16.mxu0 0
        %670 = vmatpush1.bf16.xpose.msra.mxu0 0
        %671 = vmatprep.subr.bf16.mxu0 0
        %672 = vmatpush1.bf16.xpose.msra.mxu0 0
        %673 = vmatprep.subr.bf16.mxu0 0
        %674 = vmatpush1.bf16.xpose.msra.mxu0 0
        %675 = vmatprep.subr.bf16.mxu0 0
        %676 = vmatpush1.bf16.xpose.msra.mxu0 0
        %677 = vmatprep.subr.bf16.mxu0 0
        %678 = vmatpush1.bf16.xpose.msra.mxu0 0
        %679 = vmatprep.subr.bf16.mxu0 0
        %680 = vmatpush1.bf16.xpose.msra.mxu0 0
        %681 = vmatprep.subr.bf16.mxu0 0
        %682 = vmatpush1.bf16.xpose.msra.mxu0 0
        %683 = vmatprep.subr.bf16.mxu0 0
        %684 = vmatpush1.bf16.xpose.msra.mxu0 0
        %685 = vmatprep.subr.bf16.mxu0 0
        %686 = vmatpush1.bf16.xpose.msra.mxu0 0
        %687 = vmatprep.subr.bf16.mxu0 0
        %688 = vmatpush1.bf16.xpose.msra.mxu0 0
        %689 = vmatprep.subr.bf16.mxu0 0
        %690 = vmatpush1.bf16.xpose.msra.mxu0 0
        %691 = vmatprep.subr.bf16.mxu0 0
        %692 = vmatpush1.bf16.xpose.msra.mxu0 0
        %693 = vmatprep.subr.bf16.mxu0 0
        %694 = vmatpush1.bf16.xpose.msra.mxu0 0
        %695 = vmatprep.subr.bf16.mxu0 0
        %696 = vmatpush1.bf16.xpose.msra.mxu0 0
        %697 = vmatprep.subr.bf16.mxu0 0
        %698 = vmatpush1.bf16.xpose.msra.mxu0 0
        %699 = vmatprep.mubr.bf16.mxu0 0
        %700 = vmatmul.mubr.bf16.gmra.mrb[0].mxu0 %v662
        %v701 = vpop.f32.mrb[0].mxu0
        %v702 = vadd.f32 0.0, %v701
        %v703 = vpop.f32.mrb[0].mxu0
        %v704 = vpop.f32.mrb[0].mxu0
        %v705 = vpop.f32.mrb[0].mxu0
        %706 = vdwg.mxu0
        %v707 = vsel %vm541, %v702, -inf
        %v708 = vsel %vm545, %v707, -inf
        %709 = vmax.xlane.f32.xlu0 %v708
        %v710 = vpop.xlane.xlu0 %709
        %v711 = vsub.f32 %v707, %v710
        %v712 = vmul.f32 %v711, 1.442695
        %v713 = vpow.pop %v712
        %v714 = vsel %vm545, %v713, 0.0
        %715 = vadd.xlane.f32.xlu0 %v714
        %v716 = vpop.xlane.xlu0 %715
        %v717 = vrcp.pop %v716
        %v718 = vmul.f32 %v713, %v717
        %v719 = vpack.c.bf16 %v718, %v718
        %720 = vrot.lane.b32.xlu0 %v536, 56
        %v721 = vpop.permute.xlu0 %720
        %v723 = vsel %vm545, %v719, 0
        %v726 = vsel %vm610, %v721, 0
        %728 = vmatprep.subr.bf16.mxu0 0
        %729 = vmatpush1.bf16.msra.mxu0 %v726
        %730 = vmatprep.subr.bf16.mxu0 0
        %731 = vmatpush1.bf16.msra.mxu0 0
        %732 = vmatprep.subr.bf16.mxu0 0
        %733 = vmatpush1.bf16.msra.mxu0 0
        %734 = vmatprep.subr.bf16.mxu0 0
        %735 = vmatpush1.bf16.msra.mxu0 0
        %736 = vmatprep.subr.bf16.mxu0 0
        %737 = vmatpush1.bf16.msra.mxu0 0
        %738 = vmatprep.subr.bf16.mxu0 0
        %739 = vmatpush1.bf16.msra.mxu0 0
        %740 = vmatprep.subr.bf16.mxu0 0
        %741 = vmatpush1.bf16.msra.mxu0 0
        %742 = vmatprep.subr.bf16.mxu0 0
        %743 = vmatpush1.bf16.msra.mxu0 0
        %744 = vmatprep.subr.bf16.mxu0 0
        %745 = vmatpush1.bf16.msra.mxu0 0
        %746 = vmatprep.subr.bf16.mxu0 0
        %747 = vmatpush1.bf16.msra.mxu0 0
        %748 = vmatprep.subr.bf16.mxu0 0
        %749 = vmatpush1.bf16.msra.mxu0 0
        %750 = vmatprep.subr.bf16.mxu0 0
        %751 = vmatpush1.bf16.msra.mxu0 0
        %752 = vmatprep.subr.bf16.mxu0 0
        %753 = vmatpush1.bf16.msra.mxu0 0
        %754 = vmatprep.subr.bf16.mxu0 0
        %755 = vmatpush1.bf16.msra.mxu0 0
        %756 = vmatprep.subr.bf16.mxu0 0
        %757 = vmatpush1.bf16.msra.mxu0 0
        %758 = vmatprep.subr.bf16.mxu0 0
        %759 = vmatpush1.bf16.msra.mxu0 0
        %760 = vmatprep.mubr.bf16.mxu0 0
        %761 = vmatmul.mubr.bf16.gmra.mrb[0].mxu0 %v723
        %v762 = vpop.f32.mrb[0].mxu0
        %v763 = vadd.f32 0.0, %v762
        %v764 = vpop.f32.mrb[0].mxu0
        %v765 = vpop.f32.mrb[0].mxu0
        %v766 = vpop.f32.mrb[0].mxu0
        %767 = vdwg.mxu0
        %v768 = vpack.c.bf16 %v763, %v763
        %v770 = vunpack.c.l.b16 %v768
        %v771 = vpack.c.b16 %v770, %v770
        %772 = vrot.lane.b32.xlu0 %v771, 8
        %v773 = vpop.permute.xlu0 %772
        %vm775 = vcmask 126016
        %776 = vst.msk [vmem:[#allocation2] sm:$0xf] %vm775, %v773
        %777 = vrot.lane.b32.xlu0 %v536, 112
        %v778 = vpop.permute.xlu0 %777
        %779 = vrot.lane.b32.xlu0 %v536, 80
        %v780 = vpop.permute.xlu0 %779
        %v782 = vsel %vm545, %v778, 0
        %v785 = vsel %vm545, %v780, 0
        %787 = vmatprep.subr.bf16.mxu0 0
        %788 = vmatpush1.bf16.xpose.msra.mxu0 %v785
        %789 = vmatprep.subr.bf16.mxu0 0
        %790 = vmatpush1.bf16.xpose.msra.mxu0 0
        %791 = vmatprep.subr.bf16.mxu0 0
        %792 = vmatpush1.bf16.xpose.msra.mxu0 0
        %793 = vmatprep.subr.bf16.mxu0 0
        %794 = vmatpush1.bf16.xpose.msra.mxu0 0
        %795 = vmatprep.subr.bf16.mxu0 0
        %796 = vmatpush1.bf16.xpose.msra.mxu0 0
        %797 = vmatprep.subr.bf16.mxu0 0
        %798 = vmatpush1.bf16.xpose.msra.mxu0 0
        %799 = vmatprep.subr.bf16.mxu0 0
        %800 = vmatpush1.bf16.xpose.msra.mxu0 0
        %801 = vmatprep.subr.bf16.mxu0 0
        %802 = vmatpush1.bf16.xpose.msra.mxu0 0
        %803 = vmatprep.subr.bf16.mxu0 0
        %804 = vmatpush1.bf16.xpose.msra.mxu0 0
        %805 = vmatprep.subr.bf16.mxu0 0
        %806 = vmatpush1.bf16.xpose.msra.mxu0 0
        %807 = vmatprep.subr.bf16.mxu0 0
        %808 = vmatpush1.bf16.xpose.msra.mxu0 0
        %809 = vmatprep.subr.bf16.mxu0 0
        %810 = vmatpush1.bf16.xpose.msra.mxu0 0
        %811 = vmatprep.subr.bf16.mxu0 0
        %812 = vmatpush1.bf16.xpose.msra.mxu0 0
        %813 = vmatprep.subr.bf16.mxu0 0
        %814 = vmatpush1.bf16.xpose.msra.mxu0 0
        %815 = vmatprep.subr.bf16.mxu0 0
        %816 = vmatpush1.bf16.xpose.msra.mxu0 0
        %817 = vmatprep.subr.bf16.mxu0 0
        %818 = vmatpush1.bf16.xpose.msra.mxu0 0
        %819 = vmatprep.mubr.bf16.mxu0 0
        %820 = vmatmul.mubr.bf16.gmra.mrb[0].mxu0 %v782
        %v821 = vpop.f32.mrb[0].mxu0
        %v822 = vadd.f32 0.0, %v821
        %v823 = vpop.f32.mrb[0].mxu0
        %v824 = vpop.f32.mrb[0].mxu0
        %v825 = vpop.f32.mrb[0].mxu0
        %826 = vdwg.mxu0
        %v827 = vsel %vm541, %v822, -inf
        %v828 = vsel %vm545, %v827, -inf
        %829 = vmax.xlane.f32.xlu0 %v828
        %v830 = vpop.xlane.xlu0 %829
        %v831 = vsub.f32 %v827, %v830
        %v832 = vmul.f32 %v831, 1.442695
        %v833 = vpow.pop %v832
        %v834 = vsel %vm545, %v833, 0.0
        %835 = vadd.xlane.f32.xlu0 %v834
        %v836 = vpop.xlane.xlu0 %835
        %v837 = vrcp.pop %v836
        %v838 = vmul.f32 %v833, %v837
        %v839 = vpack.c.bf16 %v838, %v838
        %840 = vrot.lane.b32.xlu0 %v536, 48
        %v841 = vpop.permute.xlu0 %840
        %v843 = vsel %vm545, %v839, 0
        %v846 = vsel %vm610, %v841, 0
        %848 = vmatprep.subr.bf16.mxu0 0
        %849 = vmatpush1.bf16.msra.mxu0 %v846
        %850 = vmatprep.subr.bf16.mxu0 0
        %851 = vmatpush1.bf16.msra.mxu0 0
        %852 = vmatprep.subr.bf16.mxu0 0
        %853 = vmatpush1.bf16.msra.mxu0 0
        %854 = vmatprep.subr.bf16.mxu0 0
        %855 = vmatpush1.bf16.msra.mxu0 0
        %856 = vmatprep.subr.bf16.mxu0 0
        %857 = vmatpush1.bf16.msra.mxu0 0
        %858 = vmatprep.subr.bf16.mxu0 0
        %859 = vmatpush1.bf16.msra.mxu0 0
        %860 = vmatprep.subr.bf16.mxu0 0
        %861 = vmatpush1.bf16.msra.mxu0 0
        %862 = vmatprep.subr.bf16.mxu0 0
        %863 = vmatpush1.bf16.msra.mxu0 0
        %864 = vmatprep.subr.bf16.mxu0 0
        %865 = vmatpush1.bf16.msra.mxu0 0
        %866 = vmatprep.subr.bf16.mxu0 0
        %867 = vmatpush1.bf16.msra.mxu0 0
        %868 = vmatprep.subr.bf16.mxu0 0
        %869 = vmatpush1.bf16.msra.mxu0 0
        %870 = vmatprep.subr.bf16.mxu0 0
        %871 = vmatpush1.bf16.msra.mxu0 0
        %872 = vmatprep.subr.bf16.mxu0 0
        %873 = vmatpush1.bf16.msra.mxu0 0
        %874 = vmatprep.subr.bf16.mxu0 0
        %875 = vmatpush1.bf16.msra.mxu0 0
        %876 = vmatprep.subr.bf16.mxu0 0
        %877 = vmatpush1.bf16.msra.mxu0 0
        %878 = vmatprep.subr.bf16.mxu0 0
        %879 = vmatpush1.bf16.msra.mxu0 0
        %880 = vmatprep.mubr.bf16.mxu0 0
        %881 = vmatmul.mubr.bf16.gmra.mrb[0].mxu0 %v843
        %v882 = vpop.f32.mrb[0].mxu0
        %v883 = vadd.f32 0.0, %v882
        %v884 = vpop.f32.mrb[0].mxu0
        %v885 = vpop.f32.mrb[0].mxu0
        %v886 = vpop.f32.mrb[0].mxu0
        %887 = vdwg.mxu0
        %v888 = vpack.c.bf16 %v883, %v883
        %v890 = vunpack.c.l.b16 %v888
        %v891 = vpack.c.b16 %v890, %v890
        %892 = vrot.lane.b32.xlu0 %v891, 16
        %v893 = vpop.permute.xlu0 %892
        %vm895 = vcmask 191616
        %896 = vst.msk [vmem:[#allocation2] sm:$0xf] %vm895, %v893
        %897 = vrot.lane.b32.xlu0 %v536, 104
        %v898 = vpop.permute.xlu0 %897
        %899 = vrot.lane.b32.xlu0 %v536, 72
        %v900 = vpop.permute.xlu0 %899
        %v902 = vsel %vm545, %v898, 0
        %v905 = vsel %vm545, %v900, 0
        %907 = vmatprep.subr.bf16.mxu0 0
        %908 = vmatpush1.bf16.xpose.msra.mxu0 %v905
        %909 = vmatprep.subr.bf16.mxu0 0
        %910 = vmatpush1.bf16.xpose.msra.mxu0 0
        %911 = vmatprep.subr.bf16.mxu0 0
        %912 = vmatpush1.bf16.xpose.msra.mxu0 0
        %913 = vmatprep.subr.bf16.mxu0 0
        %914 = vmatpush1.bf16.xpose.msra.mxu0 0
        %915 = vmatprep.subr.bf16.mxu0 0
        %916 = vmatpush1.bf16.xpose.msra.mxu0 0
        %917 = vmatprep.subr.bf16.mxu0 0
        %918 = vmatpush1.bf16.xpose.msra.mxu0 0
        %919 = vmatprep.subr.bf16.mxu0 0
        %920 = vmatpush1.bf16.xpose.msra.mxu0 0
        %921 = vmatprep.subr.bf16.mxu0 0
        %922 = vmatpush1.bf16.xpose.msra.mxu0 0
        %923 = vmatprep.subr.bf16.mxu0 0
        %924 = vmatpush1.bf16.xpose.msra.mxu0 0
        %925 = vmatprep.subr.bf16.mxu0 0
        %926 = vmatpush1.bf16.xpose.msra.mxu0 0
        %927 = vmatprep.subr.bf16.mxu0 0
        %928 = vmatpush1.bf16.xpose.msra.mxu0 0
        %929 = vmatprep.subr.bf16.mxu0 0
        %930 = vmatpush1.bf16.xpose.msra.mxu0 0
        %931 = vmatprep.subr.bf16.mxu0 0
        %932 = vmatpush1.bf16.xpose.msra.mxu0 0
        %933 = vmatprep.subr.bf16.mxu0 0
        %934 = vmatpush1.bf16.xpose.msra.mxu0 0
        %935 = vmatprep.subr.bf16.mxu0 0
        %936 = vmatpush1.bf16.xpose.msra.mxu0 0
        %937 = vmatprep.subr.bf16.mxu0 0
        %938 = vmatpush1.bf16.xpose.msra.mxu0 0
        %939 = vmatprep.mubr.bf16.mxu0 0
        %940 = vmatmul.mubr.bf16.gmra.mrb[0].mxu0 %v902
        %v941 = vpop.f32.mrb[0].mxu0
        %v942 = vadd.f32 0.0, %v941
        %v943 = vpop.f32.mrb[0].mxu0
        %v944 = vpop.f32.mrb[0].mxu0
        %v945 = vpop.f32.mrb[0].mxu0
        %946 = vdwg.mxu0
        %v947 = vsel %vm541, %v942, -inf
        %v948 = vsel %vm545, %v947, -inf
        %949 = vmax.xlane.f32.xlu0 %v948
        %v950 = vpop.xlane.xlu0 %949
        %v951 = vsub.f32 %v947, %v950
        %v952 = vmul.f32 %v951, 1.442695
        %v953 = vpow.pop %v952
        %v954 = vsel %vm545, %v953, 0.0
        %955 = vadd.xlane.f32.xlu0 %v954
        %v956 = vpop.xlane.xlu0 %955
        %v957 = vrcp.pop %v956
        %v958 = vmul.f32 %v953, %v957
        %v959 = vpack.c.bf16 %v958, %v958
        %960 = vrot.lane.b32.xlu0 %v536, 40
        %v961 = vpop.permute.xlu0 %960
        %v963 = vsel %vm545, %v959, 0
        %v966 = vsel %vm610, %v961, 0
        %968 = vmatprep.subr.bf16.mxu0 0
        %969 = vmatpush1.bf16.msra.mxu0 %v966
        %970 = vmatprep.subr.bf16.mxu0 0
        %971 = vmatpush1.bf16.msra.mxu0 0
        %972 = vmatprep.subr.bf16.mxu0 0
        %973 = vmatpush1.bf16.msra.mxu0 0
        %974 = vmatprep.subr.bf16.mxu0 0
        %975 = vmatpush1.bf16.msra.mxu0 0
        %976 = vmatprep.subr.bf16.mxu0 0
        %977 = vmatpush1.bf16.msra.mxu0 0
        %978 = vmatprep.subr.bf16.mxu0 0
        %979 = vmatpush1.bf16.msra.mxu0 0
        %980 = vmatprep.subr.bf16.mxu0 0
        %981 = vmatpush1.bf16.msra.mxu0 0
        %982 = vmatprep.subr.bf16.mxu0 0
        %983 = vmatpush1.bf16.msra.mxu0 0
        %984 = vmatprep.subr.bf16.mxu0 0
        %985 = vmatpush1.bf16.msra.mxu0 0
        %986 = vmatprep.subr.bf16.mxu0 0
        %987 = vmatpush1.bf16.msra.mxu0 0
        %988 = vmatprep.subr.bf16.mxu0 0
        %989 = vmatpush1.bf16.msra.mxu0 0
        %990 = vmatprep.subr.bf16.mxu0 0
        %991 = vmatpush1.bf16.msra.mxu0 0
        %992 = vmatprep.subr.bf16.mxu0 0
        %993 = vmatpush1.bf16.msra.mxu0 0
        %994 = vmatprep.subr.bf16.mxu0 0
        %995 = vmatpush1.bf16.msra.mxu0 0
        %996 = vmatprep.subr.bf16.mxu0 0
        %997 = vmatpush1.bf16.msra.mxu0 0
        %998 = vmatprep.subr.bf16.mxu0 0
        %999 = vmatpush1.bf16.msra.mxu0 0
        %1000 = vmatprep.mubr.bf16.mxu0 0
        %1001 = vmatmul.mubr.bf16.gmra.mrb[0].mxu0 %v963
        %v1002 = vpop.f32.mrb[0].mxu0
        %v1003 = vadd.f32 0.0, %v1002
        %v1004 = vpop.f32.mrb[0].mxu0
        %v1005 = vpop.f32.mrb[0].mxu0
        %v1006 = vpop.f32.mrb[0].mxu0
        %1007 = vdwg.mxu0
        %v1008 = vpack.c.bf16 %v1003, %v1003
        %v1010 = vunpack.c.l.b16 %v1008
        %v1011 = vpack.c.b16 %v1010, %v1010
        %1012 = vrot.lane.b32.xlu0 %v1011, 24
        %v1013 = vpop.permute.xlu0 %1012
        %vm1015 = vcmask 257216
        %1016 = vst.msk [vmem:[#allocation2] sm:$0xf] %vm1015, %v1013
        %v1017 = vld [vmem:[#allocation2] sm:$0xf]
        %v1018 = vld [vmem:[%s5] sm:$0xf]
        %v1019 = vld [vmem:[%s5 + $0x4] sm:$0xf]
        %v1020 = vld [vmem:[%s5 + $0x8] sm:$0xf]
        %v1021 = vld [vmem:[%s5 + $0xc] sm:$0xf]
        %v1022 = vld [vmem:[%s6] sm:$0x1]
        %v1024 = vlaneseq
        %v1025 = vshrl.u32 %v1024, 7
        %v1026 = vsub.s32 0, %v1025
        %v1027 = vrot.slane %v1022, %v1026
        %v1033 = vunpack.c.l.b16 %v1018
        %v1034 = vunpack.c.l.b16 %v1019
        %v1035 = vunpack.c.l.b16 %v1020
        %v1036 = vunpack.c.l.b16 %v1021
        %v1037 = vpack.c.b16 %v1034, %v1033
        %v1038 = vpack.c.b16 %v1036, %v1035
        %v1042 = vsel %vm440, %v1017, 0
        %1044 = vmatprep.subr.bf16.mxu0 0
        %1045 = vmatpush1.bf16.msra.mxu0 %v1037
        %1046 = vmatprep.subr.bf16.mxu0 0
        %1047 = vmatpush1.bf16.msra.mxu0 %v1038
        %1048 = vmatprep.subr.bf16.mxu0 0
        %1049 = vmatpush1.bf16.msra.mxu0 0
        %1050 = vmatprep.subr.bf16.mxu0 0
        %1051 = vmatpush1.bf16.msra.mxu0 0
        %1052 = vmatprep.subr.bf16.mxu0 0
        %1053 = vmatpush1.bf16.msra.mxu0 0
        %1054 = vmatprep.subr.bf16.mxu0 0
        %1055 = vmatpush1.bf16.msra.mxu0 0
        %1056 = vmatprep.subr.bf16.mxu0 0
        %1057 = vmatpush1.bf16.msra.mxu0 0
        %1058 = vmatprep.subr.bf16.mxu0 0
        %1059 = vmatpush1.bf16.msra.mxu0 0
        %1060 = vmatprep.subr.bf16.mxu0 0
        %1061 = vmatpush1.bf16.msra.mxu0 0
        %1062 = vmatprep.subr.bf16.mxu0 0
        %1063 = vmatpush1.bf16.msra.mxu0 0
        %1064 = vmatprep.subr.bf16.mxu0 0
        %1065 = vmatpush1.bf16.msra.mxu0 0
        %1066 = vmatprep.subr.bf16.mxu0 0
        %1067 = vmatpush1.bf16.msra.mxu0 0
        %1068 = vmatprep.subr.bf16.mxu0 0
        %1069 = vmatpush1.bf16.msra.mxu0 0
        %1070 = vmatprep.subr.bf16.mxu0 0
        %1071 = vmatpush1.bf16.msra.mxu0 0
        %1072 = vmatprep.subr.bf16.mxu0 0
        %1073 = vmatpush1.bf16.msra.mxu0 0
        %1074 = vmatprep.subr.bf16.mxu0 0
        %1075 = vmatpush1.bf16.msra.mxu0 0
        %1076 = vmatprep.mubr.bf16.mxu0 0
        %1077 = vmatmul.mubr.bf16.gmra.mrb[0].mxu0 %v1042
        %v1078 = vpop.f32.mrb[0].mxu0
        %v1079 = vadd.f32 %v1027, %v1078
        %v1080 = vpop.f32.mrb[0].mxu0
        %v1081 = vpop.f32.mrb[0].mxu0
        %v1082 = vpop.f32.mrb[0].mxu0
        %1083 = vdwg.mxu0
        %v1084 = vadd.f32 %v437, %v1079
        %v1085 = vld [vmem:[%s7] sm:$0x1]
        %v1086 = vld [vmem:[%s8] sm:$0x1]
        %v1087 = vsel %vm440, %v1084, 0.0
        %1088 = vadd.xlane.f32.xlu0 %v1087
        %v1089 = vpop.xlane.xlu0 %1088
        %v1090 = vmul.f32 %v1089, %v444
        %v1091 = vsub.f32 %v1084, %v1090
        %v1092 = vmul.f32 %v1091, %v1091
        %v1093 = vsel %vm440, %v1092, 0.0
        %1094 = vadd.xlane.f32.xlu0 %v1093
        %v1095 = vpop.xlane.xlu0 %1094
        %v1096 = vmul.f32 %v1095, %v444
        %v1097 = vadd.f32 %v1096, 1e-05
        %v1098 = vrsqrt.pop %v1097
        %v1099 = vmul.f32 %v1091, %v1098
        %v1101 = vlaneseq
        %v1102 = vshrl.u32 %v1101, 7
        %v1103 = vsub.s32 0, %v1102
        %v1104 = vrot.slane %v1085, %v1103
        %v1106 = vmul.f32 %v1099, %v1104
        %v1108 = vlaneseq
        %v1109 = vshrl.u32 %v1108, 7
        %v1110 = vsub.s32 0, %v1109
        %v1111 = vrot.slane %v1086, %v1110
        %v1113 = vadd.f32 %v1106, %v1111
        %v1114 = vpack.c.bf16 %v1113, %v1113
        %v1115 = vld [vmem:[%s9] sm:$0xf]
        %v1116 = vld [vmem:[%s9 + $0x4] sm:$0xf]
        %v1117 = vld [vmem:[%s9 + $0x8] sm:$0xf]
        %v1118 = vld [vmem:[%s9 + $0xc] sm:$0xf]
        %v1119 = vld [vmem:[%s10] sm:$0x1]
        %v1121 = vlaneseq
        %v1122 = vshrl.u32 %v1121, 7
        %v1123 = vsub.s32 0, %v1122
        %v1124 = vrot.slane %v1119, %v1123
        %v1130 = vunpack.c.l.b16 %v1115
        %v1131 = vunpack.c.l.b16 %v1116
        %v1132 = vunpack.c.l.b16 %v1117
        %v1133 = vunpack.c.l.b16 %v1118
        %v1134 = vpack.c.b16 %v1131, %v1130
        %v1135 = vpack.c.b16 %v1133, %v1132
        %v1139 = vsel %vm440, %v1114, 0
        %1141 = vmatprep.subr.bf16.mxu0 0
        %1142 = vmatpush1.bf16.msra.mxu0 %v1134
        %1143 = vmatprep.subr.bf16.mxu0 0
        %1144 = vmatpush1.bf16.msra.mxu0 %v1135
        %1145 = vmatprep.subr.bf16.mxu0 0
        %1146 = vmatpush1.bf16.msra.mxu0 0
        %1147 = vmatprep.subr.bf16.mxu0 0
        %1148 = vmatpush1.bf16.msra.mxu0 0
        %1149 = vmatprep.subr.bf16.mxu0 0
        %1150 = vmatpush1.bf16.msra.mxu0 0
        %1151 = vmatprep.subr.bf16.mxu0 0
        %1152 = vmatpush1.bf16.msra.mxu0 0
        %1153 = vmatprep.subr.bf16.mxu0 0
        %1154 = vmatpush1.bf16.msra.mxu0 0
        %1155 = vmatprep.subr.bf16.mxu0 0
        %1156 = vmatpush1.bf16.msra.mxu0 0
        %1157 = vmatprep.subr.bf16.mxu0 0
        %1158 = vmatpush1.bf16.msra.mxu0 0
        %1159 = vmatprep.subr.bf16.mxu0 0
        %1160 = vmatpush1.bf16.msra.mxu0 0
        %1161 = vmatprep.subr.bf16.mxu0 0
        %1162 = vmatpush1.bf16.msra.mxu0 0
        %1163 = vmatprep.subr.bf16.mxu0 0
        %1164 = vmatpush1.bf16.msra.mxu0 0
        %1165 = vmatprep.subr.bf16.mxu0 0
        %1166 = vmatpush1.bf16.msra.mxu0 0
        %1167 = vmatprep.subr.bf16.mxu0 0
        %1168 = vmatpush1.bf16.msra.mxu0 0
        %1169 = vmatprep.subr.bf16.mxu0 0
        %1170 = vmatpush1.bf16.msra.mxu0 0
        %1171 = vmatprep.subr.bf16.mxu0 0
        %1172 = vmatpush1.bf16.msra.mxu0 0
        %1173 = vmatprep.mubr.bf16.mxu0 0
        %1174 = vmatmul.mubr.bf16.gmra.mrb[0].mxu0 %v1139
        %v1175 = vpop.f32.mrb[0].mxu0
        %v1176 = vadd.f32 %v1124, %v1175
        %v1177 = vpop.f32.mrb[0].mxu0
        %v1178 = vpop.f32.mrb[0].mxu0
        %v1179 = vpop.f32.mrb[0].mxu0
        %1180 = vdwg.mxu0
        %v1181 = vmul.f32 %v1176, 1.702
        %v1182 = vxor.u32 %v1181, 2147483648
        %v1183 = vmul.f32 %v1182, 1.442695
        %v1184 = vpow.pop %v1183
        %v1185 = vadd.f32 %v1184, 1.0
        %v1186 = vrcp.pop %v1185
        %v1187 = vmul.f32 1.0, %v1186
        %v1188 = vmul.f32 %v1176, %v1187
        %v1189 = vpack.c.bf16 %v1188, %v1188
        %v1190 = vld [vmem:[%s11] sm:$0xf]
        %v1191 = vld [vmem:[%s11 + $0x4] sm:$0xf]
        %v1192 = vld [vmem:[%s11 + $0x8] sm:$0xf]
        %v1193 = vld [vmem:[%s11 + $0xc] sm:$0xf]
        %v1194 = vld [vmem:[%s11 + $0x10] sm:$0xf]
        %v1195 = vld [vmem:[%s11 + $0x14] sm:$0xf]
        %v1196 = vld [vmem:[%s11 + $0x18] sm:$0xf]
        %v1197 = vld [vmem:[%s11 + $0x1c] sm:$0xf]
        %v1198 = vld [vmem:[%s11 + $0x20] sm:$0xf]
        %v1199 = vld [vmem:[%s11 + $0x24] sm:$0xf]
        %v1200 = vld [vmem:[%s11 + $0x28] sm:$0xf]
        %v1201 = vld [vmem:[%s11 + $0x2c] sm:$0xf]
        %v1202 = vld [vmem:[%s11 + $0x30] sm:$0xf]
        %v1203 = vld [vmem:[%s11 + $0x34] sm:$0xf]
        %v1204 = vld [vmem:[%s11 + $0x38] sm:$0xf]
        %v1205 = vld [vmem:[%s11 + $0x3c] sm:$0xf]
        %v1222 = vunpack.c.l.b16 %v1190
        %v1223 = vunpack.c.l.b16 %v1191
        %v1224 = vunpack.c.l.b16 %v1192
        %v1225 = vunpack.c.l.b16 %v1193
        %v1226 = vunpack.c.l.b16 %v1194
        %v1227 = vunpack.c.l.b16 %v1195
        %v1228 = vunpack.c.l.b16 %v1196
        %v1229 = vunpack.c.l.b16 %v1197
        %v1230 = vunpack.c.l.b16 %v1198
        %v1231 = vunpack.c.l.b16 %v1199
        %v1232 = vunpack.c.l.b16 %v1200
        %v1233 = vunpack.c.l.b16 %v1201
        %v1234 = vunpack.c.l.b16 %v1202
        %v1235 = vunpack.c.l.b16 %v1203
        %v1236 = vunpack.c.l.b16 %v1204
        %v1237 = vunpack.c.l.b16 %v1205
        %v1238 = vpack.c.b16 %v1223, %v1222
        %v1239 = vpack.c.b16 %v1225, %v1224
        %v1240 = vpack.c.b16 %v1227, %v1226
        %v1241 = vpack.c.b16 %v1229, %v1228
        %v1242 = vpack.c.b16 %v1231, %v1230
        %v1243 = vpack.c.b16 %v1233, %v1232
        %v1244 = vpack.c.b16 %v1235, %v1234
        %v1245 = vpack.c.b16 %v1237, %v1236
        %1254 = vmatprep.subr.bf16.mxu0 0
        %1255 = vmatpush1.bf16.msra.mxu0 %v1238
        %1256 = vmatprep.subr.bf16.mxu0 0
        %1257 = vmatpush1.bf16.msra.mxu0 %v1239
        %1258 = vmatprep.subr.bf16.mxu0 0
        %1259 = vmatpush1.bf16.msra.mxu0 %v1240
        %1260 = vmatprep.subr.bf16.mxu0 0
        %1261 = vmatpush1.bf16.msra.mxu0 %v1241
        %1262 = vmatprep.subr.bf16.mxu0 0
        %1263 = vmatpush1.bf16.msra.mxu0 %v1242
        %1264 = vmatprep.subr.bf16.mxu0 0
        %1265 = vmatpush1.bf16.msra.mxu0 %v1243
        %1266 = vmatprep.subr.bf16.mxu0 0
        %1267 = vmatpush1.bf16.msra.mxu0 %v1244
        %1268 = vmatprep.subr.bf16.mxu0 0
        %1269 = vmatpush1.bf16.msra.mxu0 %v1245
        %1270 = vmatprep.subr.bf16.mxu0 0
        %1271 = vmatpush1.bf16.msra.mxu0 0
        %1272 = vmatprep.subr.bf16.mxu0 0
        %1273 = vmatpush1.bf16.msra.mxu0 0
        %1274 = vmatprep.subr.bf16.mxu0 0
        %1275 = vmatpush1.bf16.msra.mxu0 0
        %1276 = vmatprep.subr.bf16.mxu0 0
        %1277 = vmatpush1.bf16.msra.mxu0 0
        %1278 = vmatprep.subr.bf16.mxu0 0
        %1279 = vmatpush1.bf16.msra.mxu0 0
        %1280 = vmatprep.subr.bf16.mxu0 0
        %1281 = vmatpush1.bf16.msra.mxu0 0
        %1282 = vmatprep.subr.bf16.mxu0 0
        %1283 = vmatpush1.bf16.msra.mxu0 0
        %1284 = vmatprep.subr.bf16.mxu0 0
        %1285 = vmatpush1.bf16.msra.mxu0 0
        %1286 = vmatprep.mubr.bf16.mxu0 0
        %1287 = vmatmul.mubr.bf16.gmra.mrb[0].mxu0 %v1189
        %v1288 = vpop.f32.mrb[0].mxu0
        %v1289 = vadd.f32 0.0, %v1288
        %v1290 = vpop.f32.mrb[0].mxu0
        %v1291 = vpop.f32.mrb[0].mxu0
        %v1292 = vpop.f32.mrb[0].mxu0
        %1293 = vdwg.mxu0
        %v1294 = vadd.f32 %v1084, %v1289
        %v1295 = vld [vmem:[%s12] sm:$0x1]
        %v1297 = vlaneseq
        %v1298 = vshrl.u32 %v1297, 7
        %v1299 = vsub.s32 0, %v1298
        %v1300 = vrot.slane %v1295, %v1299
        %v1302 = vadd.f32 %v1294, %v1300
        %1303 = vst.msk [vmem:[%s431] sm:$0xff] %vm440, %v1302
        %s1304 = sand.u32 %s313, 1
        %s1305 = scalar_lea.sflag [#allocation4], %s1304
        %s1306 = sand.u32 %s313, 1
        %s1307 = smul.addr %s1306, 8
        %s1308 = scalar_lea.vmem [#allocation3], %s1307
        // Predicated region
        $region73: #{tpu_custom_call.1} parent=71 // pred_check
          %p1309 = pneg %p323
        $region74: #{tpu_custom_call.1} parent=71 // pred_check_branch
          %1311 = sbr.rel (%p1309) target = $region76
        $region75: #{tpu_custom_call.1} parent=71 // pred_region
          %s1313 = ssub.s32 128, 128
          %1314 = vsyncadd %s1305, %s1313
          %s1315 = smul.addr %s27, 128
          %s1316 = scalar_lea.hbm %s13, %s1315
          %s1318 = sshll.u32 %s1308, 4
          %s1319 = int_to_ptr.vmem [resolvable:$true] %s1318
          %1321 = dma.vmem_to_hbm [thread:$0]  %s1319, 128, %s1316, %s1305
        $region76: #{tpu_custom_call.1} parent=71 // pred_fallthru
          _
      $region72: #{tpu_custom_call.1} parent=5 // pred_fallthru
        _
      %p1322 = scmp.le.s32.totalorder 2, %s22
      // Predicated region
      $region77: #{tpu_custom_call.1} parent=5 // pred_check
        %p1323 = pneg %p1322
      $region78: #{tpu_custom_call.1} parent=5 // pred_check_branch
        %1325 = sbr.rel (%p1323) target = $region80
      $region79: #{tpu_custom_call.1} parent=5 // pred_region
        %s1326 = ssub.s32 %s22, 2
        // Predicated region
        $region81: #{tpu_custom_call.1} parent=79 // pred_check
          %p1327 = pneg %p329
        $region82: #{tpu_custom_call.1} parent=79 // pred_check_branch
          %1329 = sbr.rel (%p1327) target = $region84
        $region83: #{tpu_custom_call.1} parent=79 // pred_region
          %s1330 = sand.u32 %s314, 1
          %s1331 = scalar_lea.sflag [#allocation4], %s1330
          %s1332 = sand.u32 %s314, 1
          %s1333 = smul.addr %s1332, 8
          %s1334 = scalar_lea.vmem [#allocation3], %s1333
          %1335 = dma.done %s1331, 128
        $region84: #{tpu_custom_call.1} parent=79 // pred_fallthru
          _
      $region80: #{tpu_custom_call.1} parent=5 // pred_fallthru
        _
    $region6: #{tpu_custom_call.1} parent=1 // loop_footer
      %s26 = sadd.s32 1, %s22
    $region7: #{tpu_custom_call.1} parent=1 // loop_footer_branch
      %21 = sbr.rel target = $region3
    $region8: #{tpu_custom_call.1} parent=1 // loop_exit
      _
    %1336 = vsyncpa [#allocation4], 1
    %s1337 = scalar_lea.sflag [#allocation4], 1
    %1338 = vsyncpa %s1337, 1

// kernel: tpu_custom_call.1
$region0: #{tpu_custom_call.1}
  #allocation0 [shape = 'u32[]', space=smem, size = 0x4, offset = 0x4, fixed_abs, tag = 'smem constant byte address 0x4 - core index']
  #allocation1 [shape = 'u32[144,128]{1,0:T(1,128)}', space=vmem, size = 0x12000, scoped, tag = 'internal scratch']
  #allocation2 [shape = 'bf16[8,32]{1,0:T(8,128)(2,1)}', space=vmem, size = 0x800, scoped, tag = 'scratch operand']
  %s0 = inlined_call_operand.vmem [shape: f32[2,8,32], index: 0, kind: input, shape index: {}]
  %s1 = inlined_call_operand.vmem [shape: f32[1,32], index: 1, kind: input, shape index: {}]
  %s2 = inlined_call_operand.vmem [shape: f32[1,32], index: 2, kind: input, shape index: {}]
  %s3 = inlined_call_operand.vmem [shape: bf16[32,96], index: 3, kind: input, shape index: {}]
  %s4 = inlined_call_operand.vmem [shape: f32[1,96], index: 4, kind: input, shape index: {}]
  %s5 = inlined_call_operand.vmem [shape: bf16[32,32], index: 5, kind: input, shape index: {}]
  %s6 = inlined_call_operand.vmem [shape: f32[1,32], index: 6, kind: input, shape index: {}]
  %s7 = inlined_call_operand.vmem [shape: f32[1,32], index: 7, kind: input, shape index: {}]
  %s8 = inlined_call_operand.vmem [shape: f32[1,32], index: 8, kind: input, shape index: {}]
  %s9 = inlined_call_operand.vmem [shape: bf16[32,128], index: 9, kind: input, shape index: {}]
  %s10 = inlined_call_operand.vmem [shape: f32[1,128], index: 10, kind: input, shape index: {}]
  %s11 = inlined_call_operand.vmem [shape: bf16[128,32], index: 11, kind: input, shape index: {}]
  %s12 = inlined_call_operand.vmem [shape: f32[1,32], index: 12, kind: input, shape index: {}]
  %s13 = inlined_call_operand.hbm [shape: f32[2,8,32], index: 13, kind: output, shape index: {}]
  %s14 = sld [smem:[#allocation0]]
  $region85: #{tpu_custom_call.1} parent=0
    _
  %s16 = ssub.s32 1, %s14
  %s17 = scalar_select 0, %s16, %s14
  $region1: #{tpu_custom_call.1} parent=0
    #allocation3 [shape = 'u8[8192]{0}', space=vmem, size = 0x2000, scoped, tag = 'output window, operand 0']
    #allocation4 [shape = 's32[2]{0}', space=sflag, size = 0x8, scoped, tag = 'scoped memory for tpu_custom_call.1']
    %18 = vsyncpa [#allocation4], 0
    %s19 = scalar_lea.sflag [#allocation4], 1
    %20 = vsyncpa %s19, 0
    loop: start=0, step=1, limit=4
    $region2: #{tpu_custom_call.1} parent=1 // loop_pre_header
      _
    $region3: #{tpu_custom_call.1} parent=1 // loop_header
      %s22 = sphi 0, %s26
      %p23 = scmp.ge.s32.totalorder %s22, 4
      %s32 = sphi 0, %s34
      %s35 = sphi 0, %s32
      %s36 = sphi 0, %s35
      %s52 = sphi 0, %s36
      %s56 = sphi 0, %s56
      %s58 = sphi 0, %s56
      %s59 = sphi 0, %s58
      %s73 = sphi 0, %s59
      %s77 = sphi 0, %s77
      %s79 = sphi 0, %s77
      %s80 = sphi 0, %s79
      %s94 = sphi 0, %s80
      %s98 = sphi 0, %s98
      %s100 = sphi 0, %s98
      %s101 = sphi 0, %s100
      %s115 = sphi 0, %s101
      %s119 = sphi 0, %s119
      %s121 = sphi 0, %s119
      %s122 = sphi 0, %s121
      %s136 = sphi 0, %s122
      %s140 = sphi 0, %s140
      %s142 = sphi 0, %s140
      %s143 = sphi 0, %s142
      %s157 = sphi 0, %s143
      %s161 = sphi 0, %s161
      %s163 = sphi 0, %s161
      %s164 = sphi 0, %s163
      %s178 = sphi 0, %s164
      %s182 = sphi 0, %s182
      %s184 = sphi 0, %s182
      %s185 = sphi 0, %s184
      %s199 = sphi 0, %s185
      %s203 = sphi 0, %s203
      %s205 = sphi 0, %s203
      %s206 = sphi 0, %s205
      %s220 = sphi 0, %s206
      %s224 = sphi 0, %s224
      %s226 = sphi 0, %s224
      %s227 = sphi 0, %s226
      %s241 = sphi 0, %s227
      %s245 = sphi 0, %s245
      %s247 = sphi 0, %s245
      %s248 = sphi 0, %s247
      %s262 = sphi 0, %s248
      %s266 = sphi 0, %s266
      %s268 = sphi 0, %s266
      %s269 = sphi 0, %s268
      %s283 = sphi 0, %s269
      %s287 = sphi 0, %s287
      %s289 = sphi 0, %s287
      %s290 = sphi 0, %s289
      %s304 = sphi 0, %s290
      %s310 = sphi 0, %s312
      %s313 = sphi 0, %s310
      %s314 = sphi 0, %s313
      %s330 = sphi 0, %s314
    $region4: #{tpu_custom_call.1} parent=1 // loop_header_branch
      %25 = sbr.rel (%p23) target = $region8
    $region5: #{tpu_custom_call.1} parent=1 // loop_body
      %s27 = ssub.s32 %s22, 1
      %s28 = ssub.s32 %s22, 2
      %s29 = sadd.s32 %s22, 1
      %s30 = ssub.s32 %s22, %s29
      %p31 = scmp.eq.s32.totalorder %s30, 0
      %s33 = sadd.s32 %s32, 1
      %s34 = scalar_select %p31, %s32, %s33
      %p37 = pneg %p31
      %p38 = scmp.eq.s32.totalorder %s22, 1
      %p39 = por %p37, %p38
      %p40 = scmp.ne.s32.totalorder %s32, %s35
      %p41 = scmp.eq.s32.totalorder %s22, 0
      %p42 = por %p40, %p41
      %p43 = scmp.ne.s32.totalorder %s32, %s35
      %p44 = scmp.eq.s32.totalorder %s27, 1
      %p45 = por %p43, %p44
      %p46 = scmp.ne.s32.totalorder %s35, %s36
      %p47 = scmp.eq.s32.totalorder %s27, 0
      %p48 = por %p46, %p47
      %p49 = scmp.ne.s32.totalorder %s35, %s36
      %p50 = scmp.eq.s32.totalorder %s28, 1
      %p51 = por %p49, %p50
      %p53 = scmp.ne.s32.totalorder %s36, %s52
      %p54 = scmp.eq.s32.totalorder %s28, 0
      %p55 = por %p53, %p54
      %s57 = sadd.s32 %s56, 1
      %p60 = scmp.eq.s32.totalorder %s22, 1
      %p61 = scmp.ne.s32.totalorder %s56, %s58
      %p62 = scmp.eq.s32.totalorder %s22, 0
      %p63 = por %p61, %p62
      %p64 = scmp.ne.s32.totalorder %s56, %s58
      %p65 = scmp.eq.s32.totalorder %s27, 1
      %p66 = por %p64, %p65
      %p67 = scmp.ne.s32.totalorder %s58, %s59
      %p68 = scmp.eq.s32.totalorder %s27, 0
      %p69 = por %p67, %p68
      %p70 = scmp.ne.s32.totalorder %s58, %s59
      %p71 = scmp.eq.s32.totalorder %s28, 1
      %p72 = por %p70, %p71
      %p74 = scmp.ne.s32.totalorder %s59, %s73
      %p75 = scmp.eq.s32.totalorder %s28, 0
      %p76 = por %p74, %p75
      %s78 = sadd.s32 %s77, 1
      %p81 = scmp.eq.s32.totalorder %s22, 1
      %p82 = scmp.ne.s32.totalorder %s77, %s79
      %p83 = scmp.eq.s32.totalorder %s22, 0
      %p84 = por %p82, %p83
      %p85 = scmp.ne.s32.totalorder %s77, %s79
      %p86 = scmp.eq.s32.totalorder %s27, 1
      %p87 = por %p85, %p86
      %p88 = scmp.ne.s32.totalorder %s79, %s80
      %p89 = scmp.eq.s32.totalorder %s27, 0
      %p90 = por %p88, %p89
      %p91 = scmp.ne.s32.totalorder %s79, %s80
      %p92 = scmp.eq.s32.totalorder %s28, 1
      %p93 = por %p91, %p92
      %p95 = scmp.ne.s32.totalorder %s80, %s94
      %p96 = scmp.eq.s32.totalorder %s28, 0
      %p97 = por %p95, %p96
      %s99 = sadd.s32 %s98, 1
      %p102 = scmp.eq.s32.totalorder %s22, 1
      %p103 = scmp.ne.s32.totalorder %s98, %s100
      %p104 = scmp.eq.s32.totalorder %s22, 0
      %p105 = por %p103, %p104
      %p106 = scmp.ne.s32.totalorder %s98, %s100
      %p107 = scmp.eq.s32.totalorder %s27, 1
      %p108 = por %p106, %p107
      %p109 = scmp.ne.s32.totalorder %s100, %s101
      %p110 = scmp.eq.s32.totalorder %s27, 0
      %p111 = por %p109, %p110
      %p112 = scmp.ne.s32.totalorder %s100, %s101
      %p113 = scmp.eq.s32.totalorder %s28, 1
      %p114 = por %p112, %p113
      %p116 = scmp.ne.s32.totalorder %s101, %s115
      %p117 = scmp.eq.s32.totalorder %s28, 0
      %p118 = por %p116, %p117
      %s120 = sadd.s32 %s119, 1
      %p123 = scmp.eq.s32.totalorder %s22, 1
      %p124 = scmp.ne.s32.totalorder %s119, %s121
      %p125 = scmp.eq.s32.totalorder %s22, 0
      %p126 = por %p124, %p125
      %p127 = scmp.ne.s32.totalorder %s119, %s121
      %p128 = scmp.eq.s32.totalorder %s27, 1
      %p129 = por %p127, %p128
      %p130 = scmp.ne.s32.totalorder %s121, %s122
      %p131 = scmp.eq.s32.totalorder %s27, 0
      %p132 = por %p130, %p131
      %p133 = scmp.ne.s32.totalorder %s121, %s122
      %p134 = scmp.eq.s32.totalorder %s28, 1
      %p135 = por %p133, %p134
      %p137 = scmp.ne.s32.totalorder %s122, %s136
      %p138 = scmp.eq.s32.totalorder %s28, 0
      %p139 = por %p137, %p138
      %s141 = sadd.s32 %s140, 1
      %p144 = scmp.eq.s32.totalorder %s22, 1
      %p145 = scmp.ne.s32.totalorder %s140, %s142
      %p146 = scmp.eq.s32.totalorder %s22, 0
      %p147 = por %p145, %p146
      %p148 = scmp.ne.s32.totalorder %s140, %s142
      %p149 = scmp.eq.s32.totalorder %s27, 1
      %p150 = por %p148, %p149
      %p151 = scmp.ne.s32.totalorder %s142, %s143
      %p152 = scmp.eq.s32.totalorder %s27, 0
      %p153 = por %p151, %p152
      %p154 = scmp.ne.s32.totalorder %s142, %s143
      %p155 = scmp.eq.s32.totalorder %s28, 1
      %p156 = por %p154, %p155
      %p158 = scmp.ne.s32.totalorder %s143, %s157
      %p159 = scmp.eq.s32.totalorder %s28, 0
      %p160 = por %p158, %p159
      %s162 = sadd.s32 %s161, 1
      %p165 = scmp.eq.s32.totalorder %s22, 1
      %p166 = scmp.ne.s32.totalorder %s161, %s163
      %p167 = scmp.eq.s32.totalorder %s22, 0
      %p168 = por %p166, %p167
      %p169 = scmp.ne.s32.totalorder %s161, %s163
      %p170 = scmp.eq.s32.totalorder %s27, 1
      %p171 = por %p169, %p170
      %p172 = scmp.ne.s32.totalorder %s163, %s164
      %p173 = scmp.eq.s32.totalorder %s27, 0
      %p174 = por %p172, %p173
      %p175 = scmp.ne.s32.totalorder %s163, %s164
      %p176 = scmp.eq.s32.totalorder %s28, 1
      %p177 = por %p175, %p176
      %p179 = scmp.ne.s32.totalorder %s164, %s178
      %p180 = scmp.eq.s32.totalorder %s28, 0
      %p181 = por %p179, %p180
      %s183 = sadd.s32 %s182, 1
      %p186 = scmp.eq.s32.totalorder %s22, 1
      %p187 = scmp.ne.s32.totalorder %s182, %s184
      %p188 = scmp.eq.s32.totalorder %s22, 0
      %p189 = por %p187, %p188
      %p190 = scmp.ne.s32.totalorder %s182, %s184
      %p191 = scmp.eq.s32.totalorder %s27, 1
      %p192 = por %p190, %p191
      %p193 = scmp.ne.s32.totalorder %s184, %s185
      %p194 = scmp.eq.s32.totalorder %s27, 0
      %p195 = por %p193, %p194
      %p196 = scmp.ne.s32.totalorder %s184, %s185
      %p197 = scmp.eq.s32.totalorder %s28, 1
      %p198 = por %p196, %p197
      %p200 = scmp.ne.s32.totalorder %s185, %s199
      %p201 = scmp.eq.s32.totalorder %s28, 0
      %p202 = por %p200, %p201
      %s204 = sadd.s32 %s203, 1
      %p207 = scmp.eq.s32.totalorder %s22, 1
      %p208 = scmp.ne.s32.totalorder %s203, %s205
      %p209 = scmp.eq.s32.totalorder %s22, 0
      %p210 = por %p208, %p209
      %p211 = scmp.ne.s32.totalorder %s203, %s205
      %p212 = scmp.eq.s32.totalorder %s27, 1
      %p213 = por %p211, %p212
      %p214 = scmp.ne.s32.totalorder %s205, %s206
      %p215 = scmp.eq.s32.totalorder %s27, 0
      %p216 = por %p214, %p215
      %p217 = scmp.ne.s32.totalorder %s205, %s206
      %p218 = scmp.eq.s32.totalorder %s28, 1
      %p219 = por %p217, %p218
      %p221 = scmp.ne.s32.totalorder %s206, %s220
      %p222 = scmp.eq.s32.totalorder %s28, 0
      %p223 = por %p221, %p222
      %s225 = sadd.s32 %s224, 1
      %p228 = scmp.eq.s32.totalorder %s22, 1
      %p229 = scmp.ne.s32.totalorder %s224, %s226
      %p230 = scmp.eq.s32.totalorder %s22, 0
      %p231 = por %p229, %p230
      %p232 = scmp.ne.s32.totalorder %s224, %s226
      %p233 = scmp.eq.s32.totalorder %s27, 1
      %p234 = por %p232, %p233
      %p235 = scmp.ne.s32.totalorder %s226, %s227
      %p236 = scmp.eq.s32.totalorder %s27, 0
      %p237 = por %p235, %p236
      %p238 = scmp.ne.s32.totalorder %s226, %s227
      %p239 = scmp.eq.s32.totalorder %s28, 1
      %p240 = por %p238, %p239
      %p242 = scmp.ne.s32.totalorder %s227, %s241
      %p243 = scmp.eq.s32.totalorder %s28, 0
      %p244 = por %p242, %p243
      %s246 = sadd.s32 %s245, 1
      %p249 = scmp.eq.s32.totalorder %s22, 1
      %p250 = scmp.ne.s32.totalorder %s245, %s247
      %p251 = scmp.eq.s32.totalorder %s22, 0
      %p252 = por %p250, %p251
      %p253 = scmp.ne.s32.totalorder %s245, %s247
      %p254 = scmp.eq.s32.totalorder %s27, 1
      %p255 = por %p253, %p254
      %p256 = scmp.ne.s32.totalorder %s247, %s248
      %p257 = scmp.eq.s32.totalorder %s27, 0
      %p258 = por %p256, %p257
      %p259 = scmp.ne.s32.totalorder %s247, %s248
      %p260 = scmp.eq.s32.totalorder %s28, 1
      %p261 = por %p259, %p260
      %p263 = scmp.ne.s32.totalorder %s248, %s262
      %p264 = scmp.eq.s32.totalorder %s28, 0
      %p265 = por %p263, %p264
      %s267 = sadd.s32 %s266, 1
      %p270 = scmp.eq.s32.totalorder %s22, 1
      %p271 = scmp.ne.s32.totalorder %s266, %s268
      %p272 = scmp.eq.s32.totalorder %s22, 0
      %p273 = por %p271, %p272
      %p274 = scmp.ne.s32.totalorder %s266, %s268
      %p275 = scmp.eq.s32.totalorder %s27, 1
      %p276 = por %p274, %p275
      %p277 = scmp.ne.s32.totalorder %s268, %s269
      %p278 = scmp.eq.s32.totalorder %s27, 0
      %p279 = por %p277, %p278
      %p280 = scmp.ne.s32.totalorder %s268, %s269
      %p281 = scmp.eq.s32.totalorder %s28, 1
      %p282 = por %p280, %p281
      %p284 = scmp.ne.s32.totalorder %s269, %s283
      %p285 = scmp.eq.s32.totalorder %s28, 0
      %p286 = por %p284, %p285
      %s288 = sadd.s32 %s287, 1
      %p291 = scmp.eq.s32.totalorder %s22, 1
      %p292 = scmp.ne.s32.totalorder %s287, %s289
      %p293 = scmp.eq.s32.totalorder %s22, 0
      %p294 = por %p292, %p293
      %p295 = scmp.ne.s32.totalorder %s287, %s289
      %p296 = scmp.eq.s32.totalorder %s27, 1
      %p297 = por %p295, %p296
      %p298 = scmp.ne.s32.totalorder %s289, %s290
      %p299 = scmp.eq.s32.totalorder %s27, 0
      %p300 = por %p298, %p299
      %p301 = scmp.ne.s32.totalorder %s289, %s290
      %p302 = scmp.eq.s32.totalorder %s28, 1
      %p303 = por %p301, %p302
      %p305 = scmp.ne.s32.totalorder %s290, %s304
      %p306 = scmp.eq.s32.totalorder %s28, 0
      %p307 = por %p305, %p306
      %s308 = ssub.s32 %s22, %s29
      %p309 = scmp.eq.s32.totalorder %s308, 0
      %s311 = sadd.s32 %s310, 1
      %s312 = scalar_select %p309, %s310, %s311
      %p315 = pneg %p309
      %p316 = scmp.eq.s32.totalorder %s22, 1
      %p317 = por %p315, %p316
      %p318 = scmp.ne.s32.totalorder %s310, %s313
      %p319 = scmp.eq.s32.totalorder %s22, 0
      %p320 = por %p318, %p319
      %p321 = scmp.ne.s32.totalorder %s310, %s313
      %p322 = scmp.eq.s32.totalorder %s27, 1
      %p323 = por %p321, %p322
      %p324 = scmp.ne.s32.totalorder %s313, %s314
      %p325 = scmp.eq.s32.totalorder %s27, 0
      %p326 = por %p324, %p325
      %p327 = scmp.ne.s32.totalorder %s313, %s314
      %p328 = scmp.eq.s32.totalorder %s28, 1
      %p329 = por %p327, %p328
      %p331 = scmp.ne.s32.totalorder %s314, %s330
      %p332 = scmp.eq.s32.totalorder %s28, 0
      %p333 = por %p331, %p332
      %p334 = scmp.le.s32.totalorder 1, %s22
      %p335 = scmp.lt.s32.totalorder %s22, 3
      %p336 = pnand %p334, %p335
      %p337 = pneg %p336
      // Predicated region
      $region9: #{tpu_custom_call.1} parent=5 // pred_check
        _
      $region10: #{tpu_custom_call.1} parent=5 // pred_check_branch
        %339 = sbr.rel (%p336) target = $region12
      $region11: #{tpu_custom_call.1} parent=5 // pred_region
        %s340 = ssub.s32 %s22, 1
        // Predicated region
        $region13: #{tpu_custom_call.1} parent=11 // pred_check
          %p341 = pneg %p69
        $region14: #{tpu_custom_call.1} parent=11 // pred_check_branch
          %343 = sbr.rel (%p341) target = $region16
        $region15: #{tpu_custom_call.1} parent=11 // pred_region
          _
        $region16: #{tpu_custom_call.1} parent=11 // pred_fallthru
          _
        // Predicated region
        $region17: #{tpu_custom_call.1} parent=11 // pred_check
          %p344 = pneg %p90
        $region18: #{tpu_custom_call.1} parent=11 // pred_check_branch
          %346 = sbr.rel (%p344) target = $region20
        $region19: #{tpu_custom_call.1} parent=11 // pred_region
          _
        $region20: #{tpu_custom_call.1} parent=11 // pred_fallthru
          _
        // Predicated region
        $region21: #{tpu_custom_call.1} parent=11 // pred_check
          %p347 = pneg %p111
        $region22: #{tpu_custom_call.1} parent=11 // pred_check_branch
          %349 = sbr.rel (%p347) target = $region24
        $region23: #{tpu_custom_call.1} parent=11 // pred_region
          _
        $region24: #{tpu_custom_call.1} parent=11 // pred_fallthru
          _
        // Predicated region
        $region25: #{tpu_custom_call.1} parent=11 // pred_check
          %p350 = pneg %p132
        $region26: #{tpu_custom_call.1} parent=11 // pred_check_branch
          %352 = sbr.rel (%p350) target = $region28
        $region27: #{tpu_custom_call.1} parent=11 // pred_region
          _
        $region28: #{tpu_custom_call.1} parent=11 // pred_fallthru
          _
        // Predicated region
        $region29: #{tpu_custom_call.1} parent=11 // pred_check
          %p353 = pneg %p153
        $region30: #{tpu_custom_call.1} parent=11 // pred_check_branch
          %355 = sbr.rel (%p353) target = $region32
        $region31: #{tpu_custom_call.1} parent=11 // pred_region
          _
        $region32: #{tpu_custom_call.1} parent=11 // pred_fallthru
          _
        // Predicated region
        $region33: #{tpu_custom_call.1} parent=11 // pred_check
          %p356 = pneg %p174
        $region34: #{tpu_custom_call.1} parent=11 // pred_check_branch
          %358 = sbr.rel (%p356) target = $region36
        $region35: #{tpu_custom_call.1} parent=11 // pred_region
          _
        $region36: #{tpu_custom_call.1} parent=11 // pred_fallthru
          _
        // Predicated region
        $region37: #{tpu_custom_call.1} parent=11 // pred_check
          %p359 = pneg %p195
        $region38: #{tpu_custom_call.1} parent=11 // pred_check_branch
          %361 = sbr.rel (%p359) target = $region40
        $region39: #{tpu_custom_call.1} parent=11 // pred_region
          _
        $region40: #{tpu_custom_call.1} parent=11 // pred_fallthru
          _
        // Predicated region
        $region41: #{tpu_custom_call.1} parent=11 // pred_check
          %p362 = pneg %p216
        $region42: #{tpu_custom_call.1} parent=11 // pred_check_branch
          %364 = sbr.rel (%p362) target = $region44
        $region43: #{tpu_custom_call.1} parent=11 // pred_region
          _
        $region44: #{tpu_custom_call.1} parent=11 // pred_fallthru
          _
        // Predicated region
        $region45: #{tpu_custom_call.1} parent=11 // pred_check
          %p365 = pneg %p237
        $region46: #{tpu_custom_call.1} parent=11 // pred_check_branch
          %367 = sbr.rel (%p365) target = $region48
        $region47: #{tpu_custom_call.1} parent=11 // pred_region
          _
        $region48: #{tpu_custom_call.1} parent=11 // pred_fallthru
          _
        // Predicated region
        $region49: #{tpu_custom_call.1} parent=11 // pred_check
          %p368 = pneg %p258
        $region50: #{tpu_custom_call.1} parent=11 // pred_check_branch
          %370 = sbr.rel (%p368) target = $region52
        $region51: #{tpu_custom_call.1} parent=11 // pred_region
          _
        $region52: #{tpu_custom_call.1} parent=11 // pred_fallthru
          _
        // Predicated region
        $region53: #{tpu_custom_call.1} parent=11 // pred_check
          %p371 = pneg %p279
        $region54: #{tpu_custom_call.1} parent=11 // pred_check_branch
          %373 = sbr.rel (%p371) target = $region56
        $region55: #{tpu_custom_call.1} parent=11 // pred_region
          _
        $region56: #{tpu_custom_call.1} parent=11 // pred_fallthru
          _
        // Predicated region
        $region57: #{tpu_custom_call.1} parent=11 // pred_check
          %p374 = pneg %p300
        $region58: #{tpu_custom_call.1} parent=11 // pred_check_branch
          %376 = sbr.rel (%p374) target = $region60
        $region59: #{tpu_custom_call.1} parent=11 // pred_region
          _
        $region60: #{tpu_custom_call.1} parent=11 // pred_fallthru
          _
      $region12: #{tpu_custom_call.1} parent=5 // pred_fallthru
        _
      %p377 = scmp.lt.s32.totalorder %s22, 2
      // Predicated region
      $region61: #{tpu_custom_call.1} parent=5 // pred_check
        %p378 = pneg %p377
      $region62: #{tpu_custom_call.1} parent=5 // pred_check_branch
        %380 = sbr.rel (%p378) target = $region64
      $region63: #{tpu_custom_call.1} parent=5 // pred_region
        // Predicated region
        $region65: #{tpu_custom_call.1} parent=63 // pred_check
          %p381 = pneg %p42
        $region66: #{tpu_custom_call.1} parent=63 // pred_check_branch
          %383 = sbr.rel (%p381) target = $region68
        $region67: #{tpu_custom_call.1} parent=63 // pred_region
          %p384 = scmp.lt.s32.totalorder %s22, 1
          %s385 = scalar_select %p384, %s22, 1
          %s386 = smul.addr %s385, 8
          %s387 = scalar_lea.vmem %s0, %s386
        $region68: #{tpu_custom_call.1} parent=63 // pred_fallthru
          _
      $region64: #{tpu_custom_call.1} parent=5 // pred_fallthru
        _
      %p388 = scmp.le.s32.totalorder 1, %s22
      %p389 = scmp.lt.s32.totalorder %s22, 3
      %p390 = pnand %p388, %p389
      %p391 = pneg %p390
      // Predicated region
      $region69: #{tpu_custom_call.1} parent=5 // pred_check
        _
      $region70: #{tpu_custom_call.1} parent=5 // pred_check_branch
        %393 = sbr.rel (%p390) target = $region72
      $region71: #{tpu_custom_call.1} parent=5 // pred_region
        %s394 = ssub.s32 %s22, 1
        %p395 = scmp.lt.s32.totalorder %s27, 1
        %s396 = scalar_select %p395, %s27, 1
        %s397 = smul.addr %s396, 8
        %s398 = scalar_lea.vmem %s0, %s397
        %p399 = pneg %p48
        %p400 = pneg %p45
        %p401 = pneg %p69
        %p402 = pneg %p66
        %p403 = pneg %p90
        %p404 = pneg %p87
        %p405 = pneg %p111
        %p406 = pneg %p108
        %p407 = pneg %p132
        %p408 = pneg %p129
        %p409 = pneg %p153
        %p410 = pneg %p150
        %p411 = pneg %p174
        %p412 = pneg %p171
        %p413 = pneg %p195
        %p414 = pneg %p192
        %p415 = pneg %p216
        %p416 = pneg %p213
        %p417 = pneg %p237
        %p418 = pneg %p234
        %p419 = pneg %p258
        %p420 = pneg %p255
        %p421 = pneg %p279
        %p422 = pneg %p276
        %p423 = pneg %p300
        %p424 = pneg %p297
        %p425 = pneg %p326
        %p426 = pneg %p323
        %s427 = sand.u32 %s313, 1
        %s428 = scalar_lea.sflag [#allocation4], %s427
        %s429 = sand.u32 %s313, 1
        %s430 = smul.addr %s429, 8
        %s431 = scalar_lea.vmem [#allocation3], %s430
        %p432 = scmp.lt.s32.totalorder %s27, 1
        %s433 = scalar_select %p432, %s27, 1
        %s434 = smul.addr %s433, 8
        %s435 = scalar_lea.vmem %s0, %s434
        %v437 = vld [vmem:[%s435] sm:$0xff]
        %v438 = vld [vmem:[%s1] sm:$0x1]
        %v439 = vld [vmem:[%s2] sm:$0x1]
        %vm440 = vcmask 261120
        %v441 = vsel %vm440, %v437, 0.0
        %442 = vadd.xlane.f32.xlu0 %v441
        %v443 = vpop.xlane.xlu0 %442
        %v444 = vrcp.pop 32.0
        %v445 = vmul.f32 %v443, %v444
        %v446 = vsub.f32 %v437, %v445
        %v447 = vmul.f32 %v446, %v446
        %v448 = vsel %vm440, %v447, 0.0
        %449 = vadd.xlane.f32.xlu0 %v448
        %v450 = vpop.xlane.xlu0 %449
        %v451 = vmul.f32 %v450, %v444
        %v452 = vadd.f32 %v451, 1e-05
        %v453 = vrsqrt.pop %v452
        %v454 = vmul.f32 %v446, %v453
        %v456 = vlaneseq
        %v457 = vshrl.u32 %v456, 7
        %v458 = vsub.s32 0, %v457
        %v459 = vrot.slane %v438, %v458
        %v461 = vmul.f32 %v454, %v459
        %v463 = vlaneseq
        %v464 = vshrl.u32 %v463, 7
        %v465 = vsub.s32 0, %v464
        %v466 = vrot.slane %v439, %v465
        %v468 = vadd.f32 %v461, %v466
        %v469 = vpack.c.bf16 %v468, %v468
        %v470 = vld [vmem:[%s3] sm:$0xf]
        %v471 = vld [vmem:[%s3 + $0x4] sm:$0xf]
        %v472 = vld [vmem:[%s3 + $0x8] sm:$0xf]
        %v473 = vld [vmem:[%s3 + $0xc] sm:$0xf]
        %v474 = vld [vmem:[%s4] sm:$0x1]
        %v476 = vlaneseq
        %v477 = vshrl.u32 %v476, 7
        %v478 = vsub.s32 0, %v477
        %v479 = vrot.slane %v474, %v478
        %v485 = vunpack.c.l.b16 %v470
        %v486 = vunpack.c.l.b16 %v471
        %v487 = vunpack.c.l.b16 %v472
        %v488 = vunpack.c.l.b16 %v473
        %v489 = vpack.c.b16 %v486, %v485
        %v490 = vpack.c.b16 %v488, %v487
        %v494 = vsel %vm440, %v469, 0
        %496 = vmatprep.subr.bf16.mxu0 0
        %497 = vmatpush1.bf16.msra.mxu0 %v489
        %498 = vmatprep.subr.bf16.mxu0 0
        %499 = vmatpush1.bf16.msra.mxu0 %v490
        %500 = vmatprep.subr.bf16.mxu0 0
        %501 = vmatpush1.bf16.msra.mxu0 0
        %502 = vmatprep.subr.bf16.mxu0 0
        %503 = vmatpush1.bf16.msra.mxu0 0
        %504 = vmatprep.subr.bf16.mxu0 0
        %505 = vmatpush1.bf16.msra.mxu0 0
        %506 = vmatprep.subr.bf16.mxu0 0
        %507 = vmatpush1.bf16.msra.mxu0 0
        %508 = vmatprep.subr.bf16.mxu0 0
        %509 = vmatpush1.bf16.msra.mxu0 0
        %510 = vmatprep.subr.bf16.mxu0 0
        %511 = vmatpush1.bf16.msra.mxu0 0
        %512 = vmatprep.subr.bf16.mxu0 0
        %513 = vmatpush1.bf16.msra.mxu0 0
        %514 = vmatprep.subr.bf16.mxu0 0
        %515 = vmatpush1.bf16.msra.mxu0 0
        %516 = vmatprep.subr.bf16.mxu0 0
        %517 = vmatpush1.bf16.msra.mxu0 0
        %518 = vmatprep.subr.bf16.mxu0 0
        %519 = vmatpush1.bf16.msra.mxu0 0
        %520 = vmatprep.subr.bf16.mxu0 0
        %521 = vmatpush1.bf16.msra.mxu0 0
        %522 = vmatprep.subr.bf16.mxu0 0
        %523 = vmatpush1.bf16.msra.mxu0 0
        %524 = vmatprep.subr.bf16.mxu0 0
        %525 = vmatpush1.bf16.msra.mxu0 0
        %526 = vmatprep.subr.bf16.mxu0 0
        %527 = vmatpush1.bf16.msra.mxu0 0
        %528 = vmatprep.mubr.bf16.mxu0 0
        %529 = vmatmul.mubr.bf16.gmra.mrb[0].mxu0 %v494
        %v530 = vpop.f32.mrb[0].mxu0
        %v531 = vadd.f32 %v479, %v530
        %v532 = vpop.f32.mrb[0].mxu0
        %v533 = vpop.f32.mrb[0].mxu0
        %v534 = vpop.f32.mrb[0].mxu0
        %535 = vdwg.mxu0
        %v536 = vpack.c.bf16 %v531, %v531
        %v537 = vlaneseq
        %v538 = vshrl.u32 %v537, 7
        %v539 = vlaneseq
        %v540 = vand.u32 %v539, 127
        %vm541 = vcmp.le.s32.totalorder %v540, %v538
        %543 = vrot.lane.b32.xlu0 %v536, 96
        %v544 = vpop.permute.xlu0 %543
        %vm545 = vcmask 64512
        %v547 = vsel %vm545, %v536, 0
        %v550 = vsel %vm545, %v544, 0
        %552 = vmatprep.subr.bf16.mxu0 0
        %553 = vmatpush1.bf16.xpose.msra.mxu0 %v550
        %554 = vmatprep.subr.bf16.mxu0 0
        %555 = vmatpush1.bf16.xpose.msra.mxu0 0
        %556 = vmatprep.subr.bf16.mxu0 0
        %557 = vmatpush1.bf16.xpose.msra.mxu0 0
        %558 = vmatprep.subr.bf16.mxu0 0
        %559 = vmatpush1.bf16.xpose.msra.mxu0 0
        %560 = vmatprep.subr.bf16.mxu0 0
        %561 = vmatpush1.bf16.xpose.msra.mxu0 0
        %562 = vmatprep.subr.bf16.mxu0 0
        %563 = vmatpush1.bf16.xpose.msra.mxu0 0
        %564 = vmatprep.subr.bf16.mxu0 0
        %565 = vmatpush1.bf16.xpose.msra.mxu0 0
        %566 = vmatprep.subr.bf16.mxu0 0
        %567 = vmatpush1.bf16.xpose.msra.mxu0 0
        %568 = vmatprep.subr.bf16.mxu0 0
        %569 = vmatpush1.bf16.xpose.msra.mxu0 0
        %570 = vmatprep.subr.bf16.mxu0 0
        %571 = vmatpush1.bf16.xpose.msra.mxu0 0
        %572 = vmatprep.subr.bf16.mxu0 0
        %573 = vmatpush1.bf16.xpose.msra.mxu0 0
        %574 = vmatprep.subr.bf16.mxu0 0
        %575 = vmatpush1.bf16.xpose.msra.mxu0 0
        %576 = vmatprep.subr.bf16.mxu0 0
        %577 = vmatpush1.bf16.xpose.msra.mxu0 0
        %578 = vmatprep.subr.bf16.mxu0 0
        %579 = vmatpush1.bf16.xpose.msra.mxu0 0
        %580 = vmatprep.subr.bf16.mxu0 0
        %581 = vmatpush1.bf16.xpose.msra.mxu0 0
        %582 = vmatprep.subr.bf16.mxu0 0
        %583 = vmatpush1.bf16.xpose.msra.mxu0 0
        %584 = vmatprep.mubr.bf16.mxu0 0
        %585 = vmatmul.mubr.bf16.gmra.mrb[0].mxu0 %v547
        %v586 = vpop.f32.mrb[0].mxu0
        %v587 = vadd.f32 0.0, %v586
        %v588 = vpop.f32.mrb[0].mxu0
        %v589 = vpop.f32.mrb[0].mxu0
        %v590 = vpop.f32.mrb[0].mxu0
        %591 = vdwg.mxu0
        %v592 = vsel %vm541, %v587, -inf
        %v593 = vsel %vm545, %v592, -inf
        %594 = vmax.xlane.f32.xlu0 %v593
        %v595 = vpop.xlane.xlu0 %594
        %v596 = vsub.f32 %v592, %v595
        %v597 = vmul.f32 %v596, 1.442695
        %v598 = vpow.pop %v597
        %v599 = vsel %vm545, %v598, 0.0
        %600 = vadd.xlane.f32.xlu0 %v599
        %v601 = vpop.xlane.xlu0 %600
        %v602 = vrcp.pop %v601
        %v603 = vmul.f32 %v598, %v602
        %v604 = vpack.c.bf16 %v603, %v603
        %605 = vrot.lane.b32.xlu0 %v536, 64
        %v606 = vpop.permute.xlu0 %605
        %v608 = vsel %vm545, %v604, 0
        %vm610 = vcmask 1043456
        %v612 = vsel %vm610, %v606, 0
        %614 = vmatprep.subr.bf16.mxu0 0
        %615 = vmatpush1.bf16.msra.mxu0 %v612
        %616 = vmatprep.subr.bf16.mxu0 0
        %617 = vmatpush1.bf16.msra.mxu0 0
        %618 = vmatprep.subr.bf16.mxu0 0
        %619 = vmatpush1.bf16.msra.mxu0 0
        %620 = vmatprep.subr.bf16.mxu0 0
        %621 = vmatpush1.bf16.msra.mxu0 0
        %622 = vmatprep.subr.bf16.mxu0 0
        %623 = vmatpush1.bf16.msra.mxu0 0
        %624 = vmatprep.subr.bf16.mxu0 0
        %625 = vmatpush1.bf16.msra.mxu0 0
        %626 = vmatprep.subr.bf16.mxu0 0
        %627 = vmatpush1.bf16.msra.mxu0 0
        %628 = vmatprep.subr.bf16.mxu0 0
        %629 = vmatpush1.bf16.msra.mxu0 0
        %630 = vmatprep.subr.bf16.mxu0 0
        %631 = vmatpush1.bf16.msra.mxu0 0
        %632 = vmatprep.subr.bf16.mxu0 0
        %633 = vmatpush1.bf16.msra.mxu0 0
        %634 = vmatprep.subr.bf16.mxu0 0
        %635 = vmatpush1.bf16.msra.mxu0 0
        %636 = vmatprep.subr.bf16.mxu0 0
        %637 = vmatpush1.bf16.msra.mxu0 0
        %638 = vmatprep.subr.bf16.mxu0 0
        %639 = vmatpush1.bf16.msra.mxu0 0
        %640 = vmatprep.subr.bf16.mxu0 0
        %641 = vmatpush1.bf16.msra.mxu0 0
        %642 = vmatprep.subr.bf16.mxu0 0
        %643 = vmatpush1.bf16.msra.mxu0 0
        %644 = vmatprep.subr.bf16.mxu0 0
        %645 = vmatpush1.bf16.msra.mxu0 0
        %646 = vmatprep.mubr.bf16.mxu0 0
        %647 = vmatmul.mubr.bf16.gmra.mrb[0].mxu0 %v608
        %v648 = vpop.f32.mrb[0].mxu0
        %v649 = vadd.f32 0.0, %v648
        %v650 = vpop.f32.mrb[0].mxu0
        %v651 = vpop.f32.mrb[0].mxu0
        %v652 = vpop.f32.mrb[0].mxu0
        %653 = vdwg.mxu0
        %v654 = vpack.c.bf16 %v649, %v649
        %vm655 = vcmask 60416
        %656 = vst.msk [vmem:[#allocation2] sm:$0xf] %vm655, %v654
        %657 = vrot.lane.b32.xlu0 %v536, 120
        %v658 = vpop.permute.xlu0 %657
        %659 = vrot.lane.b32.xlu0 %v536, 88
        %v660 = vpop.permute.xlu0 %659
        %v662 = vsel %vm545, %v658, 0
        %v665 = vsel %vm545, %v660, 0
        %667 = vmatprep.subr.bf16.mxu0 0
        %668 = vmatpush1.bf16.xpose.msra.mxu0 %v665
        %669 = vmatprep.subr.bf16.mxu0 0
        %670 = vmatpush1.bf16.xpose.msra.mxu0 0
        %671 = vmatprep.subr.bf16.mxu0 0
        %672 = vmatpush1.bf16.xpose.msra.mxu0 0
        %673 = vmatprep.subr.bf16.mxu0 0
        %674 = vmatpush1.bf16.xpose.msra.mxu0 0
        %675 = vmatprep.subr.bf16.mxu0 0
        %676 = vmatpush1.bf16.xpose.msra.mxu0 0
        %677 = vmatprep.subr.bf16.mxu0 0
        %678 = vmatpush1.bf16.xpose.msra.mxu0 0
        %679 = vmatprep.subr.bf16.mxu0 0
        %680 = vmatpush1.bf16.xpose.msra.mxu0 0
        %681 = vmatprep.subr.bf16.mxu0 0
        %682 = vmatpush1.bf16.xpose.msra.mxu0 0
        %683 = vmatprep.subr.bf16.mxu0 0
        %684 = vmatpush1.bf16.xpose.msra.mxu0 0
        %685 = vmatprep.subr.bf16.mxu0 0
        %686 = vmatpush1.bf16.xpose.msra.mxu0 0
        %687 = vmatprep.subr.bf16.mxu0 0
        %688 = vmatpush1.bf16.xpose.msra.mxu0 0
        %689 = vmatprep.subr.bf16.mxu0 0
        %690 = vmatpush1.bf16.xpose.msra.mxu0 0
        %691 = vmatprep.subr.bf16.mxu0 0
        %692 = vmatpush1.bf16.xpose.msra.mxu0 0
        %693 = vmatprep.subr.bf16.mxu0 0
        %694 = vmatpush1.bf16.xpose.msra.mxu0 0
        %695 = vmatprep.subr.bf16.mxu0 0
        %696 = vmatpush1.bf16.xpose.msra.mxu0 0
        %697 = vmatprep.subr.bf16.mxu0 0
        %698 = vmatpush1.bf16.xpose.msra.mxu0 0
        %699 = vmatprep.mubr.bf16.mxu0 0
        %700 = vmatmul.mubr.bf16.gmra.mrb[0].mxu0 %v662
        %v701 = vpop.f32.mrb[0].mxu0
        %v702 = vadd.f32 0.0, %v701
        %v703 = vpop.f32.mrb[0].mxu0
        %v704 = vpop.f32.mrb[0].mxu0
        %v705 = vpop.f32.mrb[0].mxu0
        %706 = vdwg.mxu0
        %v707 = vsel %vm541, %v702, -inf
        %v708 = vsel %vm545, %v707, -inf
        %709 = vmax.xlane.f32.xlu0 %v708
        %v710 = vpop.xlane.xlu0 %709
        %v711 = vsub.f32 %v707, %v710
        %v712 = vmul.f32 %v711, 1.442695
        %v713 = vpow.pop %v712
        %v714 = vsel %vm545, %v713, 0.0
        %715 = vadd.xlane.f32.xlu0 %v714
        %v716 = vpop.xlane.xlu0 %715
        %v717 = vrcp.pop %v716
        %v718 = vmul.f32 %v713, %v717
        %v719 = vpack.c.bf16 %v718, %v718
        %720 = vrot.lane.b32.xlu0 %v536, 56
        %v721 = vpop.permute.xlu0 %720
        %v723 = vsel %vm545, %v719, 0
        %v726 = vsel %vm610, %v721, 0
        %728 = vmatprep.subr.bf16.mxu0 0
        %729 = vmatpush1.bf16.msra.mxu0 %v726
        %730 = vmatprep.subr.bf16.mxu0 0
        %731 = vmatpush1.bf16.msra.mxu0 0
        %732 = vmatprep.subr.bf16.mxu0 0
        %733 = vmatpush1.bf16.msra.mxu0 0
        %734 = vmatprep.subr.bf16.mxu0 0
        %735 = vmatpush1.bf16.msra.mxu0 0
        %736 = vmatprep.subr.bf16.mxu0 0
        %737 = vmatpush1.bf16.msra.mxu0 0
        %738 = vmatprep.subr.bf16.mxu0 0
        %739 = vmatpush1.bf16.msra.mxu0 0
        %740 = vmatprep.subr.bf16.mxu0 0
        %741 = vmatpush1.bf16.msra.mxu0 0
        %742 = vmatprep.subr.bf16.mxu0 0
        %743 = vmatpush1.bf16.msra.mxu0 0
        %744 = vmatprep.subr.bf16.mxu0 0
        %745 = vmatpush1.bf16.msra.mxu0 0
        %746 = vmatprep.subr.bf16.mxu0 0
        %747 = vmatpush1.bf16.msra.mxu0 0
        %748 = vmatprep.subr.bf16.mxu0 0
        %749 = vmatpush1.bf16.msra.mxu0 0
        %750 = vmatprep.subr.bf16.mxu0 0
        %751 = vmatpush1.bf16.msra.mxu0 0
        %752 = vmatprep.subr.bf16.mxu0 0
        %753 = vmatpush1.bf16.msra.mxu0 0
        %754 = vmatprep.subr.bf16.mxu0 0
        %755 = vmatpush1.bf16.msra.mxu0 0
        %756 = vmatprep.subr.bf16.mxu0 0
        %757 = vmatpush1.bf16.msra.mxu0 0
        %758 = vmatprep.subr.bf16.mxu0 0
        %759 = vmatpush1.bf16.msra.mxu0 0
        %760 = vmatprep.mubr.bf16.mxu0 0
        %761 = vmatmul.mubr.bf16.gmra.mrb[0].mxu0 %v723
        %v762 = vpop.f32.mrb[0].mxu0
        %v763 = vadd.f32 0.0, %v762
        %v764 = vpop.f32.mrb[0].mxu0
        %v765 = vpop.f32.mrb[0].mxu0
        %v766 = vpop.f32.mrb[0].mxu0
        %767 = vdwg.mxu0
        %v768 = vpack.c.bf16 %v763, %v763
        %v770 = vunpack.c.l.b16 %v768
        %v771 = vpack.c.b16 %v770, %v770
        %772 = vrot.lane.b32.xlu0 %v771, 8
        %v773 = vpop.permute.xlu0 %772
        %vm775 = vcmask 126016
        %776 = vst.msk [vmem:[#allocation2] sm:$0xf] %vm775, %v773
        %777 = vrot.lane.b32.xlu0 %v536, 112
        %v778 = vpop.permute.xlu0 %777
        %779 = vrot.lane.b32.xlu0 %v536, 80
        %v780 = vpop.permute.xlu0 %779
        %v782 = vsel %vm545, %v778, 0
        %v785 = vsel %vm545, %v780, 0
        %787 = vmatprep.subr.bf16.mxu0 0
        %788 = vmatpush1.bf16.xpose.msra.mxu0 %v785
        %789 = vmatprep.subr.bf16.mxu0 0
        %790 = vmatpush1.bf16.xpose.msra.mxu0 0
        %791 = vmatprep.subr.bf16.mxu0 0
        %792 = vmatpush1.bf16.xpose.msra.mxu0 0
        %793 = vmatprep.subr.bf16.mxu0 0
        %794 = vmatpush1.bf16.xpose.msra.mxu0 0
        %795 = vmatprep.subr.bf16.mxu0 0
        %796 = vmatpush1.bf16.xpose.msra.mxu0 0
        %797 = vmatprep.subr.bf16.mxu0 0
        %798 = vmatpush1.bf16.xpose.msra.mxu0 0
        %799 = vmatprep.subr.bf16.mxu0 0
        %800 = vmatpush1.bf16.xpose.msra.mxu0 0
        %801 = vmatprep.subr.bf16.mxu0 0
        %802 = vmatpush1.bf16.xpose.msra.mxu0 0
        %803 = vmatprep.subr.bf16.mxu0 0
        %804 = vmatpush1.bf16.xpose.msra.mxu0 0
        %805 = vmatprep.subr.bf16.mxu0 0
        %806 = vmatpush1.bf16.xpose.msra.mxu0 0
        %807 = vmatprep.subr.bf16.mxu0 0
        %808 = vmatpush1.bf16.xpose.msra.mxu0 0
        %809 = vmatprep.subr.bf16.mxu0 0
        %810 = vmatpush1.bf16.xpose.msra.mxu0 0
        %811 = vmatprep.subr.bf16.mxu0 0
        %812 = vmatpush1.bf16.xpose.msra.mxu0 0
        %813 = vmatprep.subr.bf16.mxu0 0
        %814 = vmatpush1.bf16.xpose.msra.mxu0 0
        %815 = vmatprep.subr.bf16.mxu0 0
        %816 = vmatpush1.bf16.xpose.msra.mxu0 0
        %817 = vmatprep.subr.bf16.mxu0 0
        %818 = vmatpush1.bf16.xpose.msra.mxu0 0
        %819 = vmatprep.mubr.bf16.mxu0 0
        %820 = vmatmul.mubr.bf16.gmra.mrb[0].mxu0 %v782
        %v821 = vpop.f32.mrb[0].mxu0
        %v822 = vadd.f32 0.0, %v821
        %v823 = vpop.f32.mrb[0].mxu0
        %v824 = vpop.f32.mrb[0].mxu0
        %v825 = vpop.f32.mrb[0].mxu0
        %826 = vdwg.mxu0
        %v827 = vsel %vm541, %v822, -inf
        %v828 = vsel %vm545, %v827, -inf
        %829 = vmax.xlane.f32.xlu0 %v828
        %v830 = vpop.xlane.xlu0 %829
        %v831 = vsub.f32 %v827, %v830
        %v832 = vmul.f32 %v831, 1.442695
        %v833 = vpow.pop %v832
        %v834 = vsel %vm545, %v833, 0.0
        %835 = vadd.xlane.f32.xlu0 %v834
        %v836 = vpop.xlane.xlu0 %835
        %v837 = vrcp.pop %v836
        %v838 = vmul.f32 %v833, %v837
        %v839 = vpack.c.bf16 %v838, %v838
        %840 = vrot.lane.b32.xlu0 %v536, 48
        %v841 = vpop.permute.xlu0 %840
        %v843 = vsel %vm545, %v839, 0
        %v846 = vsel %vm610, %v841, 0
        %848 = vmatprep.subr.bf16.mxu0 0
        %849 = vmatpush1.bf16.msra.mxu0 %v846
        %850 = vmatprep.subr.bf16.mxu0 0
        %851 = vmatpush1.bf16.msra.mxu0 0
        %852 = vmatprep.subr.bf16.mxu0 0
        %853 = vmatpush1.bf16.msra.mxu0 0
        %854 = vmatprep.subr.bf16.mxu0 0
        %855 = vmatpush1.bf16.msra.mxu0 0
        %856 = vmatprep.subr.bf16.mxu0 0
        %857 = vmatpush1.bf16.msra.mxu0 0
        %858 = vmatprep.subr.bf16.mxu0 0
        %859 = vmatpush1.bf16.msra.mxu0 0
        %860 = vmatprep.subr.bf16.mxu0 0
        %861 = vmatpush1.bf16.msra.mxu0 0
        %862 = vmatprep.subr.bf16.mxu0 0
        %863 = vmatpush1.bf16.msra.mxu0 0
        %864 = vmatprep.subr.bf16.mxu0 0
        %865 = vmatpush1.bf16.msra.mxu0 0
        %866 = vmatprep.subr.bf16.mxu0 0
        %867 = vmatpush1.bf16.msra.mxu0 0
        %868 = vmatprep.subr.bf16.mxu0 0
        %869 = vmatpush1.bf16.msra.mxu0 0
        %870 = vmatprep.subr.bf16.mxu0 0
        %871 = vmatpush1.bf16.msra.mxu0 0
        %872 = vmatprep.subr.bf16.mxu0 0
        %873 = vmatpush1.bf16.msra.mxu0 0
        %874 = vmatprep.subr.bf16.mxu0 0
        %875 = vmatpush1.bf16.msra.mxu0 0
        %876 = vmatprep.subr.bf16.mxu0 0
        %877 = vmatpush1.bf16.msra.mxu0 0
        %878 = vmatprep.subr.bf16.mxu0 0
        %879 = vmatpush1.bf16.msra.mxu0 0
        %880 = vmatprep.mubr.bf16.mxu0 0
        %881 = vmatmul.mubr.bf16.gmra.mrb[0].mxu0 %v843
        %v882 = vpop.f32.mrb[0].mxu0
        %v883 = vadd.f32 0.0, %v882
        %v884 = vpop.f32.mrb[0].mxu0
        %v885 = vpop.f32.mrb[0].mxu0
        %v886 = vpop.f32.mrb[0].mxu0
        %887 = vdwg.mxu0
        %v888 = vpack.c.bf16 %v883, %v883
        %v890 = vunpack.c.l.b16 %v888
        %v891 = vpack.c.b16 %v890, %v890
        %892 = vrot.lane.b32.xlu0 %v891, 16
        %v893 = vpop.permute.xlu0 %892
        %vm895 = vcmask 191616
        %896 = vst.msk [vmem:[#allocation2] sm:$0xf] %vm895, %v893
        %897 = vrot.lane.b32.xlu0 %v536, 104
        %v898 = vpop.permute.xlu0 %897
        %899 = vrot.lane.b32.xlu0 %v536, 72
        %v900 = vpop.permute.xlu0 %899
        %v902 = vsel %vm545, %v898, 0
        %v905 = vsel %vm545, %v900, 0
        %907 = vmatprep.subr.bf16.mxu0 0
        %908 = vmatpush1.bf16.xpose.msra.mxu0 %v905
        %909 = vmatprep.subr.bf16.mxu0 0
        %910 = vmatpush1.bf16.xpose.msra.mxu0 0
        %911 = vmatprep.subr.bf16.mxu0 0
        %912 = vmatpush1.bf16.xpose.msra.mxu0 0
        %913 = vmatprep.subr.bf16.mxu0 0
        %914 = vmatpush1.bf16.xpose.msra.mxu0 0
        %915 = vmatprep.subr.bf16.mxu0 0
        %916 = vmatpush1.bf16.xpose.msra.mxu0 0
        %917 = vmatprep.subr.bf16.mxu0 0
        %918 = vmatpush1.bf16.xpose.msra.mxu0 0
        %919 = vmatprep.subr.bf16.mxu0 0
        %920 = vmatpush1.bf16.xpose.msra.mxu0 0
        %921 = vmatprep.subr.bf16.mxu0 0
        %922 = vmatpush1.bf16.xpose.msra.mxu0 0
        %923 = vmatprep.subr.bf16.mxu0 0
        %924 = vmatpush1.bf16.xpose.msra.mxu0 0
        %925 = vmatprep.subr.bf16.mxu0 0
        %926 = vmatpush1.bf16.xpose.msra.mxu0 0
        %927 = vmatprep.subr.bf16.mxu0 0
        %928 = vmatpush1.bf16.xpose.msra.mxu0 0
        %929 = vmatprep.subr.bf16.mxu0 0
        %930 = vmatpush1.bf16.xpose.msra.mxu0 0
        %931 = vmatprep.subr.bf16.mxu0 0
        %932 = vmatpush1.bf16.xpose.msra.mxu0 0
        %933 = vmatprep.subr.bf16.mxu0 0
        %934 = vmatpush1.bf16.xpose.msra.mxu0 0
        %935 = vmatprep.subr.bf16.mxu0 0
        %936 = vmatpush1.bf16.xpose.msra.mxu0 0
        %937 = vmatprep.subr.bf16.mxu0 0
        %938 = vmatpush1.bf16.xpose.msra.mxu0 0
        %939 = vmatprep.mubr.bf16.mxu0 0
        %940 = vmatmul.mubr.bf16.gmra.mrb[0].mxu0 %v902
        %v941 = vpop.f32.mrb[0].mxu0
        %v942 = vadd.f32 0.0, %v941
        %v943 = vpop.f32.mrb[0].mxu0
        %v944 = vpop.f32.mrb[0].mxu0
        %v945 = vpop.f32.mrb[0].mxu0
        %946 = vdwg.mxu0
        %v947 = vsel %vm541, %v942, -inf
        %v948 = vsel %vm545, %v947, -inf
        %949 = vmax.xlane.f32.xlu0 %v948
        %v950 = vpop.xlane.xlu0 %949
        %v951 = vsub.f32 %v947, %v950
        %v952 = vmul.f32 %v951, 1.442695
        %v953 = vpow.pop %v952
        %v954 = vsel %vm545, %v953, 0.0
        %955 = vadd.xlane.f32.xlu0 %v954
        %v956 = vpop.xlane.xlu0 %955
        %v957 = vrcp.pop %v956
        %v958 = vmul.f32 %v953, %v957
        %v959 = vpack.c.bf16 %v958, %v958
        %960 = vrot.lane.b32.xlu0 %v536, 40
        %v961 = vpop.permute.xlu0 %960
        %v963 = vsel %vm545, %v959, 0
        %v966 = vsel %vm610, %v961, 0
        %968 = vmatprep.subr.bf16.mxu0 0
        %969 = vmatpush1.bf16.msra.mxu0 %v966
        %970 = vmatprep.subr.bf16.mxu0 0
        %971 = vmatpush1.bf16.msra.mxu0 0
        %972 = vmatprep.subr.bf16.mxu0 0
        %973 = vmatpush1.bf16.msra.mxu0 0
        %974 = vmatprep.subr.bf16.mxu0 0
        %975 = vmatpush1.bf16.msra.mxu0 0
        %976 = vmatprep.subr.bf16.mxu0 0
        %977 = vmatpush1.bf16.msra.mxu0 0
        %978 = vmatprep.subr.bf16.mxu0 0
        %979 = vmatpush1.bf16.msra.mxu0 0
        %980 = vmatprep.subr.bf16.mxu0 0
        %981 = vmatpush1.bf16.msra.mxu0 0
        %982 = vmatprep.subr.bf16.mxu0 0
        %983 = vmatpush1.bf16.msra.mxu0 0
        %984 = vmatprep.subr.bf16.mxu0 0
        %985 = vmatpush1.bf16.msra.mxu0 0
        %986 = vmatprep.subr.bf16.mxu0 0
        %987 = vmatpush1.bf16.msra.mxu0 0
        %988 = vmatprep.subr.bf16.mxu0 0
        %989 = vmatpush1.bf16.msra.mxu0 0
        %990 = vmatprep.subr.bf16.mxu0 0
        %991 = vmatpush1.bf16.msra.mxu0 0
        %992 = vmatprep.subr.bf16.mxu0 0
        %993 = vmatpush1.bf16.msra.mxu0 0
        %994 = vmatprep.subr.bf16.mxu0 0
        %995 = vmatpush1.bf16.msra.mxu0 0
        %996 = vmatprep.subr.bf16.mxu0 0
        %997 = vmatpush1.bf16.msra.mxu0 0
        %998 = vmatprep.subr.bf16.mxu0 0
        %999 = vmatpush1.bf16.msra.mxu0 0
        %1000 = vmatprep.mubr.bf16.mxu0 0
        %1001 = vmatmul.mubr.bf16.gmra.mrb[0].mxu0 %v963
        %v1002 = vpop.f32.mrb[0].mxu0
        %v1003 = vadd.f32 0.0, %v1002
        %v1004 = vpop.f32.mrb[0].mxu0
        %v1005 = vpop.f32.mrb[0].mxu0
        %v1006 = vpop.f32.mrb[0].mxu0
        %1007 = vdwg.mxu0
        %v1008 = vpack.c.bf16 %v1003, %v1003
        %v1010 = vunpack.c.l.b16 %v1008
        %v1011 = vpack.c.b16 %v1010, %v1010
        %1012 = vrot.lane.b32.xlu0 %v1011, 24
        %v1013 = vpop.permute.xlu0 %1012
        %vm1015 = vcmask 257216
        %1016 = vst.msk [vmem:[#allocation2] sm:$0xf] %vm1015, %v1013
        %v1017 = vld [vmem:[#allocation2] sm:$0xf]
        %v1018 = vld [vmem:[%s5] sm:$0xf]
        %v1019 = vld [vmem:[%s5 + $0x4] sm:$0xf]
        %v1020 = vld [vmem:[%s5 + $0x8] sm:$0xf]
        %v1021 = vld [vmem:[%s5 + $0xc] sm:$0xf]
        %v1022 = vld [vmem:[%s6] sm:$0x1]
        %v1024 = vlaneseq
        %v1025 = vshrl.u32 %v1024, 7
        %v1026 = vsub.s32 0, %v1025
        %v1027 = vrot.slane %v1022, %v1026
        %v1033 = vunpack.c.l.b16 %v1018
        %v1034 = vunpack.c.l.b16 %v1019
        %v1035 = vunpack.c.l.b16 %v1020
        %v1036 = vunpack.c.l.b16 %v1021
        %v1037 = vpack.c.b16 %v1034, %v1033
        %v1038 = vpack.c.b16 %v1036, %v1035
        %v1042 = vsel %vm440, %v1017, 0
        %1044 = vmatprep.subr.bf16.mxu0 0
        %1045 = vmatpush1.bf16.msra.mxu0 %v1037
        %1046 = vmatprep.subr.bf16.mxu0 0
        %1047 = vmatpush1.bf16.msra.mxu0 %v1038
        %1048 = vmatprep.subr.bf16.mxu0 0
        %1049 = vmatpush1.bf16.msra.mxu0 0
        %1050 = vmatprep.subr.bf16.mxu0 0
        %1051 = vmatpush1.bf16.msra.mxu0 0
        %1052 = vmatprep.subr.bf16.mxu0 0
        %1053 = vmatpush1.bf16.msra.mxu0 0
        %1054 = vmatprep.subr.bf16.mxu0 0
        %1055 = vmatpush1.bf16.msra.mxu0 0
        %1056 = vmatprep.subr.bf16.mxu0 0
        %1057 = vmatpush1.bf16.msra.mxu0 0
        %1058 = vmatprep.subr.bf16.mxu0 0
        %1059 = vmatpush1.bf16.msra.mxu0 0
        %1060 = vmatprep.subr.bf16.mxu0 0
        %1061 = vmatpush1.bf16.msra.mxu0 0
        %1062 = vmatprep.subr.bf16.mxu0 0
        %1063 = vmatpush1.bf16.msra.mxu0 0
        %1064 = vmatprep.subr.bf16.mxu0 0
        %1065 = vmatpush1.bf16.msra.mxu0 0
        %1066 = vmatprep.subr.bf16.mxu0 0
        %1067 = vmatpush1.bf16.msra.mxu0 0
        %1068 = vmatprep.subr.bf16.mxu0 0
        %1069 = vmatpush1.bf16.msra.mxu0 0
        %1070 = vmatprep.subr.bf16.mxu0 0
        %1071 = vmatpush1.bf16.msra.mxu0 0
        %1072 = vmatprep.subr.bf16.mxu0 0
        %1073 = vmatpush1.bf16.msra.mxu0 0
        %1074 = vmatprep.subr.bf16.mxu0 0
        %1075 = vmatpush1.bf16.msra.mxu0 0
        %1076 = vmatprep.mubr.bf16.mxu0 0
        %1077 = vmatmul.mubr.bf16.gmra.mrb[0].mxu0 %v1042
        %v1078 = vpop.f32.mrb[0].mxu0
        %v1079 = vadd.f32 %v1027, %v1078
        %v1080 = vpop.f32.mrb[0].mxu0
        %v1081 = vpop.f32.mrb[0].mxu0
        %v1082 = vpop.f32.mrb[0].mxu0
        %1083 = vdwg.mxu0
        %v1084 = vadd.f32 %v437, %v1079
        %v1085 = vld [vmem:[%s7] sm:$0x1]
        %v1086 = vld [vmem:[%s8] sm:$0x1]
        %v1087 = vsel %vm440, %v1084, 0.0
        %1088 = vadd.xlane.f32.xlu0 %v1087
        %v1089 = vpop.xlane.xlu0 %1088
        %v1090 = vmul.f32 %v1089, %v444
        %v1091 = vsub.f32 %v1084, %v1090
        %v1092 = vmul.f32 %v1091, %v1091
        %v1093 = vsel %vm440, %v1092, 0.0
        %1094 = vadd.xlane.f32.xlu0 %v1093
        %v1095 = vpop.xlane.xlu0 %1094
        %v1096 = vmul.f32 %v1095, %v444
        %v1097 = vadd.f32 %v1096, 1e-05
        %v1098 = vrsqrt.pop %v1097
        %v1099 = vmul.f32 %v1091, %v1098
        %v1101 = vlaneseq
        %v1102 = vshrl.u32 %v1101, 7
        %v1103 = vsub.s32 0, %v1102
        %v1104 = vrot.slane %v1085, %v1103
        %v1106 = vmul.f32 %v1099, %v1104
        %v1108 = vlaneseq
        %v1109 = vshrl.u32 %v1108, 7
        %v1110 = vsub.s32 0, %v1109
        %v1111 = vrot.slane %v1086, %v1110
        %v1113 = vadd.f32 %v1106, %v1111
        %v1114 = vpack.c.bf16 %v1113, %v1113
        %v1115 = vld [vmem:[%s9] sm:$0xf]
        %v1116 = vld [vmem:[%s9 + $0x4] sm:$0xf]
        %v1117 = vld [vmem:[%s9 + $0x8] sm:$0xf]
        %v1118 = vld [vmem:[%s9 + $0xc] sm:$0xf]
        %v1119 = vld [vmem:[%s10] sm:$0x1]
        %v1121 = vlaneseq
        %v1122 = vshrl.u32 %v1121, 7
        %v1123 = vsub.s32 0, %v1122
        %v1124 = vrot.slane %v1119, %v1123
        %v1130 = vunpack.c.l.b16 %v1115
        %v1131 = vunpack.c.l.b16 %v1116
        %v1132 = vunpack.c.l.b16 %v1117
        %v1133 = vunpack.c.l.b16 %v1118
        %v1134 = vpack.c.b16 %v1131, %v1130
        %v1135 = vpack.c.b16 %v1133, %v1132
        %v1139 = vsel %vm440, %v1114, 0
        %1141 = vmatprep.subr.bf16.mxu0 0
        %1142 = vmatpush1.bf16.msra.mxu0 %v1134
        %1143 = vmatprep.subr.bf16.mxu0 0
        %1144 = vmatpush1.bf16.msra.mxu0 %v1135
        %1145 = vmatprep.subr.bf16.mxu0 0
        %1146 = vmatpush1.bf16.msra.mxu0 0
        %1147 = vmatprep.subr.bf16.mxu0 0
        %1148 = vmatpush1.bf16.msra.mxu0 0
        %1149 = vmatprep.subr.bf16.mxu0 0
        %1150 = vmatpush1.bf16.msra.mxu0 0
        %1151 = vmatprep.subr.bf16.mxu0 0
        %1152 = vmatpush1.bf16.msra.mxu0 0
        %1153 = vmatprep.subr.bf16.mxu0 0
        %1154 = vmatpush1.bf16.msra.mxu0 0
        %1155 = vmatprep.subr.bf16.mxu0 0
        %1156 = vmatpush1.bf16.msra.mxu0 0
        %1157 = vmatprep.subr.bf16.mxu0 0
        %1158 = vmatpush1.bf16.msra.mxu0 0
        %1159 = vmatprep.subr.bf16.mxu0 0
        %1160 = vmatpush1.bf16.msra.mxu0 0
        %1161 = vmatprep.subr.bf16.mxu0 0
        %1162 = vmatpush1.bf16.msra.mxu0 0
        %1163 = vmatprep.subr.bf16.mxu0 0
        %1164 = vmatpush1.bf16.msra.mxu0 0
        %1165 = vmatprep.subr.bf16.mxu0 0
        %1166 = vmatpush1.bf16.msra.mxu0 0
        %1167 = vmatprep.subr.bf16.mxu0 0
        %1168 = vmatpush1.bf16.msra.mxu0 0
        %1169 = vmatprep.subr.bf16.mxu0 0
        %1170 = vmatpush1.bf16.msra.mxu0 0
        %1171 = vmatprep.subr.bf16.mxu0 0
        %1172 = vmatpush1.bf16.msra.mxu0 0
        %1173 = vmatprep.mubr.bf16.mxu0 0
        %1174 = vmatmul.mubr.bf16.gmra.mrb[0].mxu0 %v1139
        %v1175 = vpop.f32.mrb[0].mxu0
        %v1176 = vadd.f32 %v1124, %v1175
        %v1177 = vpop.f32.mrb[0].mxu0
        %v1178 = vpop.f32.mrb[0].mxu0
        %v1179 = vpop.f32.mrb[0].mxu0
        %1180 = vdwg.mxu0
        %v1181 = vmul.f32 %v1176, 1.702
        %v1182 = vxor.u32 %v1181, 2147483648
        %v1183 = vmul.f32 %v1182, 1.442695
        %v1184 = vpow.pop %v1183
        %v1185 = vadd.f32 %v1184, 1.0
        %v1186 = vrcp.pop %v1185
        %v1187 = vmul.f32 1.0, %v1186
        %v1188 = vmul.f32 %v1176, %v1187
        %v1189 = vpack.c.bf16 %v1188, %v1188
        %v1190 = vld [vmem:[%s11] sm:$0xf]
        %v1191 = vld [vmem:[%s11 + $0x4] sm:$0xf]
        %v1192 = vld [vmem:[%s11 + $0x8] sm:$0xf]
        %v1193 = vld [vmem:[%s11 + $0xc] sm:$0xf]
        %v1194 = vld [vmem:[%s11 + $0x10] sm:$0xf]
        %v1195 = vld [vmem:[%s11 + $0x14] sm:$0xf]
        %v1196 = vld [vmem:[%s11 + $0x18] sm:$0xf]
        %v1197 = vld [vmem:[%s11 + $0x1c] sm:$0xf]
        %v1198 = vld [vmem:[%s11 + $0x20] sm:$0xf]
        %v1199 = vld [vmem:[%s11 + $0x24] sm:$0xf]
        %v1200 = vld [vmem:[%s11 + $0x28] sm:$0xf]
        %v1201 = vld [vmem:[%s11 + $0x2c] sm:$0xf]
        %v1202 = vld [vmem:[%s11 + $0x30] sm:$0xf]
        %v1203 = vld [vmem:[%s11 + $0x34] sm:$0xf]
        %v1204 = vld [vmem:[%s11 + $0x38] sm:$0xf]
        %v1205 = vld [vmem:[%s11 + $0x3c] sm:$0xf]
        %v1222 = vunpack.c.l.b16 %v1190
        %v1223 = vunpack.c.l.b16 %v1191
        %v1224 = vunpack.c.l.b16 %v1192
        %v1225 = vunpack.c.l.b16 %v1193
        %v1226 = vunpack.c.l.b16 %v1194
        %v1227 = vunpack.c.l.b16 %v1195
        %v1228 = vunpack.c.l.b16 %v1196
        %v1229 = vunpack.c.l.b16 %v1197
        %v1230 = vunpack.c.l.b16 %v1198
        %v1231 = vunpack.c.l.b16 %v1199
        %v1232 = vunpack.c.l.b16 %v1200
        %v1233 = vunpack.c.l.b16 %v1201
        %v1234 = vunpack.c.l.b16 %v1202
        %v1235 = vunpack.c.l.b16 %v1203
        %v1236 = vunpack.c.l.b16 %v1204
        %v1237 = vunpack.c.l.b16 %v1205
        %v1238 = vpack.c.b16 %v1223, %v1222
        %v1239 = vpack.c.b16 %v1225, %v1224
        %v1240 = vpack.c.b16 %v1227, %v1226
        %v1241 = vpack.c.b16 %v1229, %v1228
        %v1242 = vpack.c.b16 %v1231, %v1230
        %v1243 = vpack.c.b16 %v1233, %v1232
        %v1244 = vpack.c.b16 %v1235, %v1234
        %v1245 = vpack.c.b16 %v1237, %v1236
        %1254 = vmatprep.subr.bf16.mxu0 0
        %1255 = vmatpush1.bf16.msra.mxu0 %v1238
        %1256 = vmatprep.subr.bf16.mxu0 0
        %1257 = vmatpush1.bf16.msra.mxu0 %v1239
        %1258 = vmatprep.subr.bf16.mxu0 0
        %1259 = vmatpush1.bf16.msra.mxu0 %v1240
        %1260 = vmatprep.subr.bf16.mxu0 0
        %1261 = vmatpush1.bf16.msra.mxu0 %v1241
        %1262 = vmatprep.subr.bf16.mxu0 0
        %1263 = vmatpush1.bf16.msra.mxu0 %v1242
        %1264 = vmatprep.subr.bf16.mxu0 0
        %1265 = vmatpush1.bf16.msra.mxu0 %v1243
        %1266 = vmatprep.subr.bf16.mxu0 0
        %1267 = vmatpush1.bf16.msra.mxu0 %v1244
        %1268 = vmatprep.subr.bf16.mxu0 0
        %1269 = vmatpush1.bf16.msra.mxu0 %v1245
        %1270 = vmatprep.subr.bf16.mxu0 0
        %1271 = vmatpush1.bf16.msra.mxu0 0
        %1272 = vmatprep.subr.bf16.mxu0 0
        %1273 = vmatpush1.bf16.msra.mxu0 0
        %1274 = vmatprep.subr.bf16.mxu0 0
        %1275 = vmatpush1.bf16.msra.mxu0 0
        %1276 = vmatprep.subr.bf16.mxu0 0
        %1277 = vmatpush1.bf16.msra.mxu0 0
        %1278 = vmatprep.subr.bf16.mxu0 0
        %1279 = vmatpush1.bf16.msra.mxu0 0
        %1280 = vmatprep.subr.bf16.mxu0 0
        %1281 = vmatpush1.bf16.msra.mxu0 0
        %1282 = vmatprep.subr.bf16.mxu0 0
        %1283 = vmatpush1.bf16.msra.mxu0 0
        %1284 = vmatprep.subr.bf16.mxu0 0
        %1285 = vmatpush1.bf16.msra.mxu0 0
        %1286 = vmatprep.mubr.bf16.mxu0 0
        %1287 = vmatmul.mubr.bf16.gmra.mrb[0].mxu0 %v1189
        %v1288 = vpop.f32.mrb[0].mxu0
        %v1289 = vadd.f32 0.0, %v1288
        %v1290 = vpop.f32.mrb[0].mxu0
        %v1291 = vpop.f32.mrb[0].mxu0
        %v1292 = vpop.f32.mrb[0].mxu0
        %1293 = vdwg.mxu0
        %v1294 = vadd.f32 %v1084, %v1289
        %v1295 = vld [vmem:[%s12] sm:$0x1]
        %v1297 = vlaneseq
        %v1298 = vshrl.u32 %v1297, 7
        %v1299 = vsub.s32 0, %v1298
        %v1300 = vrot.slane %v1295, %v1299
        %v1302 = vadd.f32 %v1294, %v1300
        %1303 = vst.msk [vmem:[%s431] sm:$0xff] %vm440, %v1302
        %s1304 = sand.u32 %s313, 1
        %s1305 = scalar_lea.sflag [#allocation4], %s1304
        %s1306 = sand.u32 %s313, 1
        %s1307 = smul.addr %s1306, 8
        %s1308 = scalar_lea.vmem [#allocation3], %s1307
        // Predicated region
        $region73: #{tpu_custom_call.1} parent=71 // pred_check
          %p1309 = pneg %p323
        $region74: #{tpu_custom_call.1} parent=71 // pred_check_branch
          %1311 = sbr.rel (%p1309) target = $region76
        $region75: #{tpu_custom_call.1} parent=71 // pred_region
          %s1313 = ssub.s32 128, 128
          %1314 = vsyncadd %s1305, %s1313
          %s1315 = smul.addr %s27, 128
          %s1316 = scalar_lea.hbm %s13, %s1315
          %s1318 = sshll.u32 %s1308, 4
          %s1319 = int_to_ptr.vmem [resolvable:$true] %s1318
          %1321 = dma.vmem_to_hbm [thread:$0]  %s1319, 128, %s1316, %s1305
        $region76: #{tpu_custom_call.1} parent=71 // pred_fallthru
          _
      $region72: #{tpu_custom_call.1} parent=5 // pred_fallthru
        _
      %p1322 = scmp.le.s32.totalorder 2, %s22
      // Predicated region
      $region77: #{tpu_custom_call.1} parent=5 // pred_check
        %p1323 = pneg %p1322
      $region78: #{tpu_custom_call.1} parent=5 // pred_check_branch
        %1325 = sbr.rel (%p1323) target = $region80
      $region79: #{tpu_custom_call.1} parent=5 // pred_region
        %s1326 = ssub.s32 %s22, 2
        // Predicated region
        $region81: #{tpu_custom_call.1} parent=79 // pred_check
          %p1327 = pneg %p329
        $region82: #{tpu_custom_call.1} parent=79 // pred_check_branch
          %1329 = sbr.rel (%p1327) target = $region84
        $region83: #{tpu_custom_call.1} parent=79 // pred_region
          %s1330 = sand.u32 %s314, 1
          %s1331 = scalar_lea.sflag [#allocation4], %s1330
          %s1332 = sand.u32 %s314, 1
          %s1333 = smul.addr %s1332, 8
          %s1334 = scalar_lea.vmem [#allocation3], %s1333
          %1335 = dma.done %s1331, 128
        $region84: #{tpu_custom_call.1} parent=79 // pred_fallthru
          _
      $region80: #{tpu_custom_call.1} parent=5 // pred_fallthru
        _
    $region6: #{tpu_custom_call.1} parent=1 // loop_footer
      %s26 = sadd.s32 1, %s22
    $region7: #{tpu_custom_call.1} parent=1 // loop_footer_branch
      %21 = sbr.rel target = $region3
    $region8: #{tpu_custom_call.1} parent=1 // loop_exit
      _
    %1336 = vsyncpa [#allocation4], 1
    %s1337 = scalar_lea.sflag [#allocation4], 1
    %1338 = vsyncpa %s1337, 1

</llo_original>
